<compile_context>
chip_gen: v5e
topology: v5e:2x2
jax: 0.10.0
libtpu: 0.0.40
codegen_flags: <defaults>
</compile_context>

<pallas_src>
import jax
import jax.numpy as jnp
from jax.experimental import pallas as pl
from jax.experimental.pallas import tpu as pltpu

C_FEAT = 32          # stands in for 2048 in the original module
K_ATTN = 16          # stands in for K=224 in MultiStreamAttention
NUM_CLASSES = 5
STRIDE = 32          # backbone spatial reduction (matches Upsample(scale_factor=32))
BN_EPS = 1e-5
MM_DTYPE = jnp.bfloat16         # matmul-input dtype (f32 accumulation everywhere)
VMEM_LIMIT = 64 * 1024 * 1024   # explicit scoped-VMEM budget per kernel


def _round_up(x, m):
    return ((x + m - 1) // m) * m


# ----------------------------------------------------------------------------- kernels

def _linear_relu_kernel(x_ref, w_ref, b_ref, o_ref, acc_ref):
    # Synthetic shared-backbone tile: (tm, tk) @ (tk, tn) accumulated over the K grid axis,
    # bias + ReLU on the last K step.  x/w are bf16, accumulation f32.
    @pl.when(pl.program_id(2) == 0)
    def _():
        acc_ref[...] = jnp.zeros_like(acc_ref)

    acc_ref[...] += jnp.dot(x_ref[...], w_ref[...], preferred_element_type=jnp.float32)

    @pl.when(pl.program_id(2) == pl.num_programs(2) - 1)
    def _():
        o_ref[...] = jnp.maximum(acc_ref[...] + b_ref[...], 0.0)


def _attention_heads_kernel(rgb_ref, aux_ref, rgbss_ref, auxss_ref,
                            w5_ref, b5_ref, attnss_ref, w1_ref, b1_ref,
                            wh_ref, bh_ref,
                            heads_ref, attn_ref, pad_ref):
    # Per-batch-element block (features arrive as 2-D (HW, C)):
    #   folded-BN(rgb/aux) -> bf16 padded concat in persistent VMEM scratch (halo-only memset)
    #   -> 5 row-tap im2col matmuls accumulated in f32 -> BN+ReLU -> 1x1 conv -> sigmoid ->
    #   weighted merge -> ONE packed-head matmul over stacked [merged; rgb; aux].
    #   Outputs: lane-dense head slab (3*HW, HP) and the (HW, 2) attention weights.
    Hp4, Wp4, twoC = pad_ref.shape
    Hf, Wf = Hp4 - 4, Wp4 - 4
    C = twoC // 2
    HW = Hf * Wf
    KP = w5_ref.shape[2]

    rgb_n = rgb_ref[0] * rgbss_ref[0:1] + rgbss_ref[1:2]          # (HW, C) f32
    aux_n = aux_ref[0] * auxss_ref[0:1] + auxss_ref[1:2]          # (HW, C) f32

    # Zero only the 4 halo strips; the interior is fully overwritten each step, so the halo
    # stays zero and this is order-independent (safe under megacore grid sharding).
    zrow = jnp.zeros((2, Wp4, twoC), MM_DTYPE)
    zcol = jnp.zeros((Hf, 2, twoC), MM_DTYPE)
    pad_ref[0:2, :, :] = zrow
    pad_ref[Hf + 2:Hf + 4, :, :] = zrow
    pad_ref[2:Hf + 2, 0:2, :] = zcol
    pad_ref[2:Hf + 2, Wf + 2:Wf + 4, :] = zcol

    # Write each stream directly into its channel half (bf16, no concat).
    pad_ref[2:2 + Hf, 2:2 + Wf, 0:C] = rgb_n.reshape(Hf, Wf, C).astype(MM_DTYPE)
    pad_ref[2:2 + Hf, 2:2 + Wf, C:twoC] = aux_n.reshape(Hf, Wf, C).astype(MM_DTYPE)

    # 5x5 conv as 5 row-tap matmuls (im2col over the column taps only), f32 accumulation.
    acc = jnp.zeros((HW, KP), jnp.float32)
    for dh in range(5):
        cols = [pad_ref[dh:dh + Hf, dw:dw + Wf, :].reshape(HW, twoC) for dw in range(5)]
        patch = jnp.concatenate(cols, axis=-1)                    # (HW, 5*2C) bf16
        acc = acc + jnp.dot(patch, w5_ref[dh], preferred_element_type=jnp.float32)

    # BN (folded) + ReLU on the conv output (K padded to KP; padded columns stay exactly 0).
    h = jnp.maximum((acc + b5_ref[...]) * attnss_ref[0:1] + attnss_ref[1:2], 0.0)   # (HW, KP)
    scores = jnp.dot(h.astype(MM_DTYPE), w1_ref[...],
                     preferred_element_type=jnp.float32) + b1_ref[...]              # (HW, 2)
    aw = jax.nn.sigmoid(scores)                                                     # (HW, 2)

    merged = rgb_n * aw[:, 0:1] + aux_n * aw[:, 1:2]                                # (HW, C)

    # ONE packed-head matmul: rows [0:HW)=merged, [HW:2HW)=rgb, [2HW:3HW)=aux;
    # columns hold [w_final | w_stream0 | w_stream1 | zero pad] -> lane-dense output slab.
    x_stack = jnp.concatenate([merged, rgb_n, aux_n], axis=0).astype(MM_DTYPE)      # (3HW, C)
    heads = jnp.dot(x_stack, wh_ref[...], preferred_element_type=jnp.float32) + bh_ref[...]
    heads_ref[0] = heads                                                            # (3HW, HP)
    attn_ref[0] = aw


def _upsample_kernel(x_ref, uh_ref, uwt_ref, o_ref):
    # Separable bilinear upsample (align_corners=True) over ALL channels of all three heads:
    #   W pass: one (C3*Hf, Wf) @ (Wf, Wo) matmul;
    #   H pass: batched contraction against Uh broadcast in VMEM (no HBM replication),
    #   Ho-tiled by the second grid axis.
    _, C3, Hf, Wf = x_ref.shape
    tho = uh_ref.shape[0]
    Wo = uwt_ref.shape[1]
    x = x_ref[0]                                                          # (C3, Hf, Wf)
    t = jnp.dot(x.reshape(C3 * Hf, Wf), uwt_ref[...],
                preferred_element_type=jnp.float32)                       # (C3*Hf, Wo)
    t = t.reshape(C3, Hf, Wo)
    uhb = jnp.broadcast_to(uh_ref[...][None], (C3, tho, Hf))              # VMEM-only broadcast
    z = jax.lax.dot_general(uhb, t,
                            dimension_numbers=(((2,), (1,)), ((0,), (0,))),
                            preferred_element_type=jnp.float32)           # (C3, tho, Wo)
    o_ref[0] = z


# ----------------------------------------------------------------------------- wrappers

def linear_relu(x_bf16, w_bf16, b):
    M, Kin = x_bf16.shape
    N = w_bf16.shape[1]
    tm = next((t for t in (512, 256, 128, 64, 32, 16) if M % t == 0), M)
    tn = next((t for t in (1024, 512, 256, 128) if N % t == 0), N)
    tk = next((t for t in (2048, 1024, 512, 256) if Kin % t == 0), Kin)
    return pl.pallas_call(
        _linear_relu_kernel,
        out_shape=jax.ShapeDtypeStruct((M, N), jnp.float32),
        grid=(M // tm, N // tn, Kin // tk),
        in_specs=[pl.BlockSpec((tm, tk), lambda i, j, k: (i, k)),
                  pl.BlockSpec((tk, tn), lambda i, j, k: (k, j)),
                  pl.BlockSpec((1, tn), lambda i, j, k: (0, j))],
        out_specs=pl.BlockSpec((tm, tn), lambda i, j, k: (i, j)),
        scratch_shapes=[pltpu.VMEM((tm, tn), jnp.float32)],
        compiler_params=pltpu.CompilerParams(
            dimension_semantics=("parallel", "parallel", "arbitrary"),
            vmem_limit_bytes=VMEM_LIMIT),
    )(x_bf16, w_bf16, b)


def attention_heads(rgb_feat, aux_feat, Hf, Wf,
                    rgb_ss, aux_ss, w5, b5, attn_ss, w1, b1, wh, bh):
    B, HW, C = rgb_feat.shape
    HP = wh.shape[1]
    feat_spec = pl.BlockSpec((1, HW, C), lambda b: (b, 0, 0))

    def full(arr):
        n = arr.ndim
        return pl.BlockSpec(arr.shape, lambda b, _n=n: (0,) * _n)

    return pl.pallas_call(
        _attention_heads_kernel,
        out_shape=(jax.ShapeDtypeStruct((B, 3 * HW, HP), jnp.float32),
                   jax.ShapeDtypeStruct((B, HW, 2), jnp.float32)),
        grid=(B,),
        in_specs=[feat_spec, feat_spec,
                  full(rgb_ss), full(aux_ss),
                  full(w5), full(b5), full(attn_ss), full(w1), full(b1),
                  full(wh), full(bh)],
        out_specs=(pl.BlockSpec((1, 3 * HW, HP), lambda b: (b, 0, 0)),
                   pl.BlockSpec((1, HW, 2), lambda b: (b, 0, 0))),
        scratch_shapes=[pltpu.VMEM((Hf + 4, Wf + 4, 2 * C), MM_DTYPE)],
        compiler_params=pltpu.CompilerParams(
            dimension_semantics=("parallel",),
            vmem_limit_bytes=VMEM_LIMIT),
    )(rgb_feat, aux_feat, rgb_ss, aux_ss, w5, b5, attn_ss, w1, b1, wh, bh)


def upsample32(pred_nchw, uh, uwt):
    B, C3, Hf, Wf = pred_nchw.shape
    Ho, Wo = uh.shape[0], uwt.shape[1]
    tho = STRIDE                      # Ho = Hf*STRIDE, so this always divides
    return pl.pallas_call(
        _upsample_kernel,
        out_shape=jax.ShapeDtypeStruct((B, C3, Ho, Wo), jnp.float32),
        grid=(B, Ho // tho),
        in_specs=[pl.BlockSpec((1, C3, Hf, Wf), lambda b, h: (b, 0, 0, 0)),
                  pl.BlockSpec((tho, Hf), lambda b, h: (h, 0)),
                  pl.BlockSpec((Wf, Wo), lambda b, h: (0, 0))],
        out_specs=pl.BlockSpec((1, C3, tho, Wo), lambda b, h: (b, 0, h, 0)),
        compiler_params=pltpu.CompilerParams(
            dimension_semantics=("parallel", "parallel"),
            vmem_limit_bytes=VMEM_LIMIT),
    )(pred_nchw, uh, uwt)


def bilinear_matrix(in_size, scale):
    # align_corners=True interpolation matrix (out_size, in_size) — matches
    # nn.Upsample(scale_factor=32, mode='bilinear', align_corners=True).
    out_size = in_size * scale
    if in_size == 1:
        return jnp.ones((out_size, 1), jnp.float32)
    src = jnp.arange(out_size, dtype=jnp.float32) * (in_size - 1) / (out_size - 1)
    i0 = jnp.clip(jnp.floor(src).astype(jnp.int32), 0, in_size - 1)
    i1 = jnp.clip(i0 + 1, 0, in_size - 1)
    w1 = src - i0.astype(jnp.float32)
    w0 = 1.0 - w1
    return (w0[:, None] * jax.nn.one_hot(i0, in_size, dtype=jnp.float32)
            + w1[:, None] * jax.nn.one_hot(i1, in_size, dtype=jnp.float32))


@jax.jit
def attention_segmentation_forward(x, params):
    """x: NCHW float32 [B, 6, H, W]  ->  (final_pred, (stream0, stream1), attn_weights)."""
    B, _, H, W = x.shape
    Hf, Wf = H // STRIDE, W // STRIDE
    HW = Hf * Wf
    CF = params["bb_w"].shape[1]
    NC = params["w_final"].shape[1]
    K = params["w5"].shape[2]
    KP = _round_up(K, 128)
    HP = _round_up(3 * NC, 128)

    # ---- shared backbone, run ONCE on stacked [rgb; aux] (weights are shared) ----
    both = jnp.concatenate([x[:, :3], x[:, 3:6]], axis=0)               # (2B, 3, H, W)
    nhwc = jnp.transpose(both, (0, 2, 3, 1))
    p = nhwc.reshape(2 * B, Hf, STRIDE, Wf, STRIDE, 3)
    p = p.transpose(0, 1, 3, 2, 4, 5).reshape(2 * B * HW, STRIDE * STRIDE * 3)
    feats = linear_relu(p.astype(MM_DTYPE), params["bb_w"].astype(MM_DTYPE), params["bb_b"])
    feats = feats.reshape(2, B, HW, CF)
    rgb_feat, aux_feat = feats[0], feats[1]

    # ---- fold BN (inference mode) to scale/shift; pack + pad weights for the fused kernel ----
    def bn_ss(pk, pad_to=None):                                          # pk: (4,C) gamma,beta,mean,var
        sc = pk[0] * jax.lax.rsqrt(pk[3] + BN_EPS)
        ss = jnp.stack([sc, pk[1] - pk[2] * sc])                         # (2,C) scale,shift
        if pad_to is not None and pad_to > ss.shape[1]:
            ss = jnp.pad(ss, ((0, 0), (0, pad_to - ss.shape[1])))
        return ss

    rgb_ss, aux_ss = bn_ss(params["rgb_bn"]), bn_ss(params["aux_bn"])
    attn_ss = bn_ss(params["attn_bn"], pad_to=KP)
    w5 = params["w5"].reshape(5, 5 * 2 * CF, K)                          # (tap, 5*2C, K) im2col layout
    w5 = jnp.pad(w5, ((0, 0), (0, 0), (0, KP - K))).astype(MM_DTYPE)
    b5 = jnp.pad(params["b5"], ((0, 0), (0, KP - K)))
    w1 = jnp.pad(params["w_attn1x1"], ((0, KP - K), (0, 0))).astype(MM_DTYPE)
    wh = jnp.concatenate([params["w_final"], params["w_stream0"], params["w_stream1"]], axis=1)
    wh = jnp.pad(wh, ((0, 0), (0, HP - 3 * NC))).astype(MM_DTYPE)        # (C, HP) packed heads
    bh = jnp.concatenate([params["b_final"], params["b_stream0"], params["b_stream1"]], axis=1)
    bh = jnp.pad(bh, ((0, 0), (0, HP - 3 * NC)))

    heads, aw = attention_heads(rgb_feat, aux_feat, Hf, Wf,
                                rgb_ss, aux_ss, w5, b5, attn_ss, w1,
                                params["b_attn1x1"], wh, bh)

    # Diagonal blocks of the packed head slab: merged->final, rgb->stream0, aux->stream1.
    final = heads[:, 0:HW, 0:NC]
    s0 = heads[:, HW:2 * HW, NC:2 * NC]
    s1 = heads[:, 2 * HW:3 * HW, 2 * NC:3 * NC]

    def to_nchw(h2):                                                     # (B, HW, NC) -> (B, NC, Hf, Wf)
        return jnp.transpose(h2.reshape(B, Hf, Wf, NC), (0, 3, 1, 2))

    preds_nchw = jnp.concatenate([to_nchw(final), to_nchw(s0), to_nchw(s1)], axis=1)

    # ---- upsample all three heads in one call (Ho-tiled, no Uh replication) ----
    uh = bilinear_matrix(Hf, STRIDE)                                     # (Ho, Hf)
    uwt = bilinear_matrix(Wf, STRIDE).T                                  # (Wf, Wo)
    up = upsample32(preds_nchw, uh, uwt)                                 # (B, 3*NC, Ho, Wo)

    final_pred = up[:, :NC]
    stream_preds = (up[:, NC:2 * NC], up[:, 2 * NC:3 * NC])
    attention_weights = jnp.transpose(aw, (0, 2, 1)).reshape(B, 2, Hf, Wf)
    return final_pred, stream_preds, attention_weights


# ----------------------------------------------------------------------------- params

def init_params(key, c_feat, k_attn, num_classes):
    ks = jax.random.split(key, 16)

    def nrm(k, shape, scale):
        return (scale * jax.random.normal(k, shape)).astype(jnp.float32)

    def bn_pack(k, c):
        k1, k2, k3, k4 = jax.random.split(k, 4)
        gamma = 1.0 + 0.1 * jax.random.normal(k1, (c,))
        beta = 0.1 * jax.random.normal(k2, (c,))
        mean = 0.1 * jax.random.normal(k3, (c,))
        var = 1.0 + 0.1 * jax.random.uniform(k4, (c,))
        return jnp.stack([gamma, beta, mean, var]).astype(jnp.float32)

    p = {}
    p["bb_w"] = nrm(ks[0], (STRIDE * STRIDE * 3, c_feat), 0.02)
    p["bb_b"] = nrm(ks[1], (1, c_feat), 0.02)
    p["rgb_bn"] = bn_pack(ks[2], c_feat)
    p["aux_bn"] = bn_pack(ks[3], c_feat)
    p["w5"] = nrm(ks[4], (25, 2 * c_feat, k_attn), (25 * 2 * c_feat) ** -0.5)
    p["b5"] = nrm(ks[5], (1, k_attn), 0.02)
    p["attn_bn"] = bn_pack(ks[6], k_attn)
    p["w_attn1x1"] = nrm(ks[7], (k_attn, 2), k_attn ** -0.5)
    p["b_attn1x1"] = nrm(ks[8], (1, 2), 0.02)
    p["w_final"] = nrm(ks[9], (c_feat, num_classes), c_feat ** -0.5)
    p["b_final"] = nrm(ks[10], (1, num_classes), 0.02)
    p["w_stream0"] = nrm(ks[11], (c_feat, num_classes), c_feat ** -0.5)
    p["b_stream0"] = nrm(ks[12], (1, num_classes), 0.02)
    p["w_stream1"] = nrm(ks[13], (c_feat, num_classes), c_feat ** -0.5)
    p["b_stream1"] = nrm(ks[14], (1, num_classes), 0.02)
    return p


if __name__ == "__main__":
    key = jax.random.PRNGKey(0)
    kx, kp = jax.random.split(key)

    B, CIN, H, W = 2, 6, 64, 64          # 3 RGB + 3 aux channels, min spatial for stride-32
    x = jax.random.normal(kx, (B, CIN, H, W), jnp.float32)
    params = init_params(kp, C_FEAT, K_ATTN, NUM_CLASSES)

    final_pred, stream_preds, attn_w = attention_segmentation_forward(x, params)
    jax.block_until_ready((final_pred, stream_preds, attn_w))

    assert final_pred.shape == (B, NUM_CLASSES, H, W)
    assert stream_preds[0].shape == (B, NUM_CLASSES, H, W)
    assert stream_preds[1].shape == (B, NUM_CLASSES, H, W)
    assert attn_w.shape == (B, 2, H // STRIDE, W // STRIDE)
    print("KERNEL_OK")
</pallas_src>

<mosaic_0001>
module attributes {stable_mosaic.version = 11 : i64} {
  func.func @_linear_relu_kernel(%arg0: i32, %arg1: i32, %arg2: i32, %arg3: memref<16x1024xbf16, #tpu.memory_space<vmem>>, %arg4: memref<1024x32xbf16, #tpu.memory_space<vmem>>, %arg5: memref<1x32xf32, #tpu.memory_space<vmem>>, %arg6: memref<16x32xf32, #tpu.memory_space<vmem>>, %arg7: memref<16x32xf32, #tpu.memory_space<vmem>>) attributes {dimension_semantics = [#tpu.dimension_semantics<parallel>, #tpu.dimension_semantics<parallel>, #tpu.dimension_semantics<arbitrary>], iteration_bounds = array<i64: 1, 1, 3>, scalar_prefetch = 0 : i64, scratch_operands = 1 : i64, tpu.core_type = #tpu.core_type<tc>, window_params = [{transform_indices = @transform_0, window_bounds = array<i64: 16, 1024>}, {transform_indices = @transform_1, window_bounds = array<i64: 1024, 32>}, {transform_indices = @transform_2, window_bounds = array<i64: 1, 32>}, {transform_indices = @transform_3, window_bounds = array<i64: 16, 32>}]} {
    %c0_i32 = arith.constant 0 : i32
    %0 = arith.cmpi eq, %arg2, %c0_i32 : i32
    %1 = arith.extui %0 : i1 to i32
    %c0_i32_0 = arith.constant 0 : i32
    %2 = arith.cmpi ne, %1, %c0_i32_0 : i32
    scf.if %2 {
      %cst_9 = arith.constant 0.000000e+00 : f32
      %12 = vector.broadcast %cst_9 : f32 to vector<16x32xf32>
      %c0_10 = arith.constant 0 : index
      %c0_11 = arith.constant 0 : index
      %13 = vector.load %arg7[%c0_10, %c0_11] : memref<16x32xf32, #tpu.memory_space<vmem>>, vector<16x32xf32>
      tpu.vector_store %arg7[%c0_10, %c0_11], %12 {strides = array<i32>} : memref<16x32xf32, #tpu.memory_space<vmem>>, vector<16x32xf32>,
    } else {
    }
    %c0 = arith.constant 0 : index
    %c0_1 = arith.constant 0 : index
    %3 = vector.load %arg7[%c0, %c0_1] : memref<16x32xf32, #tpu.memory_space<vmem>>, vector<16x32xf32>
    %c0_2 = arith.constant 0 : index
    %c0_3 = arith.constant 0 : index
    %4 = vector.load %arg3[%c0_2, %c0_3] : memref<16x1024xbf16, #tpu.memory_space<vmem>>, vector<16x1024xbf16>
    %c0_4 = arith.constant 0 : index
    %c0_5 = arith.constant 0 : index
    %5 = vector.load %arg4[%c0_4, %c0_5] : memref<1024x32xbf16, #tpu.memory_space<vmem>>, vector<1024x32xbf16>
    %cst = arith.constant dense<0.000000e+00> : vector<16x32xf32>
    %6 = tpu.matmul %4, %5, %cst {dimension_numbers = #tpu.dot_dimension_numbers<[1], [0], [0], [1], [0, 0, 1, 1], [], []>} : vector<16x1024xbf16>, vector<1024x32xbf16>, vector<16x32xf32> -> vector<16x32xf32>
    %7 = arith.addf %3, %6 : vector<16x32xf32>
    %c0_6 = arith.constant 0 : index
    %c0_7 = arith.constant 0 : index
    %8 = vector.load %arg7[%c0_6, %c0_7] : memref<16x32xf32, #tpu.memory_space<vmem>>, vector<16x32xf32>
    tpu.vector_store %arg7[%c0_6, %c0_7], %7 {strides = array<i32>} : memref<16x32xf32, #tpu.memory_space<vmem>>, vector<16x32xf32>,
    %c2_i32 = arith.constant 2 : i32
    %9 = arith.cmpi eq, %arg2, %c2_i32 : i32
    %10 = arith.extui %9 : i1 to i32
    %c0_i32_8 = arith.constant 0 : i32
    %11 = arith.cmpi ne, %10, %c0_i32_8 : i32
    scf.if %11 {
      %c0_9 = arith.constant 0 : index
      %c0_10 = arith.constant 0 : index
      %12 = vector.load %arg7[%c0_9, %c0_10] : memref<16x32xf32, #tpu.memory_space<vmem>>, vector<16x32xf32>
      %c0_11 = arith.constant 0 : index
      %c0_12 = arith.constant 0 : index
      %13 = vector.load %arg5[%c0_11, %c0_12] : memref<1x32xf32, #tpu.memory_space<vmem>>, vector<1x32xf32>
      %14 = vector.broadcast %13 : vector<1x32xf32> to vector<16x32xf32>
      %15 = arith.addf %12, %14 : vector<16x32xf32>
      %cst_13 = arith.constant 0.000000e+00 : f32
      %16 = vector.broadcast %cst_13 : f32 to vector<16x32xf32>
      %17 = arith.maximumf %15, %16 : vector<16x32xf32>
      %c0_14 = arith.constant 0 : index
      %c0_15 = arith.constant 0 : index
      %18 = vector.load %arg6[%c0_14, %c0_15] : memref<16x32xf32, #tpu.memory_space<vmem>>, vector<16x32xf32>
      tpu.vector_store %arg6[%c0_14, %c0_15], %17 {strides = array<i32>} : memref<16x32xf32, #tpu.memory_space<vmem>>, vector<16x32xf32>,
    } else {
    }
    return
  }
  func.func @transform_0(%arg0: i32, %arg1: i32, %arg2: i32) -> (i32, i32) {
    %c0_i32 = arith.constant 0 : i32
    return %arg0, %arg2 : i32, i32
  }
  func.func @transform_1(%arg0: i32, %arg1: i32, %arg2: i32) -> (i32, i32) {
    %c0_i32 = arith.constant 0 : i32
    return %arg2, %arg1 : i32, i32
  }
  func.func @transform_2(%arg0: i32, %arg1: i32, %arg2: i32) -> (i32, i32) {
    %c0_i32 = arith.constant 0 : i32
    %c0_i32_0 = arith.constant 0 : i32
    return %c0_i32, %arg1 : i32, i32
  }
  func.func @transform_3(%arg0: i32, %arg1: i32, %arg2: i32) -> (i32, i32) {
    %c0_i32 = arith.constant 0 : i32
    return %arg0, %arg1 : i32, i32
  }
}

module attributes {stable_mosaic.version = 11 : i64} {
  func.func @_attention_heads_kernel(%arg0: i32, %arg1: memref<1x4x32xf32, #tpu.memory_space<vmem>>, %arg2: memref<1x4x32xf32, #tpu.memory_space<vmem>>, %arg3: memref<2x32xf32, #tpu.memory_space<vmem>>, %arg4: memref<2x32xf32, #tpu.memory_space<vmem>>, %arg5: memref<5x320x128xbf16, #tpu.memory_space<vmem>>, %arg6: memref<1x128xf32, #tpu.memory_space<vmem>>, %arg7: memref<2x128xf32, #tpu.memory_space<vmem>>, %arg8: memref<128x2xbf16, #tpu.memory_space<vmem>>, %arg9: memref<1x2xf32, #tpu.memory_space<vmem>>, %arg10: memref<32x128xbf16, #tpu.memory_space<vmem>>, %arg11: memref<1x128xf32, #tpu.memory_space<vmem>>, %arg12: memref<1x12x128xf32, #tpu.memory_space<vmem>>, %arg13: memref<1x4x2xf32, #tpu.memory_space<vmem>>, %arg14: memref<6x6x64xbf16, #tpu.memory_space<vmem>>) attributes {dimension_semantics = [#tpu.dimension_semantics<parallel>], iteration_bounds = array<i64: 2>, scalar_prefetch = 0 : i64, scratch_operands = 1 : i64, tpu.core_type = #tpu.core_type<tc>, window_params = [{transform_indices = @transform_0, window_bounds = array<i64: 1, 4, 32>}, {transform_indices = @transform_1, window_bounds = array<i64: 1, 4, 32>}, {pipeline_mode = #tpu.pipeline_mode<synchronous>, transform_indices = @transform_2, window_bounds = array<i64: 2, 32>}, {pipeline_mode = #tpu.pipeline_mode<synchronous>, transform_indices = @transform_3, window_bounds = array<i64: 2, 32>}, {pipeline_mode = #tpu.pipeline_mode<synchronous>, transform_indices = @transform_4, window_bounds = array<i64: 5, 320, 128>}, {pipeline_mode = #tpu.pipeline_mode<synchronous>, transform_indices = @transform_5, window_bounds = array<i64: 1, 128>}, {pipeline_mode = #tpu.pipeline_mode<synchronous>, transform_indices = @transform_6, window_bounds = array<i64: 2, 128>}, {pipeline_mode = #tpu.pipeline_mode<synchronous>, transform_indices = @transform_7, window_bounds = array<i64: 128, 2>}, {pipeline_mode = #tpu.pipeline_mode<synchronous>, transform_indices = @transform_8, window_bounds = array<i64: 1, 2>}, {pipeline_mode = #tpu.pipeline_mode<synchronous>, transform_indices = @transform_9, window_bounds = array<i64: 32, 128>}, {pipeline_mode = #tpu.pipeline_mode<synchronous>, transform_indices = @transform_10, window_bounds = array<i64: 1, 128>}, {transform_indices = @transform_11, window_bounds = array<i64: 1, 12, 128>}, {transform_indices = @transform_12, window_bounds = array<i64: 1, 4, 2>}]} {
    %c0 = arith.constant 0 : index
    %c0_0 = arith.constant 0 : index
    %c0_1 = arith.constant 0 : index
    %0 = vector.load %arg1[%c0, %c0_0, %c0_1] : memref<1x4x32xf32, #tpu.memory_space<vmem>>, vector<1x4x32xf32>
    %1 = vector.shape_cast %0 : vector<1x4x32xf32> to vector<4x32xf32>
    %c0_2 = arith.constant 0 : index
    %c0_3 = arith.constant 0 : index
    %2 = vector.load %arg3[%c0_2, %c0_3] : memref<2x32xf32, #tpu.memory_space<vmem>>, vector<1x32xf32>
    %3 = vector.broadcast %2 : vector<1x32xf32> to vector<4x32xf32>
    %4 = arith.mulf %1, %3 : vector<4x32xf32>
    %c1 = arith.constant 1 : index
    %c0_4 = arith.constant 0 : index
    %5 = vector.load %arg3[%c1, %c0_4] : memref<2x32xf32, #tpu.memory_space<vmem>>, vector<1x32xf32>
    %6 = vector.broadcast %5 : vector<1x32xf32> to vector<4x32xf32>
    %7 = arith.addf %4, %6 : vector<4x32xf32>
    %c0_5 = arith.constant 0 : index
    %c0_6 = arith.constant 0 : index
    %c0_7 = arith.constant 0 : index
    %8 = vector.load %arg2[%c0_5, %c0_6, %c0_7] : memref<1x4x32xf32, #tpu.memory_space<vmem>>, vector<1x4x32xf32>
    %9 = vector.shape_cast %8 : vector<1x4x32xf32> to vector<4x32xf32>
    %c0_8 = arith.constant 0 : index
    %c0_9 = arith.constant 0 : index
    %10 = vector.load %arg4[%c0_8, %c0_9] : memref<2x32xf32, #tpu.memory_space<vmem>>, vector<1x32xf32>
    %11 = vector.broadcast %10 : vector<1x32xf32> to vector<4x32xf32>
    %12 = arith.mulf %9, %11 : vector<4x32xf32>
    %c1_10 = arith.constant 1 : index
    %c0_11 = arith.constant 0 : index
    %13 = vector.load %arg4[%c1_10, %c0_11] : memref<2x32xf32, #tpu.memory_space<vmem>>, vector<1x32xf32>
    %14 = vector.broadcast %13 : vector<1x32xf32> to vector<4x32xf32>
    %15 = arith.addf %12, %14 : vector<4x32xf32>
    %cst = arith.constant 0.000000e+00 : bf16
    %16 = vector.broadcast %cst : bf16 to vector<2x6x64xbf16>
    %cst_12 = arith.constant 0.000000e+00 : bf16
    %17 = vector.broadcast %cst_12 : bf16 to vector<2x2x64xbf16>
    %c0_13 = arith.constant 0 : index
    %c0_14 = arith.constant 0 : index
    %c0_15 = arith.constant 0 : index
    %18 = vector.load %arg14[%c0_13, %c0_14, %c0_15] : memref<6x6x64xbf16, #tpu.memory_space<vmem>>, vector<2x6x64xbf16>
    tpu.vector_store %arg14[%c0_13, %c0_14, %c0_15], %16 {strides = array<i32>} : memref<6x6x64xbf16, #tpu.memory_space<vmem>>, vector<2x6x64xbf16>,
    %c4 = arith.constant 4 : index
    %c0_16 = arith.constant 0 : index
    %c0_17 = arith.constant 0 : index
    %19 = vector.load %arg14[%c4, %c0_16, %c0_17] : memref<6x6x64xbf16, #tpu.memory_space<vmem>>, vector<2x6x64xbf16>
    tpu.vector_store %arg14[%c4, %c0_16, %c0_17], %16 {strides = array<i32>} : memref<6x6x64xbf16, #tpu.memory_space<vmem>>, vector<2x6x64xbf16>,
    %c2 = arith.constant 2 : index
    %c0_18 = arith.constant 0 : index
    %c0_19 = arith.constant 0 : index
    %20 = vector.load %arg14[%c2, %c0_18, %c0_19] : memref<6x6x64xbf16, #tpu.memory_space<vmem>>, vector<2x2x64xbf16>
    tpu.vector_store %arg14[%c2, %c0_18, %c0_19], %17 {strides = array<i32>} : memref<6x6x64xbf16, #tpu.memory_space<vmem>>, vector<2x2x64xbf16>,
    %c2_20 = arith.constant 2 : index
    %c4_21 = arith.constant 4 : index
    %c0_22 = arith.constant 0 : index
    %21 = vector.load %arg14[%c2_20, %c4_21, %c0_22] : memref<6x6x64xbf16, #tpu.memory_space<vmem>>, vector<2x2x64xbf16>
    tpu.vector_store %arg14[%c2_20, %c4_21, %c0_22], %17 {strides = array<i32>} : memref<6x6x64xbf16, #tpu.memory_space<vmem>>, vector<2x2x64xbf16>,
    %22 = vector.shape_cast %7 : vector<4x32xf32> to vector<2x2x32xf32>
    %23 = arith.truncf %22 : vector<2x2x32xf32> to vector<2x2x32xbf16>
    %c2_23 = arith.constant 2 : index
    %c2_24 = arith.constant 2 : index
    %c0_25 = arith.constant 0 : index
    %24 = vector.load %arg14[%c2_23, %c2_24, %c0_25] : memref<6x6x64xbf16, #tpu.memory_space<vmem>>, vector<2x2x32xbf16>
    tpu.vector_store %arg14[%c2_23, %c2_24, %c0_25], %23 {strides = array<i32>} : memref<6x6x64xbf16, #tpu.memory_space<vmem>>, vector<2x2x32xbf16>,
    %25 = vector.shape_cast %15 : vector<4x32xf32> to vector<2x2x32xf32>
    %26 = arith.truncf %25 : vector<2x2x32xf32> to vector<2x2x32xbf16>
    %c2_26 = arith.constant 2 : index
    %c2_27 = arith.constant 2 : index
    %c32 = arith.constant 32 : index
    %27 = vector.load %arg14[%c2_26, %c2_27, %c32] : memref<6x6x64xbf16, #tpu.memory_space<vmem>>, vector<2x2x32xbf16>
    tpu.vector_store %arg14[%c2_26, %c2_27, %c32], %26 {strides = array<i32>} : memref<6x6x64xbf16, #tpu.memory_space<vmem>>, vector<2x2x32xbf16>,
    %cst_28 = arith.constant 0.000000e+00 : f32
    %28 = vector.broadcast %cst_28 : f32 to vector<4x128xf32>
    %c0_29 = arith.constant 0 : index
    %c0_30 = arith.constant 0 : index
    %c0_31 = arith.constant 0 : index
    %29 = vector.load %arg14[%c0_29, %c0_30, %c0_31] : memref<6x6x64xbf16, #tpu.memory_space<vmem>>, vector<2x2x64xbf16>
    %30 = vector.shape_cast %29 : vector<2x2x64xbf16> to vector<4x64xbf16>
    %c0_32 = arith.constant 0 : index
    %c1_33 = arith.constant 1 : index
    %c0_34 = arith.constant 0 : index
    %31 = vector.load %arg14[%c0_32, %c1_33, %c0_34] : memref<6x6x64xbf16, #tpu.memory_space<vmem>>, vector<2x2x64xbf16>
    %32 = vector.shape_cast %31 : vector<2x2x64xbf16> to vector<4x64xbf16>
    %c0_35 = arith.constant 0 : index
    %c2_36 = arith.constant 2 : index
    %c0_37 = arith.constant 0 : index
    %33 = vector.load %arg14[%c0_35, %c2_36, %c0_37] : memref<6x6x64xbf16, #tpu.memory_space<vmem>>, vector<2x2x64xbf16>
    %34 = vector.shape_cast %33 : vector<2x2x64xbf16> to vector<4x64xbf16>
    %c0_38 = arith.constant 0 : index
    %c3 = arith.constant 3 : index
    %c0_39 = arith.constant 0 : index
    %35 = vector.load %arg14[%c0_38, %c3, %c0_39] : memref<6x6x64xbf16, #tpu.memory_space<vmem>>, vector<2x2x64xbf16>
    %36 = vector.shape_cast %35 : vector<2x2x64xbf16> to vector<4x64xbf16>
    %c0_40 = arith.constant 0 : index
    %c4_41 = arith.constant 4 : index
    %c0_42 = arith.constant 0 : index
    %37 = vector.load %arg14[%c0_40, %c4_41, %c0_42] : memref<6x6x64xbf16, #tpu.memory_space<vmem>>, vector<2x2x64xbf16>
    %38 = vector.shape_cast %37 : vector<2x2x64xbf16> to vector<4x64xbf16>
    %39 = tpu.concatenate %30, %32, %34, %36, %38 in 1 : vector<4x64xbf16>, vector<4x64xbf16>, vector<4x64xbf16>, vector<4x64xbf16>, vector<4x64xbf16> -> vector<4x320xbf16>
    %c0_43 = arith.constant 0 : index
    %c0_44 = arith.constant 0 : index
    %c0_45 = arith.constant 0 : index
    %40 = vector.load %arg5[%c0_43, %c0_44, %c0_45] : memref<5x320x128xbf16, #tpu.memory_space<vmem>>, vector<1x320x128xbf16>
    %41 = vector.shape_cast %40 : vector<1x320x128xbf16> to vector<320x128xbf16>
    %cst_46 = arith.constant dense<0.000000e+00> : vector<4x128xf32>
    %42 = tpu.matmul %39, %41, %cst_46 {dimension_numbers = #tpu.dot_dimension_numbers<[1], [0], [0], [1], [0, 0, 1, 1], [], []>} : vector<4x320xbf16>, vector<320x128xbf16>, vector<4x128xf32> -> vector<4x128xf32>
    %43 = arith.addf %28, %42 : vector<4x128xf32>
    %c1_47 = arith.constant 1 : index
    %c0_48 = arith.constant 0 : index
    %c0_49 = arith.constant 0 : index
    %44 = vector.load %arg14[%c1_47, %c0_48, %c0_49] : memref<6x6x64xbf16, #tpu.memory_space<vmem>>, vector<2x2x64xbf16>
    %45 = vector.shape_cast %44 : vector<2x2x64xbf16> to vector<4x64xbf16>
    %c1_50 = arith.constant 1 : index
    %c1_51 = arith.constant 1 : index
    %c0_52 = arith.constant 0 : index
    %46 = vector.load %arg14[%c1_50, %c1_51, %c0_52] : memref<6x6x64xbf16, #tpu.memory_space<vmem>>, vector<2x2x64xbf16>
    %47 = vector.shape_cast %46 : vector<2x2x64xbf16> to vector<4x64xbf16>
    %c1_53 = arith.constant 1 : index
    %c2_54 = arith.constant 2 : index
    %c0_55 = arith.constant 0 : index
    %48 = vector.load %arg14[%c1_53, %c2_54, %c0_55] : memref<6x6x64xbf16, #tpu.memory_space<vmem>>, vector<2x2x64xbf16>
    %49 = vector.shape_cast %48 : vector<2x2x64xbf16> to vector<4x64xbf16>
    %c1_56 = arith.constant 1 : index
    %c3_57 = arith.constant 3 : index
    %c0_58 = arith.constant 0 : index
    %50 = vector.load %arg14[%c1_56, %c3_57, %c0_58] : memref<6x6x64xbf16, #tpu.memory_space<vmem>>, vector<2x2x64xbf16>
    %51 = vector.shape_cast %50 : vector<2x2x64xbf16> to vector<4x64xbf16>
    %c1_59 = arith.constant 1 : index
    %c4_60 = arith.constant 4 : index
    %c0_61 = arith.constant 0 : index
    %52 = vector.load %arg14[%c1_59, %c4_60, %c0_61] : memref<6x6x64xbf16, #tpu.memory_space<vmem>>, vector<2x2x64xbf16>
    %53 = vector.shape_cast %52 : vector<2x2x64xbf16> to vector<4x64xbf16>
    %54 = tpu.concatenate %45, %47, %49, %51, %53 in 1 : vector<4x64xbf16>, vector<4x64xbf16>, vector<4x64xbf16>, vector<4x64xbf16>, vector<4x64xbf16> -> vector<4x320xbf16>
    %c1_62 = arith.constant 1 : index
    %c0_63 = arith.constant 0 : index
    %c0_64 = arith.constant 0 : index
    %55 = vector.load %arg5[%c1_62, %c0_63, %c0_64] : memref<5x320x128xbf16, #tpu.memory_space<vmem>>, vector<1x320x128xbf16>
    %56 = vector.shape_cast %55 : vector<1x320x128xbf16> to vector<320x128xbf16>
    %cst_65 = arith.constant dense<0.000000e+00> : vector<4x128xf32>
    %57 = tpu.matmul %54, %56, %cst_65 {dimension_numbers = #tpu.dot_dimension_numbers<[1], [0], [0], [1], [0, 0, 1, 1], [], []>} : vector<4x320xbf16>, vector<320x128xbf16>, vector<4x128xf32> -> vector<4x128xf32>
    %58 = arith.addf %43, %57 : vector<4x128xf32>
    %c2_66 = arith.constant 2 : index
    %c0_67 = arith.constant 0 : index
    %c0_68 = arith.constant 0 : index
    %59 = vector.load %arg14[%c2_66, %c0_67, %c0_68] : memref<6x6x64xbf16, #tpu.memory_space<vmem>>, vector<2x2x64xbf16>
    %60 = vector.shape_cast %59 : vector<2x2x64xbf16> to vector<4x64xbf16>
    %c2_69 = arith.constant 2 : index
    %c1_70 = arith.constant 1 : index
    %c0_71 = arith.constant 0 : index
    %61 = vector.load %arg14[%c2_69, %c1_70, %c0_71] : memref<6x6x64xbf16, #tpu.memory_space<vmem>>, vector<2x2x64xbf16>
    %62 = vector.shape_cast %61 : vector<2x2x64xbf16> to vector<4x64xbf16>
    %c2_72 = arith.constant 2 : index
    %c2_73 = arith.constant 2 : index
    %c0_74 = arith.constant 0 : index
    %63 = vector.load %arg14[%c2_72, %c2_73, %c0_74] : memref<6x6x64xbf16, #tpu.memory_space<vmem>>, vector<2x2x64xbf16>
    %64 = vector.shape_cast %63 : vector<2x2x64xbf16> to vector<4x64xbf16>
    %c2_75 = arith.constant 2 : index
    %c3_76 = arith.constant 3 : index
    %c0_77 = arith.constant 0 : index
    %65 = vector.load %arg14[%c2_75, %c3_76, %c0_77] : memref<6x6x64xbf16, #tpu.memory_space<vmem>>, vector<2x2x64xbf16>
    %66 = vector.shape_cast %65 : vector<2x2x64xbf16> to vector<4x64xbf16>
    %c2_78 = arith.constant 2 : index
    %c4_79 = arith.constant 4 : index
    %c0_80 = arith.constant 0 : index
    %67 = vector.load %arg14[%c2_78, %c4_79, %c0_80] : memref<6x6x64xbf16, #tpu.memory_space<vmem>>, vector<2x2x64xbf16>
    %68 = vector.shape_cast %67 : vector<2x2x64xbf16> to vector<4x64xbf16>
    %69 = tpu.concatenate %60, %62, %64, %66, %68 in 1 : vector<4x64xbf16>, vector<4x64xbf16>, vector<4x64xbf16>, vector<4x64xbf16>, vector<4x64xbf16> -> vector<4x320xbf16>
    %c2_81 = arith.constant 2 : index
    %c0_82 = arith.constant 0 : index
    %c0_83 = arith.constant 0 : index
    %70 = vector.load %arg5[%c2_81, %c0_82, %c0_83] : memref<5x320x128xbf16, #tpu.memory_space<vmem>>, vector<1x320x128xbf16>
    %71 = vector.shape_cast %70 : vector<1x320x128xbf16> to vector<320x128xbf16>
    %cst_84 = arith.constant dense<0.000000e+00> : vector<4x128xf32>
    %72 = tpu.matmul %69, %71, %cst_84 {dimension_numbers = #tpu.dot_dimension_numbers<[1], [0], [0], [1], [0, 0, 1, 1], [], []>} : vector<4x320xbf16>, vector<320x128xbf16>, vector<4x128xf32> -> vector<4x128xf32>
    %73 = arith.addf %58, %72 : vector<4x128xf32>
    %c3_85 = arith.constant 3 : index
    %c0_86 = arith.constant 0 : index
    %c0_87 = arith.constant 0 : index
    %74 = vector.load %arg14[%c3_85, %c0_86, %c0_87] : memref<6x6x64xbf16, #tpu.memory_space<vmem>>, vector<2x2x64xbf16>
    %75 = vector.shape_cast %74 : vector<2x2x64xbf16> to vector<4x64xbf16>
    %c3_88 = arith.constant 3 : index
    %c1_89 = arith.constant 1 : index
    %c0_90 = arith.constant 0 : index
    %76 = vector.load %arg14[%c3_88, %c1_89, %c0_90] : memref<6x6x64xbf16, #tpu.memory_space<vmem>>, vector<2x2x64xbf16>
    %77 = vector.shape_cast %76 : vector<2x2x64xbf16> to vector<4x64xbf16>
    %c3_91 = arith.constant 3 : index
    %c2_92 = arith.constant 2 : index
    %c0_93 = arith.constant 0 : index
    %78 = vector.load %arg14[%c3_91, %c2_92, %c0_93] : memref<6x6x64xbf16, #tpu.memory_space<vmem>>, vector<2x2x64xbf16>
    %79 = vector.shape_cast %78 : vector<2x2x64xbf16> to vector<4x64xbf16>
    %c3_94 = arith.constant 3 : index
    %c3_95 = arith.constant 3 : index
    %c0_96 = arith.constant 0 : index
    %80 = vector.load %arg14[%c3_94, %c3_95, %c0_96] : memref<6x6x64xbf16, #tpu.memory_space<vmem>>, vector<2x2x64xbf16>
    %81 = vector.shape_cast %80 : vector<2x2x64xbf16> to vector<4x64xbf16>
    %c3_97 = arith.constant 3 : index
    %c4_98 = arith.constant 4 : index
    %c0_99 = arith.constant 0 : index
    %82 = vector.load %arg14[%c3_97, %c4_98, %c0_99] : memref<6x6x64xbf16, #tpu.memory_space<vmem>>, vector<2x2x64xbf16>
    %83 = vector.shape_cast %82 : vector<2x2x64xbf16> to vector<4x64xbf16>
    %84 = tpu.concatenate %75, %77, %79, %81, %83 in 1 : vector<4x64xbf16>, vector<4x64xbf16>, vector<4x64xbf16>, vector<4x64xbf16>, vector<4x64xbf16> -> vector<4x320xbf16>
    %c3_100 = arith.constant 3 : index
    %c0_101 = arith.constant 0 : index
    %c0_102 = arith.constant 0 : index
    %85 = vector.load %arg5[%c3_100, %c0_101, %c0_102] : memref<5x320x128xbf16, #tpu.memory_space<vmem>>, vector<1x320x128xbf16>
    %86 = vector.shape_cast %85 : vector<1x320x128xbf16> to vector<320x128xbf16>
    %cst_103 = arith.constant dense<0.000000e+00> : vector<4x128xf32>
    %87 = tpu.matmul %84, %86, %cst_103 {dimension_numbers = #tpu.dot_dimension_numbers<[1], [0], [0], [1], [0, 0, 1, 1], [], []>} : vector<4x320xbf16>, vector<320x128xbf16>, vector<4x128xf32> -> vector<4x128xf32>
    %88 = arith.addf %73, %87 : vector<4x128xf32>
    %c4_104 = arith.constant 4 : index
    %c0_105 = arith.constant 0 : index
    %c0_106 = arith.constant 0 : index
    %89 = vector.load %arg14[%c4_104, %c0_105, %c0_106] : memref<6x6x64xbf16, #tpu.memory_space<vmem>>, vector<2x2x64xbf16>
    %90 = vector.shape_cast %89 : vector<2x2x64xbf16> to vector<4x64xbf16>
    %c4_107 = arith.constant 4 : index
    %c1_108 = arith.constant 1 : index
    %c0_109 = arith.constant 0 : index
    %91 = vector.load %arg14[%c4_107, %c1_108, %c0_109] : memref<6x6x64xbf16, #tpu.memory_space<vmem>>, vector<2x2x64xbf16>
    %92 = vector.shape_cast %91 : vector<2x2x64xbf16> to vector<4x64xbf16>
    %c4_110 = arith.constant 4 : index
    %c2_111 = arith.constant 2 : index
    %c0_112 = arith.constant 0 : index
    %93 = vector.load %arg14[%c4_110, %c2_111, %c0_112] : memref<6x6x64xbf16, #tpu.memory_space<vmem>>, vector<2x2x64xbf16>
    %94 = vector.shape_cast %93 : vector<2x2x64xbf16> to vector<4x64xbf16>
    %c4_113 = arith.constant 4 : index
    %c3_114 = arith.constant 3 : index
    %c0_115 = arith.constant 0 : index
    %95 = vector.load %arg14[%c4_113, %c3_114, %c0_115] : memref<6x6x64xbf16, #tpu.memory_space<vmem>>, vector<2x2x64xbf16>
    %96 = vector.shape_cast %95 : vector<2x2x64xbf16> to vector<4x64xbf16>
    %c4_116 = arith.constant 4 : index
    %c4_117 = arith.constant 4 : index
    %c0_118 = arith.constant 0 : index
    %97 = vector.load %arg14[%c4_116, %c4_117, %c0_118] : memref<6x6x64xbf16, #tpu.memory_space<vmem>>, vector<2x2x64xbf16>
    %98 = vector.shape_cast %97 : vector<2x2x64xbf16> to vector<4x64xbf16>
    %99 = tpu.concatenate %90, %92, %94, %96, %98 in 1 : vector<4x64xbf16>, vector<4x64xbf16>, vector<4x64xbf16>, vector<4x64xbf16>, vector<4x64xbf16> -> vector<4x320xbf16>
    %c4_119 = arith.constant 4 : index
    %c0_120 = arith.constant 0 : index
    %c0_121 = arith.constant 0 : index
    %100 = vector.load %arg5[%c4_119, %c0_120, %c0_121] : memref<5x320x128xbf16, #tpu.memory_space<vmem>>, vector<1x320x128xbf16>
    %101 = vector.shape_cast %100 : vector<1x320x128xbf16> to vector<320x128xbf16>
    %cst_122 = arith.constant dense<0.000000e+00> : vector<4x128xf32>
    %102 = tpu.matmul %99, %101, %cst_122 {dimension_numbers = #tpu.dot_dimension_numbers<[1], [0], [0], [1], [0, 0, 1, 1], [], []>} : vector<4x320xbf16>, vector<320x128xbf16>, vector<4x128xf32> -> vector<4x128xf32>
    %103 = arith.addf %88, %102 : vector<4x128xf32>
    %c0_123 = arith.constant 0 : index
    %c0_124 = arith.constant 0 : index
    %104 = vector.load %arg6[%c0_123, %c0_124] : memref<1x128xf32, #tpu.memory_space<vmem>>, vector<1x128xf32>
    %105 = vector.broadcast %104 : vector<1x128xf32> to vector<4x128xf32>
    %106 = arith.addf %103, %105 : vector<4x128xf32>
    %c0_125 = arith.constant 0 : index
    %c0_126 = arith.constant 0 : index
    %107 = vector.load %arg7[%c0_125, %c0_126] : memref<2x128xf32, #tpu.memory_space<vmem>>, vector<1x128xf32>
    %108 = vector.broadcast %107 : vector<1x128xf32> to vector<4x128xf32>
    %109 = arith.mulf %106, %108 : vector<4x128xf32>
    %c1_127 = arith.constant 1 : index
    %c0_128 = arith.constant 0 : index
    %110 = vector.load %arg7[%c1_127, %c0_128] : memref<2x128xf32, #tpu.memory_space<vmem>>, vector<1x128xf32>
    %111 = vector.broadcast %110 : vector<1x128xf32> to vector<4x128xf32>
    %112 = arith.addf %109, %111 : vector<4x128xf32>
    %cst_129 = arith.constant 0.000000e+00 : f32
    %113 = vector.broadcast %cst_129 : f32 to vector<4x128xf32>
    %114 = arith.maximumf %112, %113 : vector<4x128xf32>
    %115 = arith.truncf %114 : vector<4x128xf32> to vector<4x128xbf16>
    %c0_130 = arith.constant 0 : index
    %c0_131 = arith.constant 0 : index
    %116 = vector.load %arg8[%c0_130, %c0_131] : memref<128x2xbf16, #tpu.memory_space<vmem>>, vector<128x2xbf16>
    %cst_132 = arith.constant dense<0.000000e+00> : vector<4x2xf32>
    %117 = tpu.matmul %115, %116, %cst_132 {dimension_numbers = #tpu.dot_dimension_numbers<[1], [0], [0], [1], [0, 0, 1, 1], [], []>} : vector<4x128xbf16>, vector<128x2xbf16>, vector<4x2xf32> -> vector<4x2xf32>
    %c0_133 = arith.constant 0 : index
    %c0_134 = arith.constant 0 : index
    %118 = vector.load %arg9[%c0_133, %c0_134] : memref<1x2xf32, #tpu.memory_space<vmem>>, vector<1x2xf32>
    %119 = vector.broadcast %118 : vector<1x2xf32> to vector<4x2xf32>
    %120 = arith.addf %117, %119 : vector<4x2xf32>
    %121 = arith.negf %120 : vector<4x2xf32>
    %122 = math.exp %121 : vector<4x2xf32>
    %cst_135 = arith.constant 1.000000e+00 : f32
    %123 = vector.broadcast %cst_135 : f32 to vector<4x2xf32>
    %124 = arith.addf %123, %122 : vector<4x2xf32>
    %125 = arith.divf %123, %124 : vector<4x2xf32>
    %126 = vector.extract_strided_slice %125 {offsets = [0, 0], sizes = [4, 1], strides = [1, 1]} : vector<4x2xf32> to vector<4x1xf32>
    %127 = vector.broadcast %126 : vector<4x1xf32> to vector<4x32xf32>
    %128 = arith.mulf %7, %127 : vector<4x32xf32>
    %129 = vector.extract_strided_slice %125 {offsets = [0, 1], sizes = [4, 1], strides = [1, 1]} : vector<4x2xf32> to vector<4x1xf32>
    %130 = vector.broadcast %129 : vector<4x1xf32> to vector<4x32xf32>
    %131 = arith.mulf %15, %130 : vector<4x32xf32>
    %132 = arith.addf %128, %131 : vector<4x32xf32>
    %133 = tpu.concatenate %132, %7, %15 in 0 : vector<4x32xf32>, vector<4x32xf32>, vector<4x32xf32> -> vector<12x32xf32>
    %134 = arith.truncf %133 : vector<12x32xf32> to vector<12x32xbf16>
    %c0_136 = arith.constant 0 : index
    %c0_137 = arith.constant 0 : index
    %135 = vector.load %arg10[%c0_136, %c0_137] : memref<32x128xbf16, #tpu.memory_space<vmem>>, vector<32x128xbf16>
    %cst_138 = arith.constant dense<0.000000e+00> : vector<12x128xf32>
    %136 = tpu.matmul %134, %135, %cst_138 {dimension_numbers = #tpu.dot_dimension_numbers<[1], [0], [0], [1], [0, 0, 1, 1], [], []>} : vector<12x32xbf16>, vector<32x128xbf16>, vector<12x128xf32> -> vector<12x128xf32>
    %c0_139 = arith.constant 0 : index
    %c0_140 = arith.constant 0 : index
    %137 = vector.load %arg11[%c0_139, %c0_140] : memref<1x128xf32, #tpu.memory_space<vmem>>, vector<1x128xf32>
    %138 = vector.broadcast %137 : vector<1x128xf32> to vector<12x128xf32>
    %139 = arith.addf %136, %138 : vector<12x128xf32>
    %c0_141 = arith.constant 0 : index
    %c0_142 = arith.constant 0 : index
    %c0_143 = arith.constant 0 : index
    %140 = vector.load %arg12[%c0_141, %c0_142, %c0_143] : memref<1x12x128xf32, #tpu.memory_space<vmem>>, vector<1x12x128xf32>
    %141 = vector.shape_cast %140 : vector<1x12x128xf32> to vector<12x128xf32>
    %142 = vector.shape_cast %139 : vector<12x128xf32> to vector<1x12x128xf32>
    tpu.vector_store %arg12[%c0_141, %c0_142, %c0_143], %142 {strides = array<i32>} : memref<1x12x128xf32, #tpu.memory_space<vmem>>, vector<1x12x128xf32>,
    %c0_144 = arith.constant 0 : index
    %c0_145 = arith.constant 0 : index
    %c0_146 = arith.constant 0 : index
    %143 = vector.load %arg13[%c0_144, %c0_145, %c0_146] : memref<1x4x2xf32, #tpu.memory_space<vmem>>, vector<1x4x2xf32>
    %144 = vector.shape_cast %143 : vector<1x4x2xf32> to vector<4x2xf32>
    %145 = vector.shape_cast %125 : vector<4x2xf32> to vector<1x4x2xf32>
    tpu.vector_store %arg13[%c0_144, %c0_145, %c0_146], %145 {strides = array<i32>} : memref<1x4x2xf32, #tpu.memory_space<vmem>>, vector<1x4x2xf32>,
    return
  }
  func.func @transform_0(%arg0: i32) -> (i32, i32, i32) {
    %c0_i32 = arith.constant 0 : i32
    %c0_i32_0 = arith.constant 0 : i32
    %c0_i32_1 = arith.constant 0 : i32
    return %arg0, %c0_i32, %c0_i32_0 : i32, i32, i32
  }
  func.func @transform_1(%arg0: i32) -> (i32, i32, i32) {
    %c0_i32 = arith.constant 0 : i32
    %c0_i32_0 = arith.constant 0 : i32
    %c0_i32_1 = arith.constant 0 : i32
    return %arg0, %c0_i32, %c0_i32_0 : i32, i32, i32
  }
  func.func @transform_2(%arg0: i32) -> (i32, i32) {
    %c0_i32 = arith.constant 0 : i32
    %c0_i32_0 = arith.constant 0 : i32
    %c0_i32_1 = arith.constant 0 : i32
    return %c0_i32, %c0_i32_0 : i32, i32
  }
  func.func @transform_3(%arg0: i32) -> (i32, i32) {
    %c0_i32 = arith.constant 0 : i32
    %c0_i32_0 = arith.constant 0 : i32
    %c0_i32_1 = arith.constant 0 : i32
    return %c0_i32, %c0_i32_0 : i32, i32
  }
  func.func @transform_4(%arg0: i32) -> (i32, i32, i32) {
    %c0_i32 = arith.constant 0 : i32
    %c0_i32_0 = arith.constant 0 : i32
    %c0_i32_1 = arith.constant 0 : i32
    %c0_i32_2 = arith.constant 0 : i32
    return %c0_i32, %c0_i32_0, %c0_i32_1 : i32, i32, i32
  }
  func.func @transform_5(%arg0: i32) -> (i32, i32) {
    %c0_i32 = arith.constant 0 : i32
    %c0_i32_0 = arith.constant 0 : i32
    %c0_i32_1 = arith.constant 0 : i32
    return %c0_i32, %c0_i32_0 : i32, i32
  }
  func.func @transform_6(%arg0: i32) -> (i32, i32) {
    %c0_i32 = arith.constant 0 : i32
    %c0_i32_0 = arith.constant 0 : i32
    %c0_i32_1 = arith.constant 0 : i32
    return %c0_i32, %c0_i32_0 : i32, i32
  }
  func.func @transform_7(%arg0: i32) -> (i32, i32) {
    %c0_i32 = arith.constant 0 : i32
    %c0_i32_0 = arith.constant 0 : i32
    %c0_i32_1 = arith.constant 0 : i32
    return %c0_i32, %c0_i32_0 : i32, i32
  }
  func.func @transform_8(%arg0: i32) -> (i32, i32) {
    %c0_i32 = arith.constant 0 : i32
    %c0_i32_0 = arith.constant 0 : i32
    %c0_i32_1 = arith.constant 0 : i32
    return %c0_i32, %c0_i32_0 : i32, i32
  }
  func.func @transform_9(%arg0: i32) -> (i32, i32) {
    %c0_i32 = arith.constant 0 : i32
    %c0_i32_0 = arith.constant 0 : i32
    %c0_i32_1 = arith.constant 0 : i32
    return %c0_i32, %c0_i32_0 : i32, i32
  }
  func.func @transform_10(%arg0: i32) -> (i32, i32) {
    %c0_i32 = arith.constant 0 : i32
    %c0_i32_0 = arith.constant 0 : i32
    %c0_i32_1 = arith.constant 0 : i32
    return %c0_i32, %c0_i32_0 : i32, i32
  }
  func.func @transform_11(%arg0: i32) -> (i32, i32, i32) {
    %c0_i32 = arith.constant 0 : i32
    %c0_i32_0 = arith.constant 0 : i32
    %c0_i32_1 = arith.constant 0 : i32
    return %arg0, %c0_i32, %c0_i32_0 : i32, i32, i32
  }
  func.func @transform_12(%arg0: i32) -> (i32, i32, i32) {
    %c0_i32 = arith.constant 0 : i32
    %c0_i32_0 = arith.constant 0 : i32
    %c0_i32_1 = arith.constant 0 : i32
    return %arg0, %c0_i32, %c0_i32_0 : i32, i32, i32
  }
}

module attributes {stable_mosaic.version = 11 : i64} {
  func.func @_upsample_kernel(%arg0: i32, %arg1: i32, %arg2: memref<1x15x2x2xf32, #tpu.memory_space<vmem>>, %arg3: memref<32x2xf32, #tpu.memory_space<vmem>>, %arg4: memref<2x64xf32, #tpu.memory_space<vmem>>, %arg5: memref<1x15x32x64xf32, #tpu.memory_space<vmem>>) attributes {dimension_semantics = [#tpu.dimension_semantics<parallel>, #tpu.dimension_semantics<parallel>], iteration_bounds = array<i64: 2, 2>, scalar_prefetch = 0 : i64, scratch_operands = 0 : i64, tpu.core_type = #tpu.core_type<tc>, window_params = [{transform_indices = @transform_0, window_bounds = array<i64: 1, 15, 2, 2>}, {transform_indices = @transform_1, window_bounds = array<i64: 32, 2>}, {pipeline_mode = #tpu.pipeline_mode<synchronous>, transform_indices = @transform_2, window_bounds = array<i64: 2, 64>}, {transform_indices = @transform_3, window_bounds = array<i64: 1, 15, 32, 64>}]} {
    %c0 = arith.constant 0 : index
    %c0_0 = arith.constant 0 : index
    %c0_1 = arith.constant 0 : index
    %c0_2 = arith.constant 0 : index
    %0 = vector.load %arg2[%c0, %c0_0, %c0_1, %c0_2] : memref<1x15x2x2xf32, #tpu.memory_space<vmem>>, vector<1x15x2x2xf32>
    %1 = vector.shape_cast %0 : vector<1x15x2x2xf32> to vector<15x2x2xf32>
    %2 = vector.shape_cast %1 : vector<15x2x2xf32> to vector<30x2xf32>
    %c0_3 = arith.constant 0 : index
    %c0_4 = arith.constant 0 : index
    %3 = vector.load %arg4[%c0_3, %c0_4] : memref<2x64xf32, #tpu.memory_space<vmem>>, vector<2x64xf32>
    %cst = arith.constant dense<0.000000e+00> : vector<30x64xf32>
    %4 = tpu.matmul %2, %3, %cst {dimension_numbers = #tpu.dot_dimension_numbers<[1], [0], [0], [1], [0, 0, 1, 1], [], []>} : vector<30x2xf32>, vector<2x64xf32>, vector<30x64xf32> -> vector<30x64xf32>
    %5 = vector.shape_cast %4 : vector<30x64xf32> to vector<15x2x64xf32>
    %c0_5 = arith.constant 0 : index
    %c0_6 = arith.constant 0 : index
    %6 = vector.load %arg3[%c0_5, %c0_6] : memref<32x2xf32, #tpu.memory_space<vmem>>, vector<32x2xf32>
    %7 = vector.shape_cast %6 : vector<32x2xf32> to vector<1x32x2xf32>
    %8 = vector.shape_cast %7 : vector<1x32x2xf32> to vector<1x32x2xf32>
    %9 = vector.broadcast %8 : vector<1x32x2xf32> to vector<15x32x2xf32>
    %cst_7 = arith.constant dense<0.000000e+00> : vector<15x32x64xf32>
    %10 = tpu.matmul %9, %5, %cst_7 {dimension_numbers = #tpu.dot_dimension_numbers<[2], [1], [1], [2], [0, 0, 0, 1, 1, 2], [0], [0]>} : vector<15x32x2xf32>, vector<15x2x64xf32>, vector<15x32x64xf32> -> vector<15x32x64xf32>
    %c0_8 = arith.constant 0 : index
    %c0_9 = arith.constant 0 : index
    %c0_10 = arith.constant 0 : index
    %c0_11 = arith.constant 0 : index
    %11 = vector.load %arg5[%c0_8, %c0_9, %c0_10, %c0_11] : memref<1x15x32x64xf32, #tpu.memory_space<vmem>>, vector<1x15x32x64xf32>
    %12 = vector.shape_cast %11 : vector<1x15x32x64xf32> to vector<15x32x64xf32>
    %13 = vector.shape_cast %10 : vector<15x32x64xf32> to vector<1x15x32x64xf32>
    tpu.vector_store %arg5[%c0_8, %c0_9, %c0_10, %c0_11], %13 {strides = array<i32>} : memref<1x15x32x64xf32, #tpu.memory_space<vmem>>, vector<1x15x32x64xf32>,
    return
  }
  func.func @transform_0(%arg0: i32, %arg1: i32) -> (i32, i32, i32, i32) {
    %c0_i32 = arith.constant 0 : i32
    %c0_i32_0 = arith.constant 0 : i32
    %c0_i32_1 = arith.constant 0 : i32
    %c0_i32_2 = arith.constant 0 : i32
    return %arg0, %c0_i32, %c0_i32_0, %c0_i32_1 : i32, i32, i32, i32
  }
  func.func @transform_1(%arg0: i32, %arg1: i32) -> (i32, i32) {
    %c0_i32 = arith.constant 0 : i32
    %c0_i32_0 = arith.constant 0 : i32
    return %arg1, %c0_i32 : i32, i32
  }
  func.func @transform_2(%arg0: i32, %arg1: i32) -> (i32, i32) {
    %c0_i32 = arith.constant 0 : i32
    %c0_i32_0 = arith.constant 0 : i32
    %c0_i32_1 = arith.constant 0 : i32
    return %c0_i32, %c0_i32_0 : i32, i32
  }
  func.func @transform_3(%arg0: i32, %arg1: i32) -> (i32, i32, i32, i32) {
    %c0_i32 = arith.constant 0 : i32
    %c0_i32_0 = arith.constant 0 : i32
    %c0_i32_1 = arith.constant 0 : i32
    return %arg0, %c0_i32, %arg1, %c0_i32_0 : i32, i32, i32, i32
  }
}

</mosaic_0001>

<llo_original>
// kernel: attention_segmentation_forward.3
$region0: #{attention_segmentation_forward.3}
  #allocation0 [shape = 'u32[]', space=smem, size = 0x4, offset = 0x4, fixed_abs, tag = 'smem constant byte address 0x4 - core index']
  #allocation1 [shape = 'u32[72,128]{1,0:T(1,128)}', space=vmem, size = 0x9000, scoped, tag = 'internal scratch']
  #allocation2 [shape = 'f32[16,32]{1,0:T(8,128)}', space=vmem, size = 0x2000, scoped, tag = 'scratch operand']
  %s0 = inlined_call_operand.vmem [shape: bf16[16,3072], index: 0, kind: input, shape index: {}]
  %s1 = inlined_call_operand.vmem [shape: bf16[3072,32], index: 1, kind: input, shape index: {}]
  %s2 = inlined_call_operand.vmem [shape: f32[1,32], index: 2, kind: input, shape index: {}]
  %s3 = inlined_call_operand.vmem [shape: f32[16,32], index: 3, kind: output, shape index: {}]
  %s4 = sld [smem:[#allocation0]]
  $region76: #{attention_segmentation_forward.3} parent=0
    _
  %s6 = ssub.s32 1, %s4
  %s7 = scalar_select 0, %s6, %s4
  $region1: #{attention_segmentation_forward.3} parent=0
    #allocation3 [shape = 'u8[65536]{0}', space=vmem, size = 0x10000, scoped, tag = 'input window, operand 0']
    loop: start=0, step=1, limit=5
    $region2: #{attention_segmentation_forward.3} parent=1 // loop_pre_header
      _
    $region3: #{attention_segmentation_forward.3} parent=1 // loop_header
      %s9 = sphi 0, %s13
      %p10 = scmp.ge.s32.totalorder %s9, 5
      %s16 = sphi 0, %s35
      %s17 = sphi 0, %s31
      %s18 = sphi 0, %s27
      %s19 = sphi 0, %s16
      %s20 = sphi 0, %s17
      %s21 = sphi 0, %s18
      %s22 = sphi 0, %s19
      %s23 = sphi 0, %s20
      %s24 = sphi 0, %s21
      %s40 = sphi 0, %s42
      %s43 = sphi 0, %s40
      %s44 = sphi 0, %s43
      %s60 = sphi 0, %s44
      %s68 = sphi 0, %s70
      %s71 = sphi 0, %s68
      %s72 = sphi 0, %s71
      %s88 = sphi 0, %s72
      %s94 = sphi 0, %s96
      %s97 = sphi 0, %s94
      %s98 = sphi 0, %s97
      %s114 = sphi 0, %s98
      %s122 = sphi 0, %s124
      %s125 = sphi 0, %s122
      %s126 = sphi 0, %s125
      %s142 = sphi 0, %s126
    $region4: #{attention_segmentation_forward.3} parent=1 // loop_header_branch
      %12 = sbr.rel (%p10) target = $region8
    $region5: #{attention_segmentation_forward.3} parent=1 // loop_body
      %s14 = ssub.s32 %s9, 1
      %s15 = ssub.s32 %s9, 2
      %s25 = sadd.s32 1, %s18
      %p26 = scmp.ge.s32.totalorder %s25, 3
      %s27 = scalar_select %p26, 0, %s25
      %s28 = sadd.s32 1, %s17
      %s29 = scalar_select %p26, %s28, %s17
      %p30 = scmp.ge.s32.totalorder %s29, 1
      %s31 = scalar_select %p30, 0, %s29
      %s32 = sadd.s32 1, %s16
      %s33 = scalar_select %p30, %s32, %s16
      %p34 = scmp.ge.s32.totalorder %s33, 1
      %s35 = scalar_select %p34, 0, %s33
      %s36 = ssub.s32 %s16, %s35
      %s37 = ssub.s32 %s18, %s27
      %s38 = sor.u32 %s36, %s37
      %p39 = scmp.eq.s32.totalorder %s38, 0
      %s41 = sadd.s32 %s40, 1
      %s42 = scalar_select %p39, %s40, %s41
      %p45 = pneg %p39
      %p46 = scmp.eq.s32.totalorder %s9, 2
      %p47 = por %p45, %p46
      %p48 = scmp.ne.s32.totalorder %s40, %s43
      %p49 = scmp.eq.s32.totalorder %s9, 0
      %p50 = por %p48, %p49
      %p51 = scmp.ne.s32.totalorder %s40, %s43
      %p52 = scmp.eq.s32.totalorder %s14, 2
      %p53 = por %p51, %p52
      %p54 = scmp.ne.s32.totalorder %s43, %s44
      %p55 = scmp.eq.s32.totalorder %s14, 0
      %p56 = por %p54, %p55
      %p57 = scmp.ne.s32.totalorder %s43, %s44
      %p58 = scmp.eq.s32.totalorder %s15, 2
      %p59 = por %p57, %p58
      %p61 = scmp.ne.s32.totalorder %s44, %s60
      %p62 = scmp.eq.s32.totalorder %s15, 0
      %p63 = por %p61, %p62
      %s64 = ssub.s32 %s18, %s27
      %s65 = ssub.s32 %s17, %s31
      %s66 = sor.u32 %s64, %s65
      %p67 = scmp.eq.s32.totalorder %s66, 0
      %s69 = sadd.s32 %s68, 1
      %s70 = scalar_select %p67, %s68, %s69
      %p73 = pneg %p67
      %p74 = scmp.eq.s32.totalorder %s9, 2
      %p75 = por %p73, %p74
      %p76 = scmp.ne.s32.totalorder %s68, %s71
      %p77 = scmp.eq.s32.totalorder %s9, 0
      %p78 = por %p76, %p77
      %p79 = scmp.ne.s32.totalorder %s68, %s71
      %p80 = scmp.eq.s32.totalorder %s14, 2
      %p81 = por %p79, %p80
      %p82 = scmp.ne.s32.totalorder %s71, %s72
      %p83 = scmp.eq.s32.totalorder %s14, 0
      %p84 = por %p82, %p83
      %p85 = scmp.ne.s32.totalorder %s71, %s72
      %p86 = scmp.eq.s32.totalorder %s15, 2
      %p87 = por %p85, %p86
      %p89 = scmp.ne.s32.totalorder %s72, %s88
      %p90 = scmp.eq.s32.totalorder %s15, 0
      %p91 = por %p89, %p90
      %s92 = ssub.s32 %s17, %s31
      %p93 = scmp.eq.s32.totalorder %s92, 0
      %s95 = sadd.s32 %s94, 1
      %s96 = scalar_select %p93, %s94, %s95
      %p99 = pneg %p93
      %p100 = scmp.eq.s32.totalorder %s9, 2
      %p101 = por %p99, %p100
      %p102 = scmp.ne.s32.totalorder %s94, %s97
      %p103 = scmp.eq.s32.totalorder %s9, 0
      %p104 = por %p102, %p103
      %p105 = scmp.ne.s32.totalorder %s94, %s97
      %p106 = scmp.eq.s32.totalorder %s14, 2
      %p107 = por %p105, %p106
      %p108 = scmp.ne.s32.totalorder %s97, %s98
      %p109 = scmp.eq.s32.totalorder %s14, 0
      %p110 = por %p108, %p109
      %p111 = scmp.ne.s32.totalorder %s97, %s98
      %p112 = scmp.eq.s32.totalorder %s15, 2
      %p113 = por %p111, %p112
      %p115 = scmp.ne.s32.totalorder %s98, %s114
      %p116 = scmp.eq.s32.totalorder %s15, 0
      %p117 = por %p115, %p116
      %s118 = ssub.s32 %s16, %s35
      %s119 = ssub.s32 %s17, %s31
      %s120 = sor.u32 %s118, %s119
      %p121 = scmp.eq.s32.totalorder %s120, 0
      %s123 = sadd.s32 %s122, 1
      %s124 = scalar_select %p121, %s122, %s123
      %p127 = pneg %p121
      %p128 = scmp.eq.s32.totalorder %s9, 2
      %p129 = por %p127, %p128
      %p130 = scmp.ne.s32.totalorder %s122, %s125
      %p131 = scmp.eq.s32.totalorder %s9, 0
      %p132 = por %p130, %p131
      %p133 = scmp.ne.s32.totalorder %s122, %s125
      %p134 = scmp.eq.s32.totalorder %s14, 2
      %p135 = por %p133, %p134
      %p136 = scmp.ne.s32.totalorder %s125, %s126
      %p137 = scmp.eq.s32.totalorder %s14, 0
      %p138 = por %p136, %p137
      %p139 = scmp.ne.s32.totalorder %s125, %s126
      %p140 = scmp.eq.s32.totalorder %s15, 2
      %p141 = por %p139, %p140
      %p143 = scmp.ne.s32.totalorder %s126, %s142
      %p144 = scmp.eq.s32.totalorder %s15, 0
      %p145 = por %p143, %p144
      %p146 = scmp.le.s32.totalorder 1, %s9
      %p147 = scmp.lt.s32.totalorder %s9, 4
      %p148 = pnand %p146, %p147
      %p149 = pneg %p148
      // Predicated region
      $region9: #{attention_segmentation_forward.3} parent=5 // pred_check
        _
      $region10: #{attention_segmentation_forward.3} parent=5 // pred_check_branch
        %151 = sbr.rel (%p148) target = $region12
      $region11: #{attention_segmentation_forward.3} parent=5 // pred_region
        %s152 = ssub.s32 %s9, 1
        // Predicated region
        $region13: #{attention_segmentation_forward.3} parent=11 // pred_check
          %p153 = pneg %p110
        $region14: #{attention_segmentation_forward.3} parent=11 // pred_check_branch
          %155 = sbr.rel (%p153) target = $region16
        $region15: #{attention_segmentation_forward.3} parent=11 // pred_region
          %p156 = scmp.lt.s32.totalorder %s20, 0
          %s157 = scalar_select %p156, %s20, 0
          %s158 = scalar_lea.vmem %s2, %s157
        $region16: #{attention_segmentation_forward.3} parent=11 // pred_fallthru
          _
      $region12: #{attention_segmentation_forward.3} parent=5 // pred_fallthru
        _
      %p159 = scmp.lt.s32.totalorder %s9, 3
      // Predicated region
      $region17: #{attention_segmentation_forward.3} parent=5 // pred_check
        %p160 = pneg %p159
      $region18: #{attention_segmentation_forward.3} parent=5 // pred_check_branch
        %162 = sbr.rel (%p160) target = $region20
      $region19: #{attention_segmentation_forward.3} parent=5 // pred_region
        // Predicated region
        $region21: #{attention_segmentation_forward.3} parent=19 // pred_check
          %p163 = pneg %p50
        $region22: #{attention_segmentation_forward.3} parent=19 // pred_check_branch
          %165 = sbr.rel (%p163) target = $region24
        $region23: #{attention_segmentation_forward.3} parent=19 // pred_region
          %s166 = sand.u32 %s40, 1
          %s167 = sand.u32 %s40, 1
          %s168 = smul.addr %s167, 64
          %s169 = scalar_lea.vmem [#allocation3], %s168
          %s170 = smul.u32 2, %s16
          %s171 = smul.u32 8, %s18
          %s172 = smul.addr %s170, 24
          %s173 = sadd.s32 %s171, %s172
          %s174 = smul.addr %s173, 4
          %s175 = scalar_lea.vmem %s0, %s174
          // Predicated region
          $region25: #{attention_segmentation_forward.3} parent=23 // pred_check
            _
          $region26: #{attention_segmentation_forward.3} parent=23 // pred_check_branch
            %177 = sbr.rel (0) target = $region28
          $region27: #{attention_segmentation_forward.3} parent=23 // pred_region
            // Predicated region
            $region29: #{attention_segmentation_forward.3} parent=27 // pred_check
              _
            $region30: #{attention_segmentation_forward.3} parent=27 // pred_check_branch
              %179 = sbr.rel (0) target = $region32
            $region31: #{attention_segmentation_forward.3} parent=27 // pred_region
              loop: start=0, step=1, limit=1
              $region33: #{attention_segmentation_forward.3} parent=31 // loop_pre_header
                _
              $region34: #{attention_segmentation_forward.3} parent=31 // loop_header
                %s181 = sphi 0, %s185
                %p182 = scmp.ge.s32.totalorder %s181, 1
                %s186 = sphi %s175, %s175
                %s187 = sphi %s169, %s169
              $region35: #{attention_segmentation_forward.3} parent=31 // loop_header_branch
                %184 = sbr.rel (%p182) target = $region39
              $region36: #{attention_segmentation_forward.3} parent=31 // loop_body
                %v188 = vld [vmem:[%s186] sm:$0xff]
                %189 = vst [vmem:[%s187] sm:$0xff] %v188
                %v190 = vld [vmem:[%s186 + $0x8] sm:$0xff]
                %191 = vst [vmem:[%s187 + $0x8] sm:$0xff] %v190
                %v192 = vld [vmem:[%s186 + $0x10] sm:$0xff]
                %193 = vst [vmem:[%s187 + $0x10] sm:$0xff] %v192
                %v194 = vld [vmem:[%s186 + $0x18] sm:$0xff]
                %195 = vst [vmem:[%s187 + $0x18] sm:$0xff] %v194
                %v196 = vld [vmem:[%s186 + $0x60] sm:$0xff]
                %197 = vst [vmem:[%s187 + $0x20] sm:$0xff] %v196
                %v198 = vld [vmem:[%s186 + $0x68] sm:$0xff]
                %199 = vst [vmem:[%s187 + $0x28] sm:$0xff] %v198
                %v200 = vld [vmem:[%s186 + $0x70] sm:$0xff]
                %201 = vst [vmem:[%s187 + $0x30] sm:$0xff] %v200
                %v202 = vld [vmem:[%s186 + $0x78] sm:$0xff]
                %203 = vst [vmem:[%s187 + $0x38] sm:$0xff] %v202
              $region37: #{attention_segmentation_forward.3} parent=31 // loop_footer
                %s185 = sadd.s32 1, %s181
              $region38: #{attention_segmentation_forward.3} parent=31 // loop_footer_branch
                %180 = sbr.rel target = $region34
              $region39: #{attention_segmentation_forward.3} parent=31 // loop_exit
                _
            $region32: #{attention_segmentation_forward.3} parent=27 // pred_fallthru
              _
            // Predicated region
            $region40: #{attention_segmentation_forward.3} parent=27 // pred_check
              _
            $region41: #{attention_segmentation_forward.3} parent=27 // pred_check_branch
              %205 = sbr.rel target = $region43
            $region42: #{attention_segmentation_forward.3} parent=27 // pred_region
              _
            $region43: #{attention_segmentation_forward.3} parent=27 // pred_fallthru
              _
          $region28: #{attention_segmentation_forward.3} parent=23 // pred_fallthru
            _
          %206 = vnop
        $region24: #{attention_segmentation_forward.3} parent=19 // pred_fallthru
          _
        // Predicated region
        $region44: #{attention_segmentation_forward.3} parent=19 // pred_check
          %p207 = pneg %p78
        $region45: #{attention_segmentation_forward.3} parent=19 // pred_check_branch
          %209 = sbr.rel (%p207) target = $region47
        $region46: #{attention_segmentation_forward.3} parent=19 // pred_region
          %s210 = smul.u32 128, %s18
          %p211 = scmp.lt.s32.totalorder %s210, 383
          %s212 = scalar_select %p211, %s210, 383
          %p213 = scmp.lt.s32.totalorder %s17, 0
          %s214 = scalar_select %p213, %s17, 0
          %s215 = sadd.s32 %s214, %s212
          %s216 = smul.addr %s215, 4
          %s217 = scalar_lea.vmem %s1, %s216
          %s218 = smul.u32 128, %s18
        $region47: #{attention_segmentation_forward.3} parent=19 // pred_fallthru
          _
      $region20: #{attention_segmentation_forward.3} parent=5 // pred_fallthru
        _
      %p219 = scmp.le.s32.totalorder 1, %s9
      %p220 = scmp.lt.s32.totalorder %s9, 4
      %p221 = pnand %p219, %p220
      %p222 = pneg %p221
      // Predicated region
      $region48: #{attention_segmentation_forward.3} parent=5 // pred_check
        _
      $region49: #{attention_segmentation_forward.3} parent=5 // pred_check_branch
        %224 = sbr.rel (%p221) target = $region51
      $region50: #{attention_segmentation_forward.3} parent=5 // pred_region
        %s225 = ssub.s32 %s9, 1
        %s226 = sand.u32 %s43, 1
        %s227 = sand.u32 %s43, 1
        %s228 = smul.addr %s227, 64
        %s229 = scalar_lea.vmem [#allocation3], %s228
        // Predicated region
        $region52: #{attention_segmentation_forward.3} parent=50 // pred_check
          %p230 = pneg %p56
        $region53: #{attention_segmentation_forward.3} parent=50 // pred_check_branch
          %232 = sbr.rel (%p230) target = $region55
        $region54: #{attention_segmentation_forward.3} parent=50 // pred_region
          _
        $region55: #{attention_segmentation_forward.3} parent=50 // pred_fallthru
          _
        %s233 = sand.u32 %s43, 1
        %s234 = sand.u32 %s43, 1
        %s235 = smul.addr %s234, 64
        %s236 = scalar_lea.vmem [#allocation3], %s235
        %p237 = pneg %p56
        %p238 = pneg %p53
        %s239 = smul.u32 128, %s21
        %p240 = scmp.lt.s32.totalorder %s239, 383
        %s241 = scalar_select %p240, %s239, 383
        %p242 = scmp.lt.s32.totalorder %s20, 0
        %s243 = scalar_select %p242, %s20, 0
        %s244 = sadd.s32 %s243, %s241
        %s245 = smul.addr %s244, 4
        %s246 = scalar_lea.vmem %s1, %s245
        %p247 = pneg %p84
        %p248 = pneg %p81
        %p249 = scmp.lt.s32.totalorder %s20, 0
        %s250 = scalar_select %p249, %s20, 0
        %s251 = scalar_lea.vmem %s2, %s250
        %p252 = pneg %p110
        %p253 = pneg %p107
        %p254 = pneg %p138
        %p255 = pneg %p135
        %s256 = smul.u32 2, %s19
        %p257 = scmp.lt.s32.totalorder %s256, 1
        %s258 = scalar_select %p257, %s256, 1
        %p259 = scmp.lt.s32.totalorder %s20, 0
        %s260 = scalar_select %p259, %s20, 0
        %s261 = sadd.s32 %s260, %s258
        %s262 = smul.addr %s261, 8
        %s263 = scalar_lea.vmem %s3, %s262
        %s264 = smul.u32 2, %s19
        %s265 = smul.u32 8, %s21
        %s266 = smul.u32 128, %s21
        %p267 = scmp.lt.s32.totalorder %s266, 383
        %s268 = scalar_select %p267, %s266, 383
        %p269 = scmp.lt.s32.totalorder %s20, 0
        %s270 = scalar_select %p269, %s20, 0
        %s271 = sadd.s32 %s270, %s268
        %s272 = smul.addr %s271, 4
        %s273 = scalar_lea.vmem %s1, %s272
        %s274 = smul.u32 128, %s21
        %p275 = scmp.lt.s32.totalorder %s20, 0
        %s276 = scalar_select %p275, %s20, 0
        %s277 = scalar_lea.vmem %s2, %s276
        %s278 = smul.u32 2, %s19
        %p279 = scmp.lt.s32.totalorder %s278, 1
        %s280 = scalar_select %p279, %s278, 1
        %p281 = scmp.lt.s32.totalorder %s20, 0
        %s282 = scalar_select %p281, %s20, 0
        %s283 = sadd.s32 %s282, %s280
        %s284 = smul.addr %s283, 8
        %s285 = scalar_lea.vmem %s3, %s284
        %s286 = smul.u32 2, %s19
        %p287 = scmp.eq.s32.totalorder %s21, 0
        // Predicated region
        $region56: #{attention_segmentation_forward.3} parent=50 // pred_check
          %p288 = pneg %p287
        $region57: #{attention_segmentation_forward.3} parent=50 // pred_check_branch
          %290 = sbr.rel (%p288) target = $region59
        $region58: #{attention_segmentation_forward.3} parent=50 // pred_region
          %vm291 = vcmask 261120
          %292 = vst.msk [vmem:[#allocation2] sm:$0xff] %vm291, 0.0
          %293 = vst.msk [vmem:[#allocation2 + $0x8] sm:$0xff] %vm291, 0.0
        $region59: #{attention_segmentation_forward.3} parent=50 // pred_fallthru
          _
        %v294 = vld [vmem:[#allocation2] sm:$0xff]
        %v295 = vld [vmem:[#allocation2 + $0x8] sm:$0xff]
        %v296 = vld [vmem:[%s229] sm:$0xff]
        %v297 = vld [vmem:[%s229 + $0x8] sm:$0xff]
        %v298 = vld [vmem:[%s229 + $0x10] sm:$0xff]
        %v299 = vld [vmem:[%s229 + $0x18] sm:$0xff]
        %v300 = vld [vmem:[%s229 + $0x20] sm:$0xff]
        %v301 = vld [vmem:[%s229 + $0x28] sm:$0xff]
        %v302 = vld [vmem:[%s229 + $0x30] sm:$0xff]
        %v303 = vld [vmem:[%s229 + $0x38] sm:$0xff]
        %v304 = vld [vmem:[%s273] sm:$0xf]
        %v305 = vld [vmem:[%s273 + $0x4] sm:$0xf]
        %v306 = vld [vmem:[%s273 + $0x8] sm:$0xf]
        %v307 = vld [vmem:[%s273 + $0xc] sm:$0xf]
        %v308 = vld [vmem:[%s273 + $0x10] sm:$0xf]
        %v309 = vld [vmem:[%s273 + $0x14] sm:$0xf]
        %v310 = vld [vmem:[%s273 + $0x18] sm:$0xf]
        %v311 = vld [vmem:[%s273 + $0x1c] sm:$0xf]
        %v312 = vld [vmem:[%s273 + $0x20] sm:$0xf]
        %v313 = vld [vmem:[%s273 + $0x24] sm:$0xf]
        %v314 = vld [vmem:[%s273 + $0x28] sm:$0xf]
        %v315 = vld [vmem:[%s273 + $0x2c] sm:$0xf]
        %v316 = vld [vmem:[%s273 + $0x30] sm:$0xf]
        %v317 = vld [vmem:[%s273 + $0x34] sm:$0xf]
        %v318 = vld [vmem:[%s273 + $0x38] sm:$0xf]
        %v319 = vld [vmem:[%s273 + $0x3c] sm:$0xf]
        %v320 = vld [vmem:[%s273 + $0x40] sm:$0xf]
        %v321 = vld [vmem:[%s273 + $0x44] sm:$0xf]
        %v322 = vld [vmem:[%s273 + $0x48] sm:$0xf]
        %v323 = vld [vmem:[%s273 + $0x4c] sm:$0xf]
        %v324 = vld [vmem:[%s273 + $0x50] sm:$0xf]
        %v325 = vld [vmem:[%s273 + $0x54] sm:$0xf]
        %v326 = vld [vmem:[%s273 + $0x58] sm:$0xf]
        %v327 = vld [vmem:[%s273 + $0x5c] sm:$0xf]
        %v328 = vld [vmem:[%s273 + $0x60] sm:$0xf]
        %v329 = vld [vmem:[%s273 + $0x64] sm:$0xf]
        %v330 = vld [vmem:[%s273 + $0x68] sm:$0xf]
        %v331 = vld [vmem:[%s273 + $0x6c] sm:$0xf]
        %v332 = vld [vmem:[%s273 + $0x70] sm:$0xf]
        %v333 = vld [vmem:[%s273 + $0x74] sm:$0xf]
        %v334 = vld [vmem:[%s273 + $0x78] sm:$0xf]
        %v335 = vld [vmem:[%s273 + $0x7c] sm:$0xf]
        %v336 = vld [vmem:[%s273 + $0x80] sm:$0xf]
        %v337 = vld [vmem:[%s273 + $0x84] sm:$0xf]
        %v338 = vld [vmem:[%s273 + $0x88] sm:$0xf]
        %v339 = vld [vmem:[%s273 + $0x8c] sm:$0xf]
        %v340 = vld [vmem:[%s273 + $0x90] sm:$0xf]
        %v341 = vld [vmem:[%s273 + $0x94] sm:$0xf]
        %v342 = vld [vmem:[%s273 + $0x98] sm:$0xf]
        %v343 = vld [vmem:[%s273 + $0x9c] sm:$0xf]
        %v344 = vld [vmem:[%s273 + $0xa0] sm:$0xf]
        %v345 = vld [vmem:[%s273 + $0xa4] sm:$0xf]
        %v346 = vld [vmem:[%s273 + $0xa8] sm:$0xf]
        %v347 = vld [vmem:[%s273 + $0xac] sm:$0xf]
        %v348 = vld [vmem:[%s273 + $0xb0] sm:$0xf]
        %v349 = vld [vmem:[%s273 + $0xb4] sm:$0xf]
        %v350 = vld [vmem:[%s273 + $0xb8] sm:$0xf]
        %v351 = vld [vmem:[%s273 + $0xbc] sm:$0xf]
        %v352 = vld [vmem:[%s273 + $0xc0] sm:$0xf]
        %v353 = vld [vmem:[%s273 + $0xc4] sm:$0xf]
        %v354 = vld [vmem:[%s273 + $0xc8] sm:$0xf]
        %v355 = vld [vmem:[%s273 + $0xcc] sm:$0xf]
        %v356 = vld [vmem:[%s273 + $0xd0] sm:$0xf]
        %v357 = vld [vmem:[%s273 + $0xd4] sm:$0xf]
        %v358 = vld [vmem:[%s273 + $0xd8] sm:$0xf]
        %v359 = vld [vmem:[%s273 + $0xdc] sm:$0xf]
        %v360 = vld [vmem:[%s273 + $0xe0] sm:$0xf]
        %v361 = vld [vmem:[%s273 + $0xe4] sm:$0xf]
        %v362 = vld [vmem:[%s273 + $0xe8] sm:$0xf]
        %v363 = vld [vmem:[%s273 + $0xec] sm:$0xf]
        %v364 = vld [vmem:[%s273 + $0xf0] sm:$0xf]
        %v365 = vld [vmem:[%s273 + $0xf4] sm:$0xf]
        %v366 = vld [vmem:[%s273 + $0xf8] sm:$0xf]
        %v367 = vld [vmem:[%s273 + $0xfc] sm:$0xf]
        %v368 = vld [vmem:[%s273 + $0x100] sm:$0xf]
        %v369 = vld [vmem:[%s273 + $0x104] sm:$0xf]
        %v370 = vld [vmem:[%s273 + $0x108] sm:$0xf]
        %v371 = vld [vmem:[%s273 + $0x10c] sm:$0xf]
        %v372 = vld [vmem:[%s273 + $0x110] sm:$0xf]
        %v373 = vld [vmem:[%s273 + $0x114] sm:$0xf]
        %v374 = vld [vmem:[%s273 + $0x118] sm:$0xf]
        %v375 = vld [vmem:[%s273 + $0x11c] sm:$0xf]
        %v376 = vld [vmem:[%s273 + $0x120] sm:$0xf]
        %v377 = vld [vmem:[%s273 + $0x124] sm:$0xf]
        %v378 = vld [vmem:[%s273 + $0x128] sm:$0xf]
        %v379 = vld [vmem:[%s273 + $0x12c] sm:$0xf]
        %v380 = vld [vmem:[%s273 + $0x130] sm:$0xf]
        %v381 = vld [vmem:[%s273 + $0x134] sm:$0xf]
        %v382 = vld [vmem:[%s273 + $0x138] sm:$0xf]
        %v383 = vld [vmem:[%s273 + $0x13c] sm:$0xf]
        %v384 = vld [vmem:[%s273 + $0x140] sm:$0xf]
        %v385 = vld [vmem:[%s273 + $0x144] sm:$0xf]
        %v386 = vld [vmem:[%s273 + $0x148] sm:$0xf]
        %v387 = vld [vmem:[%s273 + $0x14c] sm:$0xf]
        %v388 = vld [vmem:[%s273 + $0x150] sm:$0xf]
        %v389 = vld [vmem:[%s273 + $0x154] sm:$0xf]
        %v390 = vld [vmem:[%s273 + $0x158] sm:$0xf]
        %v391 = vld [vmem:[%s273 + $0x15c] sm:$0xf]
        %v392 = vld [vmem:[%s273 + $0x160] sm:$0xf]
        %v393 = vld [vmem:[%s273 + $0x164] sm:$0xf]
        %v394 = vld [vmem:[%s273 + $0x168] sm:$0xf]
        %v395 = vld [vmem:[%s273 + $0x16c] sm:$0xf]
        %v396 = vld [vmem:[%s273 + $0x170] sm:$0xf]
        %v397 = vld [vmem:[%s273 + $0x174] sm:$0xf]
        %v398 = vld [vmem:[%s273 + $0x178] sm:$0xf]
        %v399 = vld [vmem:[%s273 + $0x17c] sm:$0xf]
        %v400 = vld [vmem:[%s273 + $0x180] sm:$0xf]
        %v401 = vld [vmem:[%s273 + $0x184] sm:$0xf]
        %v402 = vld [vmem:[%s273 + $0x188] sm:$0xf]
        %v403 = vld [vmem:[%s273 + $0x18c] sm:$0xf]
        %v404 = vld [vmem:[%s273 + $0x190] sm:$0xf]
        %v405 = vld [vmem:[%s273 + $0x194] sm:$0xf]
        %v406 = vld [vmem:[%s273 + $0x198] sm:$0xf]
        %v407 = vld [vmem:[%s273 + $0x19c] sm:$0xf]
        %v408 = vld [vmem:[%s273 + $0x1a0] sm:$0xf]
        %v409 = vld [vmem:[%s273 + $0x1a4] sm:$0xf]
        %v410 = vld [vmem:[%s273 + $0x1a8] sm:$0xf]
        %v411 = vld [vmem:[%s273 + $0x1ac] sm:$0xf]
        %v412 = vld [vmem:[%s273 + $0x1b0] sm:$0xf]
        %v413 = vld [vmem:[%s273 + $0x1b4] sm:$0xf]
        %v414 = vld [vmem:[%s273 + $0x1b8] sm:$0xf]
        %v415 = vld [vmem:[%s273 + $0x1bc] sm:$0xf]
        %v416 = vld [vmem:[%s273 + $0x1c0] sm:$0xf]
        %v417 = vld [vmem:[%s273 + $0x1c4] sm:$0xf]
        %v418 = vld [vmem:[%s273 + $0x1c8] sm:$0xf]
        %v419 = vld [vmem:[%s273 + $0x1cc] sm:$0xf]
        %v420 = vld [vmem:[%s273 + $0x1d0] sm:$0xf]
        %v421 = vld [vmem:[%s273 + $0x1d4] sm:$0xf]
        %v422 = vld [vmem:[%s273 + $0x1d8] sm:$0xf]
        %v423 = vld [vmem:[%s273 + $0x1dc] sm:$0xf]
        %v424 = vld [vmem:[%s273 + $0x1e0] sm:$0xf]
        %v425 = vld [vmem:[%s273 + $0x1e4] sm:$0xf]
        %v426 = vld [vmem:[%s273 + $0x1e8] sm:$0xf]
        %v427 = vld [vmem:[%s273 + $0x1ec] sm:$0xf]
        %v428 = vld [vmem:[%s273 + $0x1f0] sm:$0xf]
        %v429 = vld [vmem:[%s273 + $0x1f4] sm:$0xf]
        %v430 = vld [vmem:[%s273 + $0x1f8] sm:$0xf]
        %v431 = vld [vmem:[%s273 + $0x1fc] sm:$0xf]
        %v440 = vunpack.c.l.b16 %v296
        %v441 = vunpack.c.h.b16 %v296
        %v442 = vunpack.c.l.b16 %v297
        %v443 = vunpack.c.h.b16 %v297
        %v444 = vunpack.c.l.b16 %v298
        %v445 = vunpack.c.h.b16 %v298
        %v446 = vunpack.c.l.b16 %v299
        %v447 = vunpack.c.h.b16 %v299
        %v448 = vunpack.c.l.b16 %v300
        %v449 = vunpack.c.h.b16 %v300
        %v450 = vunpack.c.l.b16 %v301
        %v451 = vunpack.c.h.b16 %v301
        %v452 = vunpack.c.l.b16 %v302
        %v453 = vunpack.c.h.b16 %v302
        %v454 = vunpack.c.l.b16 %v303
        %v455 = vunpack.c.h.b16 %v303
        %v456 = vpack.c.b16 %v448, %v440
        %v457 = vpack.c.b16 %v449, %v441
        %v458 = vpack.c.b16 %v450, %v442
        %v459 = vpack.c.b16 %v451, %v443
        %v460 = vpack.c.b16 %v452, %v444
        %v461 = vpack.c.b16 %v453, %v445
        %v462 = vpack.c.b16 %v454, %v446
        %v463 = vpack.c.b16 %v455, %v447
        %v600 = vunpack.c.l.b16 %v304
        %v601 = vunpack.c.l.b16 %v305
        %v602 = vunpack.c.l.b16 %v306
        %v603 = vunpack.c.l.b16 %v307
        %v604 = vunpack.c.l.b16 %v308
        %v605 = vunpack.c.l.b16 %v309
        %v606 = vunpack.c.l.b16 %v310
        %v607 = vunpack.c.l.b16 %v311
        %v608 = vunpack.c.l.b16 %v312
        %v609 = vunpack.c.l.b16 %v313
        %v610 = vunpack.c.l.b16 %v314
        %v611 = vunpack.c.l.b16 %v315
        %v612 = vunpack.c.l.b16 %v316
        %v613 = vunpack.c.l.b16 %v317
        %v614 = vunpack.c.l.b16 %v318
        %v615 = vunpack.c.l.b16 %v319
        %v616 = vunpack.c.l.b16 %v320
        %v617 = vunpack.c.l.b16 %v321
        %v618 = vunpack.c.l.b16 %v322
        %v619 = vunpack.c.l.b16 %v323
        %v620 = vunpack.c.l.b16 %v324
        %v621 = vunpack.c.l.b16 %v325
        %v622 = vunpack.c.l.b16 %v326
        %v623 = vunpack.c.l.b16 %v327
        %v624 = vunpack.c.l.b16 %v328
        %v625 = vunpack.c.l.b16 %v329
        %v626 = vunpack.c.l.b16 %v330
        %v627 = vunpack.c.l.b16 %v331
        %v628 = vunpack.c.l.b16 %v332
        %v629 = vunpack.c.l.b16 %v333
        %v630 = vunpack.c.l.b16 %v334
        %v631 = vunpack.c.l.b16 %v335
        %v632 = vunpack.c.l.b16 %v336
        %v633 = vunpack.c.l.b16 %v337
        %v634 = vunpack.c.l.b16 %v338
        %v635 = vunpack.c.l.b16 %v339
        %v636 = vunpack.c.l.b16 %v340
        %v637 = vunpack.c.l.b16 %v341
        %v638 = vunpack.c.l.b16 %v342
        %v639 = vunpack.c.l.b16 %v343
        %v640 = vunpack.c.l.b16 %v344
        %v641 = vunpack.c.l.b16 %v345
        %v642 = vunpack.c.l.b16 %v346
        %v643 = vunpack.c.l.b16 %v347
        %v644 = vunpack.c.l.b16 %v348
        %v645 = vunpack.c.l.b16 %v349
        %v646 = vunpack.c.l.b16 %v350
        %v647 = vunpack.c.l.b16 %v351
        %v648 = vunpack.c.l.b16 %v352
        %v649 = vunpack.c.l.b16 %v353
        %v650 = vunpack.c.l.b16 %v354
        %v651 = vunpack.c.l.b16 %v355
        %v652 = vunpack.c.l.b16 %v356
        %v653 = vunpack.c.l.b16 %v357
        %v654 = vunpack.c.l.b16 %v358
        %v655 = vunpack.c.l.b16 %v359
        %v656 = vunpack.c.l.b16 %v360
        %v657 = vunpack.c.l.b16 %v361
        %v658 = vunpack.c.l.b16 %v362
        %v659 = vunpack.c.l.b16 %v363
        %v660 = vunpack.c.l.b16 %v364
        %v661 = vunpack.c.l.b16 %v365
        %v662 = vunpack.c.l.b16 %v366
        %v663 = vunpack.c.l.b16 %v367
        %v664 = vunpack.c.l.b16 %v368
        %v665 = vunpack.c.l.b16 %v369
        %v666 = vunpack.c.l.b16 %v370
        %v667 = vunpack.c.l.b16 %v371
        %v668 = vunpack.c.l.b16 %v372
        %v669 = vunpack.c.l.b16 %v373
        %v670 = vunpack.c.l.b16 %v374
        %v671 = vunpack.c.l.b16 %v375
        %v672 = vunpack.c.l.b16 %v376
        %v673 = vunpack.c.l.b16 %v377
        %v674 = vunpack.c.l.b16 %v378
        %v675 = vunpack.c.l.b16 %v379
        %v676 = vunpack.c.l.b16 %v380
        %v677 = vunpack.c.l.b16 %v381
        %v678 = vunpack.c.l.b16 %v382
        %v679 = vunpack.c.l.b16 %v383
        %v680 = vunpack.c.l.b16 %v384
        %v681 = vunpack.c.l.b16 %v385
        %v682 = vunpack.c.l.b16 %v386
        %v683 = vunpack.c.l.b16 %v387
        %v684 = vunpack.c.l.b16 %v388
        %v685 = vunpack.c.l.b16 %v389
        %v686 = vunpack.c.l.b16 %v390
        %v687 = vunpack.c.l.b16 %v391
        %v688 = vunpack.c.l.b16 %v392
        %v689 = vunpack.c.l.b16 %v393
        %v690 = vunpack.c.l.b16 %v394
        %v691 = vunpack.c.l.b16 %v395
        %v692 = vunpack.c.l.b16 %v396
        %v693 = vunpack.c.l.b16 %v397
        %v694 = vunpack.c.l.b16 %v398
        %v695 = vunpack.c.l.b16 %v399
        %v696 = vunpack.c.l.b16 %v400
        %v697 = vunpack.c.l.b16 %v401
        %v698 = vunpack.c.l.b16 %v402
        %v699 = vunpack.c.l.b16 %v403
        %v700 = vunpack.c.l.b16 %v404
        %v701 = vunpack.c.l.b16 %v405
        %v702 = vunpack.c.l.b16 %v406
        %v703 = vunpack.c.l.b16 %v407
        %v704 = vunpack.c.l.b16 %v408
        %v705 = vunpack.c.l.b16 %v409
        %v706 = vunpack.c.l.b16 %v410
        %v707 = vunpack.c.l.b16 %v411
        %v708 = vunpack.c.l.b16 %v412
        %v709 = vunpack.c.l.b16 %v413
        %v710 = vunpack.c.l.b16 %v414
        %v711 = vunpack.c.l.b16 %v415
        %v712 = vunpack.c.l.b16 %v416
        %v713 = vunpack.c.l.b16 %v417
        %v714 = vunpack.c.l.b16 %v418
        %v715 = vunpack.c.l.b16 %v419
        %v716 = vunpack.c.l.b16 %v420
        %v717 = vunpack.c.l.b16 %v421
        %v718 = vunpack.c.l.b16 %v422
        %v719 = vunpack.c.l.b16 %v423
        %v720 = vunpack.c.l.b16 %v424
        %v721 = vunpack.c.l.b16 %v425
        %v722 = vunpack.c.l.b16 %v426
        %v723 = vunpack.c.l.b16 %v427
        %v724 = vunpack.c.l.b16 %v428
        %v725 = vunpack.c.l.b16 %v429
        %v726 = vunpack.c.l.b16 %v430
        %v727 = vunpack.c.l.b16 %v431
        %v728 = vpack.c.b16 %v601, %v600
        %v729 = vpack.c.b16 %v603, %v602
        %v730 = vpack.c.b16 %v605, %v604
        %v731 = vpack.c.b16 %v607, %v606
        %v732 = vpack.c.b16 %v609, %v608
        %v733 = vpack.c.b16 %v611, %v610
        %v734 = vpack.c.b16 %v613, %v612
        %v735 = vpack.c.b16 %v615, %v614
        %v736 = vpack.c.b16 %v617, %v616
        %v737 = vpack.c.b16 %v619, %v618
        %v738 = vpack.c.b16 %v621, %v620
        %v739 = vpack.c.b16 %v623, %v622
        %v740 = vpack.c.b16 %v625, %v624
        %v741 = vpack.c.b16 %v627, %v626
        %v742 = vpack.c.b16 %v629, %v628
        %v743 = vpack.c.b16 %v631, %v630
        %v744 = vpack.c.b16 %v633, %v632
        %v745 = vpack.c.b16 %v635, %v634
        %v746 = vpack.c.b16 %v637, %v636
        %v747 = vpack.c.b16 %v639, %v638
        %v748 = vpack.c.b16 %v641, %v640
        %v749 = vpack.c.b16 %v643, %v642
        %v750 = vpack.c.b16 %v645, %v644
        %v751 = vpack.c.b16 %v647, %v646
        %v752 = vpack.c.b16 %v649, %v648
        %v753 = vpack.c.b16 %v651, %v650
        %v754 = vpack.c.b16 %v653, %v652
        %v755 = vpack.c.b16 %v655, %v654
        %v756 = vpack.c.b16 %v657, %v656
        %v757 = vpack.c.b16 %v659, %v658
        %v758 = vpack.c.b16 %v661, %v660
        %v759 = vpack.c.b16 %v663, %v662
        %v760 = vpack.c.b16 %v665, %v664
        %v761 = vpack.c.b16 %v667, %v666
        %v762 = vpack.c.b16 %v669, %v668
        %v763 = vpack.c.b16 %v671, %v670
        %v764 = vpack.c.b16 %v673, %v672
        %v765 = vpack.c.b16 %v675, %v674
        %v766 = vpack.c.b16 %v677, %v676
        %v767 = vpack.c.b16 %v679, %v678
        %v768 = vpack.c.b16 %v681, %v680
        %v769 = vpack.c.b16 %v683, %v682
        %v770 = vpack.c.b16 %v685, %v684
        %v771 = vpack.c.b16 %v687, %v686
        %v772 = vpack.c.b16 %v689, %v688
        %v773 = vpack.c.b16 %v691, %v690
        %v774 = vpack.c.b16 %v693, %v692
        %v775 = vpack.c.b16 %v695, %v694
        %v776 = vpack.c.b16 %v697, %v696
        %v777 = vpack.c.b16 %v699, %v698
        %v778 = vpack.c.b16 %v701, %v700
        %v779 = vpack.c.b16 %v703, %v702
        %v780 = vpack.c.b16 %v705, %v704
        %v781 = vpack.c.b16 %v707, %v706
        %v782 = vpack.c.b16 %v709, %v708
        %v783 = vpack.c.b16 %v711, %v710
        %v784 = vpack.c.b16 %v713, %v712
        %v785 = vpack.c.b16 %v715, %v714
        %v786 = vpack.c.b16 %v717, %v716
        %v787 = vpack.c.b16 %v719, %v718
        %v788 = vpack.c.b16 %v721, %v720
        %v789 = vpack.c.b16 %v723, %v722
        %v790 = vpack.c.b16 %v725, %v724
        %v791 = vpack.c.b16 %v727, %v726
        %856 = vmatpush.bf16.msra.mxu0 %v735
        %857 = vmatpush.bf16.msra.mxu0 %v734
        %858 = vmatpush.bf16.msra.mxu0 %v733
        %859 = vmatpush.bf16.msra.mxu0 %v732
        %860 = vmatpush.bf16.msra.mxu0 %v731
        %861 = vmatpush.bf16.msra.mxu0 %v730
        %862 = vmatpush.bf16.msra.mxu0 %v729
        %863 = vmatpush.bf16.msra.mxu0 %v728
        %864 = vmatmul.bf16.gmra.mxu0 %v456
        %v865 = vpop.f32.mrf.mxu0
        %v866 = vadd.f32 0.0, %v865
        %v867 = vpop.f32.mrf.mxu0
        %v868 = vadd.f32 0.0, %v867
        %869 = vdwg.mxu0
        %870 = vmatpush.bf16.msra.mxu0 %v743
        %871 = vmatpush.bf16.msra.mxu0 %v742
        %872 = vmatpush.bf16.msra.mxu0 %v741
        %873 = vmatpush.bf16.msra.mxu0 %v740
        %874 = vmatpush.bf16.msra.mxu0 %v739
        %875 = vmatpush.bf16.msra.mxu0 %v738
        %876 = vmatpush.bf16.msra.mxu0 %v737
        %877 = vmatpush.bf16.msra.mxu0 %v736
        %878 = vmatmul.bf16.gmra.mxu0 %v457
        %v879 = vpop.f32.mrf.mxu0
        %v880 = vadd.f32 %v866, %v879
        %v881 = vpop.f32.mrf.mxu0
        %v882 = vadd.f32 %v868, %v881
        %883 = vdwg.mxu0
        %884 = vmatpush.bf16.msra.mxu0 %v751
        %885 = vmatpush.bf16.msra.mxu0 %v750
        %886 = vmatpush.bf16.msra.mxu0 %v749
        %887 = vmatpush.bf16.msra.mxu0 %v748
        %888 = vmatpush.bf16.msra.mxu0 %v747
        %889 = vmatpush.bf16.msra.mxu0 %v746
        %890 = vmatpush.bf16.msra.mxu0 %v745
        %891 = vmatpush.bf16.msra.mxu0 %v744
        %892 = vmatmul.bf16.gmra.mxu0 %v458
        %v893 = vpop.f32.mrf.mxu0
        %v894 = vadd.f32 %v880, %v893
        %v895 = vpop.f32.mrf.mxu0
        %v896 = vadd.f32 %v882, %v895
        %897 = vdwg.mxu0
        %898 = vmatpush.bf16.msra.mxu0 %v759
        %899 = vmatpush.bf16.msra.mxu0 %v758
        %900 = vmatpush.bf16.msra.mxu0 %v757
        %901 = vmatpush.bf16.msra.mxu0 %v756
        %902 = vmatpush.bf16.msra.mxu0 %v755
        %903 = vmatpush.bf16.msra.mxu0 %v754
        %904 = vmatpush.bf16.msra.mxu0 %v753
        %905 = vmatpush.bf16.msra.mxu0 %v752
        %906 = vmatmul.bf16.gmra.mxu0 %v459
        %v907 = vpop.f32.mrf.mxu0
        %v908 = vadd.f32 %v894, %v907
        %v909 = vpop.f32.mrf.mxu0
        %v910 = vadd.f32 %v896, %v909
        %911 = vdwg.mxu0
        %912 = vmatpush.bf16.msra.mxu0 %v767
        %913 = vmatpush.bf16.msra.mxu0 %v766
        %914 = vmatpush.bf16.msra.mxu0 %v765
        %915 = vmatpush.bf16.msra.mxu0 %v764
        %916 = vmatpush.bf16.msra.mxu0 %v763
        %917 = vmatpush.bf16.msra.mxu0 %v762
        %918 = vmatpush.bf16.msra.mxu0 %v761
        %919 = vmatpush.bf16.msra.mxu0 %v760
        %920 = vmatmul.bf16.gmra.mxu0 %v460
        %v921 = vpop.f32.mrf.mxu0
        %v922 = vadd.f32 %v908, %v921
        %v923 = vpop.f32.mrf.mxu0
        %v924 = vadd.f32 %v910, %v923
        %925 = vdwg.mxu0
        %926 = vmatpush.bf16.msra.mxu0 %v775
        %927 = vmatpush.bf16.msra.mxu0 %v774
        %928 = vmatpush.bf16.msra.mxu0 %v773
        %929 = vmatpush.bf16.msra.mxu0 %v772
        %930 = vmatpush.bf16.msra.mxu0 %v771
        %931 = vmatpush.bf16.msra.mxu0 %v770
        %932 = vmatpush.bf16.msra.mxu0 %v769
        %933 = vmatpush.bf16.msra.mxu0 %v768
        %934 = vmatmul.bf16.gmra.mxu0 %v461
        %v935 = vpop.f32.mrf.mxu0
        %v936 = vadd.f32 %v922, %v935
        %v937 = vpop.f32.mrf.mxu0
        %v938 = vadd.f32 %v924, %v937
        %939 = vdwg.mxu0
        %940 = vmatpush.bf16.msra.mxu0 %v783
        %941 = vmatpush.bf16.msra.mxu0 %v782
        %942 = vmatpush.bf16.msra.mxu0 %v781
        %943 = vmatpush.bf16.msra.mxu0 %v780
        %944 = vmatpush.bf16.msra.mxu0 %v779
        %945 = vmatpush.bf16.msra.mxu0 %v778
        %946 = vmatpush.bf16.msra.mxu0 %v777
        %947 = vmatpush.bf16.msra.mxu0 %v776
        %948 = vmatmul.bf16.gmra.mxu0 %v462
        %v949 = vpop.f32.mrf.mxu0
        %v950 = vadd.f32 %v936, %v949
        %v951 = vpop.f32.mrf.mxu0
        %v952 = vadd.f32 %v938, %v951
        %953 = vdwg.mxu0
        %954 = vmatpush.bf16.msra.mxu0 %v791
        %955 = vmatpush.bf16.msra.mxu0 %v790
        %956 = vmatpush.bf16.msra.mxu0 %v789
        %957 = vmatpush.bf16.msra.mxu0 %v788
        %958 = vmatpush.bf16.msra.mxu0 %v787
        %959 = vmatpush.bf16.msra.mxu0 %v786
        %960 = vmatpush.bf16.msra.mxu0 %v785
        %961 = vmatpush.bf16.msra.mxu0 %v784
        %962 = vmatmul.bf16.gmra.mxu0 %v463
        %v963 = vpop.f32.mrf.mxu0
        %v964 = vadd.f32 %v950, %v963
        %v965 = vpop.f32.mrf.mxu0
        %v966 = vadd.f32 %v952, %v965
        %967 = vdwg.mxu0
        %v968 = vadd.f32 %v294, %v964
        %v969 = vadd.f32 %v295, %v966
        %vm970 = vcmask 261120
        %971 = vst.msk [vmem:[#allocation2] sm:$0xff] %vm970, %v968
        %972 = vst.msk [vmem:[#allocation2 + $0x8] sm:$0xff] %vm970, %v969
        %p973 = scmp.eq.s32.totalorder %s21, 2
        // Predicated region
        $region60: #{attention_segmentation_forward.3} parent=50 // pred_check
          %p974 = pneg %p973
        $region61: #{attention_segmentation_forward.3} parent=50 // pred_check_branch
          %976 = sbr.rel (%p974) target = $region63
        $region62: #{attention_segmentation_forward.3} parent=50 // pred_region
          %v977 = vld [vmem:[#allocation2] sm:$0xff]
          %v978 = vld [vmem:[#allocation2 + $0x8] sm:$0xff]
          %v979 = vld [vmem:[%s277] sm:$0x1]
          %v981 = vperm.slane %v979, 0
          %v983 = vadd.f32 %v977, %v981
          %v984 = vadd.f32 %v978, %v981
          %v985 = vmax.f32 %v983, 0.0
          %v986 = vmax.f32 %v984, 0.0
          %987 = vst.msk [vmem:[%s285] sm:$0xff] %vm970, %v985
          %988 = vst.msk [vmem:[%s285 + $0x8] sm:$0xff] %vm970, %v986
        $region63: #{attention_segmentation_forward.3} parent=50 // pred_fallthru
          _
        %s989 = smul.u32 2, %s19
        %p990 = scmp.lt.s32.totalorder %s989, 1
        %s991 = scalar_select %p990, %s989, 1
        %p992 = scmp.lt.s32.totalorder %s20, 0
        %s993 = scalar_select %p992, %s20, 0
        %s994 = sadd.s32 %s993, %s991
        %s995 = smul.addr %s994, 8
        %s996 = scalar_lea.vmem %s3, %s995
        // Predicated region
        $region64: #{attention_segmentation_forward.3} parent=50 // pred_check
          %p997 = pneg %p135
        $region65: #{attention_segmentation_forward.3} parent=50 // pred_check_branch
          %999 = sbr.rel (%p997) target = $region67
        $region66: #{attention_segmentation_forward.3} parent=50 // pred_region
          %s1000 = smul.u32 2, %s19
        $region67: #{attention_segmentation_forward.3} parent=50 // pred_fallthru
          _
        // Predicated region
        $region68: #{attention_segmentation_forward.3} parent=50 // pred_check
          %p1001 = pneg %p135
        $region69: #{attention_segmentation_forward.3} parent=50 // pred_check_branch
          %1003 = sbr.rel (%p1001) target = $region71
        $region70: #{attention_segmentation_forward.3} parent=50 // pred_region
          %s1004 = smul.u32 2, %s19
          %p1005 = scmp.lt.s32.totalorder %s1004, 1
          %s1006 = scalar_select %p1005, %s1004, 1
          %p1007 = scmp.lt.s32.totalorder %s20, 0
          %s1008 = scalar_select %p1007, %s20, 0
          %s1009 = sadd.s32 %s1008, %s1006
          %s1010 = smul.addr %s1009, 8
          %s1011 = scalar_lea.vmem %s3, %s1010
        $region71: #{attention_segmentation_forward.3} parent=50 // pred_fallthru
          _
      $region51: #{attention_segmentation_forward.3} parent=5 // pred_fallthru
        _
      %p1012 = scmp.le.s32.totalorder 2, %s9
      // Predicated region
      $region72: #{attention_segmentation_forward.3} parent=5 // pred_check
        %p1013 = pneg %p1012
      $region73: #{attention_segmentation_forward.3} parent=5 // pred_check_branch
        %1015 = sbr.rel (%p1013) target = $region75
      $region74: #{attention_segmentation_forward.3} parent=5 // pred_region
        %s1016 = ssub.s32 %s9, 2
      $region75: #{attention_segmentation_forward.3} parent=5 // pred_fallthru
        _
    $region6: #{attention_segmentation_forward.3} parent=1 // loop_footer
      %s13 = sadd.s32 1, %s9
    $region7: #{attention_segmentation_forward.3} parent=1 // loop_footer_branch
      %8 = sbr.rel target = $region3
    $region8: #{attention_segmentation_forward.3} parent=1 // loop_exit
      _

// kernel: attention_segmentation_forward.5
$region0: #{attention_segmentation_forward.5}
  #allocation0 [shape = 'u32[]', space=smem, size = 0x4, offset = 0x4, fixed_abs, tag = 'smem constant byte address 0x4 - core index']
  #allocation1 [shape = 'u32[72,128]{1,0:T(1,128)}', space=vmem, size = 0x9000, scoped, tag = 'internal scratch']
  %s0 = inlined_call_operand.vmem [shape: f32[2,15,2,2], index: 0, kind: input, shape index: {}]
  %s1 = inlined_call_operand.vmem [shape: f32[64,2], index: 1, kind: input, shape index: {}]
  %s2 = inlined_call_operand.vmem [shape: f32[2,64], index: 2, kind: input, shape index: {}]
  %s3 = inlined_call_operand.vmem [shape: f32[2,15,64,64], index: 3, kind: output, shape index: {}]
  %s4 = sld [smem:[#allocation0]]
  $region79: #{attention_segmentation_forward.5} parent=0
    _
  %s6 = ssub.s32 1, %s4
  %s7 = scalar_select 0, %s6, %s4
  $region1: #{attention_segmentation_forward.5} parent=0
    #allocation2 [shape = 'u8[491520]{0}', space=vmem, size = 0x78000, scoped, tag = 'output window, operand 0']
    loop: start=0, step=1, limit=6
    $region2: #{attention_segmentation_forward.5} parent=1 // loop_pre_header
      _
    $region3: #{attention_segmentation_forward.5} parent=1 // loop_header
      %s9 = sphi 0, %s13
      %p10 = scmp.ge.s32.totalorder %s9, 6
      %s16 = sphi 0, %s28
      %s17 = sphi 0, %s24
      %s18 = sphi 0, %s16
      %s19 = sphi 0, %s17
      %s20 = sphi 0, %s18
      %s21 = sphi 0, %s19
      %s31 = sphi 0, %s33
      %s34 = sphi 0, %s31
      %s35 = sphi 0, %s34
      %s51 = sphi 0, %s35
      %s57 = sphi 0, %s59
      %s60 = sphi 0, %s57
      %s61 = sphi 0, %s60
      %s77 = sphi 0, %s61
      %s81 = sphi 0, %s81
      %s83 = sphi 0, %s81
      %s84 = sphi 0, %s83
      %s98 = sphi 0, %s84
      %s106 = sphi 0, %s108
      %s109 = sphi 0, %s106
      %s110 = sphi 0, %s109
      %s126 = sphi 0, %s110
    $region4: #{attention_segmentation_forward.5} parent=1 // loop_header_branch
      %12 = sbr.rel (%p10) target = $region8
    $region5: #{attention_segmentation_forward.5} parent=1 // loop_body
      %s14 = ssub.s32 %s9, 1
      %s15 = ssub.s32 %s9, 2
      %s22 = sadd.s32 1, %s17
      %p23 = scmp.ge.s32.totalorder %s22, 2
      %s24 = scalar_select %p23, 0, %s22
      %s25 = sadd.s32 1, %s16
      %s26 = scalar_select %p23, %s25, %s16
      %p27 = scmp.ge.s32.totalorder %s26, 2
      %s28 = scalar_select %p27, 0, %s26
      %s29 = ssub.s32 %s16, %s28
      %p30 = scmp.eq.s32.totalorder %s29, 0
      %s32 = sadd.s32 %s31, 1
      %s33 = scalar_select %p30, %s31, %s32
      %p36 = pneg %p30
      %p37 = scmp.eq.s32.totalorder %s9, 3
      %p38 = por %p36, %p37
      %p39 = scmp.ne.s32.totalorder %s31, %s34
      %p40 = scmp.eq.s32.totalorder %s9, 0
      %p41 = por %p39, %p40
      %p42 = scmp.ne.s32.totalorder %s31, %s34
      %p43 = scmp.eq.s32.totalorder %s14, 3
      %p44 = por %p42, %p43
      %p45 = scmp.ne.s32.totalorder %s34, %s35
      %p46 = scmp.eq.s32.totalorder %s14, 0
      %p47 = por %p45, %p46
      %p48 = scmp.ne.s32.totalorder %s34, %s35
      %p49 = scmp.eq.s32.totalorder %s15, 3
      %p50 = por %p48, %p49
      %p52 = scmp.ne.s32.totalorder %s35, %s51
      %p53 = scmp.eq.s32.totalorder %s15, 0
      %p54 = por %p52, %p53
      %s55 = ssub.s32 %s17, %s24
      %p56 = scmp.eq.s32.totalorder %s55, 0
      %s58 = sadd.s32 %s57, 1
      %s59 = scalar_select %p56, %s57, %s58
      %p62 = pneg %p56
      %p63 = scmp.eq.s32.totalorder %s9, 3
      %p64 = por %p62, %p63
      %p65 = scmp.ne.s32.totalorder %s57, %s60
      %p66 = scmp.eq.s32.totalorder %s9, 0
      %p67 = por %p65, %p66
      %p68 = scmp.ne.s32.totalorder %s57, %s60
      %p69 = scmp.eq.s32.totalorder %s14, 3
      %p70 = por %p68, %p69
      %p71 = scmp.ne.s32.totalorder %s60, %s61
      %p72 = scmp.eq.s32.totalorder %s14, 0
      %p73 = por %p71, %p72
      %p74 = scmp.ne.s32.totalorder %s60, %s61
      %p75 = scmp.eq.s32.totalorder %s15, 3
      %p76 = por %p74, %p75
      %p78 = scmp.ne.s32.totalorder %s61, %s77
      %p79 = scmp.eq.s32.totalorder %s15, 0
      %p80 = por %p78, %p79
      %s82 = sadd.s32 %s81, 1
      %p85 = scmp.eq.s32.totalorder %s9, 3
      %p86 = scmp.ne.s32.totalorder %s81, %s83
      %p87 = scmp.eq.s32.totalorder %s9, 0
      %p88 = por %p86, %p87
      %p89 = scmp.ne.s32.totalorder %s81, %s83
      %p90 = scmp.eq.s32.totalorder %s14, 3
      %p91 = por %p89, %p90
      %p92 = scmp.ne.s32.totalorder %s83, %s84
      %p93 = scmp.eq.s32.totalorder %s14, 0
      %p94 = por %p92, %p93
      %p95 = scmp.ne.s32.totalorder %s83, %s84
      %p96 = scmp.eq.s32.totalorder %s15, 3
      %p97 = por %p95, %p96
      %p99 = scmp.ne.s32.totalorder %s84, %s98
      %p100 = scmp.eq.s32.totalorder %s15, 0
      %p101 = por %p99, %p100
      %s102 = ssub.s32 %s16, %s28
      %s103 = ssub.s32 %s17, %s24
      %s104 = sor.u32 %s102, %s103
      %p105 = scmp.eq.s32.totalorder %s104, 0
      %s107 = sadd.s32 %s106, 1
      %s108 = scalar_select %p105, %s106, %s107
      %p111 = pneg %p105
      %p112 = scmp.eq.s32.totalorder %s9, 3
      %p113 = por %p111, %p112
      %p114 = scmp.ne.s32.totalorder %s106, %s109
      %p115 = scmp.eq.s32.totalorder %s9, 0
      %p116 = por %p114, %p115
      %p117 = scmp.ne.s32.totalorder %s106, %s109
      %p118 = scmp.eq.s32.totalorder %s14, 3
      %p119 = por %p117, %p118
      %p120 = scmp.ne.s32.totalorder %s109, %s110
      %p121 = scmp.eq.s32.totalorder %s14, 0
      %p122 = por %p120, %p121
      %p123 = scmp.ne.s32.totalorder %s109, %s110
      %p124 = scmp.eq.s32.totalorder %s15, 3
      %p125 = por %p123, %p124
      %p127 = scmp.ne.s32.totalorder %s110, %s126
      %p128 = scmp.eq.s32.totalorder %s15, 0
      %p129 = por %p127, %p128
      %p130 = scmp.le.s32.totalorder 1, %s9
      %p131 = scmp.lt.s32.totalorder %s9, 5
      %p132 = pnand %p130, %p131
      %p133 = pneg %p132
      // Predicated region
      $region9: #{attention_segmentation_forward.5} parent=5 // pred_check
        _
      $region10: #{attention_segmentation_forward.5} parent=5 // pred_check_branch
        %135 = sbr.rel (%p132) target = $region12
      $region11: #{attention_segmentation_forward.5} parent=5 // pred_region
        %s136 = ssub.s32 %s9, 1
        // Predicated region
        $region13: #{attention_segmentation_forward.5} parent=11 // pred_check
          %p137 = pneg %p94
        $region14: #{attention_segmentation_forward.5} parent=11 // pred_check_branch
          %139 = sbr.rel (%p137) target = $region16
        $region15: #{attention_segmentation_forward.5} parent=11 // pred_region
          _
        $region16: #{attention_segmentation_forward.5} parent=11 // pred_fallthru
          _
      $region12: #{attention_segmentation_forward.5} parent=5 // pred_fallthru
        _
      %p140 = scmp.lt.s32.totalorder %s9, 4
      // Predicated region
      $region17: #{attention_segmentation_forward.5} parent=5 // pred_check
        %p141 = pneg %p140
      $region18: #{attention_segmentation_forward.5} parent=5 // pred_check_branch
        %143 = sbr.rel (%p141) target = $region20
      $region19: #{attention_segmentation_forward.5} parent=5 // pred_region
        // Predicated region
        $region21: #{attention_segmentation_forward.5} parent=19 // pred_check
          %p144 = pneg %p41
        $region22: #{attention_segmentation_forward.5} parent=19 // pred_check_branch
          %146 = sbr.rel (%p144) target = $region24
        $region23: #{attention_segmentation_forward.5} parent=19 // pred_region
          %p147 = scmp.lt.s32.totalorder %s16, 1
          %s148 = scalar_select %p147, %s16, 1
          %s149 = smul.addr %s148, 15
          %s150 = smul.addr %s149, 2
          %s151 = scalar_lea.vmem %s0, %s150
        $region24: #{attention_segmentation_forward.5} parent=19 // pred_fallthru
          _
        // Predicated region
        $region25: #{attention_segmentation_forward.5} parent=19 // pred_check
          %p152 = pneg %p67
        $region26: #{attention_segmentation_forward.5} parent=19 // pred_check_branch
          %154 = sbr.rel (%p152) target = $region28
        $region27: #{attention_segmentation_forward.5} parent=19 // pred_region
          %s155 = smul.u32 4, %s17
          %p156 = scmp.lt.s32.totalorder %s155, 7
          %s157 = scalar_select %p156, %s155, 7
          %s158 = smul.addr %s157, 8
          %s159 = scalar_lea.vmem %s1, %s158
          %s160 = smul.u32 4, %s17
        $region28: #{attention_segmentation_forward.5} parent=19 // pred_fallthru
          _
      $region20: #{attention_segmentation_forward.5} parent=5 // pred_fallthru
        _
      %p161 = scmp.le.s32.totalorder 1, %s9
      %p162 = scmp.lt.s32.totalorder %s9, 5
      %p163 = pnand %p161, %p162
      %p164 = pneg %p163
      // Predicated region
      $region29: #{attention_segmentation_forward.5} parent=5 // pred_check
        _
      $region30: #{attention_segmentation_forward.5} parent=5 // pred_check_branch
        %166 = sbr.rel (%p163) target = $region32
      $region31: #{attention_segmentation_forward.5} parent=5 // pred_region
        %s167 = ssub.s32 %s9, 1
        %p168 = scmp.lt.s32.totalorder %s18, 1
        %s169 = scalar_select %p168, %s18, 1
        %s170 = smul.addr %s169, 15
        %s171 = smul.addr %s170, 2
        %s172 = scalar_lea.vmem %s0, %s171
        %p173 = pneg %p47
        %p174 = pneg %p44
        %s175 = smul.u32 4, %s19
        %p176 = scmp.lt.s32.totalorder %s175, 7
        %s177 = scalar_select %p176, %s175, 7
        %s178 = smul.addr %s177, 8
        %s179 = scalar_lea.vmem %s1, %s178
        %p180 = pneg %p73
        %p181 = pneg %p70
        %p182 = pneg %p94
        %p183 = pneg %p91
        %p184 = pneg %p122
        %p185 = pneg %p119
        %s186 = sand.u32 %s109, 1
        %s187 = sand.u32 %s109, 1
        %s188 = smul.addr %s187, 480
        %s189 = scalar_lea.vmem [#allocation2], %s188
        %p190 = scmp.lt.s32.totalorder %s18, 1
        %s191 = scalar_select %p190, %s18, 1
        %s192 = smul.addr %s191, 15
        %s193 = smul.addr %s192, 2
        %s194 = scalar_lea.vmem %s0, %s193
        %s195 = smul.u32 4, %s19
        %p196 = scmp.lt.s32.totalorder %s195, 7
        %s197 = scalar_select %p196, %s195, 7
        %s198 = smul.addr %s197, 8
        %s199 = scalar_lea.vmem %s1, %s198
        %s200 = smul.u32 4, %s19
        %s201 = smul.u32 4, %s19
        %v202 = vld [vmem:[%s194] sm:$0x3]
        %v203 = vld [vmem:[%s194 + $0x2] sm:$0x3]
        %v204 = vld [vmem:[%s194 + $0x4] sm:$0x3]
        %v205 = vld [vmem:[%s194 + $0x6] sm:$0x3]
        %v206 = vld [vmem:[%s194 + $0x8] sm:$0x3]
        %v207 = vld [vmem:[%s194 + $0xa] sm:$0x3]
        %v208 = vld [vmem:[%s194 + $0xc] sm:$0x3]
        %v209 = vld [vmem:[%s194 + $0xe] sm:$0x3]
        %v210 = vld [vmem:[%s194 + $0x10] sm:$0x3]
        %v211 = vld [vmem:[%s194 + $0x12] sm:$0x3]
        %v212 = vld [vmem:[%s194 + $0x14] sm:$0x3]
        %v213 = vld [vmem:[%s194 + $0x16] sm:$0x3]
        %v214 = vld [vmem:[%s194 + $0x18] sm:$0x3]
        %v215 = vld [vmem:[%s194 + $0x1a] sm:$0x3]
        %v216 = vld [vmem:[%s194 + $0x1c] sm:$0x3]
        %v217 = vld [vmem:[%s2] sm:$0x3]
        %233 = vst [vmem:[#allocation1] ss:$4 sm:$0xff] %v202
        %s234 = scalar_lea.vmem [#allocation1], 1
        %235 = vst [vmem:[%s234] ss:$4 sm:$0xff] %v203
        %s236 = scalar_lea.vmem [#allocation1], 2
        %237 = vst [vmem:[%s236] ss:$4 sm:$0xff] %v204
        %s238 = scalar_lea.vmem [#allocation1], 3
        %239 = vst [vmem:[%s238] ss:$4 sm:$0xff] %v205
        %s240 = scalar_lea.vmem [#allocation1], 32
        %241 = vst [vmem:[%s240] ss:$4 sm:$0xff] %v206
        %s242 = scalar_lea.vmem [#allocation1], 33
        %243 = vst [vmem:[%s242] ss:$4 sm:$0xff] %v207
        %s244 = scalar_lea.vmem [#allocation1], 34
        %245 = vst [vmem:[%s244] ss:$4 sm:$0xff] %v208
        %s246 = scalar_lea.vmem [#allocation1], 35
        %247 = vst [vmem:[%s246] ss:$4 sm:$0xff] %v209
        %v248 = vld.sshfl [vmem:[#allocation1] sm:$0xff pattern:$0x73625140]
        %v249 = vld.sshfl [vmem:[#allocation1 + $0x20] sm:$0xff pattern:$0x73625140]
        %250 = vst [vmem:[#allocation1] ss:$4 sm:$0xff] %v210
        %251 = vst [vmem:[%s234] ss:$4 sm:$0xff] %v211
        %252 = vst [vmem:[%s236] ss:$4 sm:$0xff] %v212
        %253 = vst [vmem:[%s238] ss:$4 sm:$0xff] %v213
        %254 = vst [vmem:[%s240] ss:$4 sm:$0xff] %v214
        %255 = vst [vmem:[%s242] ss:$4 sm:$0xff] %v215
        %256 = vst [vmem:[%s244] ss:$4 sm:$0xff] %v216
        %v257 = vld.sshfl [vmem:[#allocation1] sm:$0xff pattern:$0x73625140]
        %v258 = vld.sshfl [vmem:[#allocation1 + $0x20] sm:$0xff pattern:$0x73625140]
        %vm259 = vcmask 15360
        %v260 = vsel %vm259, %v248, 0
        %v262 = vsel %vm259, %v249, 0
        %v264 = vsel %vm259, %v257, 0
        %v266 = vsel %vm259, %v258, 0
        %vm268 = vcmask 1041408
        %v270 = vsel %vm268, %v217, 0
        %272 = vmatpush.msra.mxu0 0.0
        %273 = vmatpush.msra.mxu0 0.0
        %274 = vmatpush.msra.mxu0 0.0
        %275 = vmatpush.msra.mxu0 0.0
        %276 = vmatpush.msra.mxu0 0.0
        %277 = vmatpush.msra.mxu0 0.0
        %278 = vmatpush.msra.mxu0 0.0
        %279 = vmatpush.msra.mxu0 0.0
        %280 = vmatpush.msra.mxu0 0.0
        %281 = vmatpush.msra.mxu0 0.0
        %282 = vmatpush.msra.mxu0 0.0
        %283 = vmatpush.msra.mxu0 0.0
        %284 = vmatpush.msra.mxu0 0.0
        %285 = vmatpush.msra.mxu0 0.0
        %286 = vmatpush.msra.mxu0 0.0
        %287 = vmatpush.msra.mxu0 %v270
        %288 = vmatmul.f32.gmra.mxu0 %v260
        %v289 = vpop.f32.mrf.mxu0
        %v290 = vadd.f32 0.0, %v289
        %291 = vmatmul.f32.gmra.mxu0 %v262
        %v292 = vpop.f32.mrf.mxu0
        %v293 = vadd.f32 0.0, %v292
        %294 = vmatmul.f32.gmra.mxu0 %v264
        %v295 = vpop.f32.mrf.mxu0
        %v296 = vadd.f32 0.0, %v295
        %297 = vmatmul.f32.gmra.mxu0 %v266
        %v298 = vpop.f32.mrf.mxu0
        %v299 = vadd.f32 0.0, %v298
        %300 = vdwg.mxu0
        %v305 = vrot.slane %v290, 2
        %v306 = vrot.slane %v290, 4
        %v307 = vrot.slane %v290, 6
        %v308 = vrot.slane %v293, 2
        %v309 = vrot.slane %v293, 4
        %v310 = vrot.slane %v293, 6
        %v311 = vrot.slane %v296, 2
        %v312 = vrot.slane %v296, 4
        %v313 = vrot.slane %v296, 6
        %v314 = vrot.slane %v299, 2
        %v315 = vrot.slane %v299, 4
        %v316 = vld [vmem:[%s199] sm:$0xff]
        %v317 = vld [vmem:[%s199 + $0x8] sm:$0xff]
        %v318 = vld [vmem:[%s199 + $0x10] sm:$0xff]
        %v319 = vld [vmem:[%s199 + $0x18] sm:$0xff]
        %v321 = vsel %vm259, %v316, 0
        %v324 = vsel %vm259, %v317, 0
        %v327 = vsel %vm259, %v318, 0
        %v330 = vsel %vm259, %v319, 0
        %v332 = vsel %vm268, %v290, 0
        %334 = vmatpush.msra.mxu0 0.0
        %335 = vmatpush.msra.mxu0 0.0
        %336 = vmatpush.msra.mxu0 0.0
        %337 = vmatpush.msra.mxu0 0.0
        %338 = vmatpush.msra.mxu0 0.0
        %339 = vmatpush.msra.mxu0 0.0
        %340 = vmatpush.msra.mxu0 0.0
        %341 = vmatpush.msra.mxu0 0.0
        %342 = vmatpush.msra.mxu0 0.0
        %343 = vmatpush.msra.mxu0 0.0
        %344 = vmatpush.msra.mxu0 0.0
        %345 = vmatpush.msra.mxu0 0.0
        %346 = vmatpush.msra.mxu0 0.0
        %347 = vmatpush.msra.mxu0 0.0
        %348 = vmatpush.msra.mxu0 0.0
        %349 = vmatpush.msra.mxu0 %v332
        %350 = vmatmul.f32.gmra.mxu0 %v321
        %v351 = vpop.f32.mrf.mxu0
        %v352 = vadd.f32 0.0, %v351
        %353 = vmatmul.f32.gmra.mxu0 %v324
        %v354 = vpop.f32.mrf.mxu0
        %v355 = vadd.f32 0.0, %v354
        %356 = vmatmul.f32.gmra.mxu0 %v327
        %v357 = vpop.f32.mrf.mxu0
        %v358 = vadd.f32 0.0, %v357
        %359 = vmatmul.f32.gmra.mxu0 %v330
        %v360 = vpop.f32.mrf.mxu0
        %v361 = vadd.f32 0.0, %v360
        %362 = vdwg.mxu0
        %v363 = vsel %vm268, %v305, 0
        %365 = vmatpush.msra.mxu0 0.0
        %366 = vmatpush.msra.mxu0 0.0
        %367 = vmatpush.msra.mxu0 0.0
        %368 = vmatpush.msra.mxu0 0.0
        %369 = vmatpush.msra.mxu0 0.0
        %370 = vmatpush.msra.mxu0 0.0
        %371 = vmatpush.msra.mxu0 0.0
        %372 = vmatpush.msra.mxu0 0.0
        %373 = vmatpush.msra.mxu0 0.0
        %374 = vmatpush.msra.mxu0 0.0
        %375 = vmatpush.msra.mxu0 0.0
        %376 = vmatpush.msra.mxu0 0.0
        %377 = vmatpush.msra.mxu0 0.0
        %378 = vmatpush.msra.mxu0 0.0
        %379 = vmatpush.msra.mxu0 0.0
        %380 = vmatpush.msra.mxu0 %v363
        %381 = vmatmul.f32.gmra.mxu0 %v321
        %v382 = vpop.f32.mrf.mxu0
        %v383 = vadd.f32 0.0, %v382
        %384 = vmatmul.f32.gmra.mxu0 %v324
        %v385 = vpop.f32.mrf.mxu0
        %v386 = vadd.f32 0.0, %v385
        %387 = vmatmul.f32.gmra.mxu0 %v327
        %v388 = vpop.f32.mrf.mxu0
        %v389 = vadd.f32 0.0, %v388
        %390 = vmatmul.f32.gmra.mxu0 %v330
        %v391 = vpop.f32.mrf.mxu0
        %v392 = vadd.f32 0.0, %v391
        %393 = vdwg.mxu0
        %v394 = vsel %vm268, %v306, 0
        %396 = vmatpush.msra.mxu0 0.0
        %397 = vmatpush.msra.mxu0 0.0
        %398 = vmatpush.msra.mxu0 0.0
        %399 = vmatpush.msra.mxu0 0.0
        %400 = vmatpush.msra.mxu0 0.0
        %401 = vmatpush.msra.mxu0 0.0
        %402 = vmatpush.msra.mxu0 0.0
        %403 = vmatpush.msra.mxu0 0.0
        %404 = vmatpush.msra.mxu0 0.0
        %405 = vmatpush.msra.mxu0 0.0
        %406 = vmatpush.msra.mxu0 0.0
        %407 = vmatpush.msra.mxu0 0.0
        %408 = vmatpush.msra.mxu0 0.0
        %409 = vmatpush.msra.mxu0 0.0
        %410 = vmatpush.msra.mxu0 0.0
        %411 = vmatpush.msra.mxu0 %v394
        %412 = vmatmul.f32.gmra.mxu0 %v321
        %v413 = vpop.f32.mrf.mxu0
        %v414 = vadd.f32 0.0, %v413
        %415 = vmatmul.f32.gmra.mxu0 %v324
        %v416 = vpop.f32.mrf.mxu0
        %v417 = vadd.f32 0.0, %v416
        %418 = vmatmul.f32.gmra.mxu0 %v327
        %v419 = vpop.f32.mrf.mxu0
        %v420 = vadd.f32 0.0, %v419
        %421 = vmatmul.f32.gmra.mxu0 %v330
        %v422 = vpop.f32.mrf.mxu0
        %v423 = vadd.f32 0.0, %v422
        %424 = vdwg.mxu0
        %v425 = vsel %vm268, %v307, 0
        %427 = vmatpush.msra.mxu0 0.0
        %428 = vmatpush.msra.mxu0 0.0
        %429 = vmatpush.msra.mxu0 0.0
        %430 = vmatpush.msra.mxu0 0.0
        %431 = vmatpush.msra.mxu0 0.0
        %432 = vmatpush.msra.mxu0 0.0
        %433 = vmatpush.msra.mxu0 0.0
        %434 = vmatpush.msra.mxu0 0.0
        %435 = vmatpush.msra.mxu0 0.0
        %436 = vmatpush.msra.mxu0 0.0
        %437 = vmatpush.msra.mxu0 0.0
        %438 = vmatpush.msra.mxu0 0.0
        %439 = vmatpush.msra.mxu0 0.0
        %440 = vmatpush.msra.mxu0 0.0
        %441 = vmatpush.msra.mxu0 0.0
        %442 = vmatpush.msra.mxu0 %v425
        %443 = vmatmul.f32.gmra.mxu0 %v321
        %v444 = vpop.f32.mrf.mxu0
        %v445 = vadd.f32 0.0, %v444
        %446 = vmatmul.f32.gmra.mxu0 %v324
        %v447 = vpop.f32.mrf.mxu0
        %v448 = vadd.f32 0.0, %v447
        %449 = vmatmul.f32.gmra.mxu0 %v327
        %v450 = vpop.f32.mrf.mxu0
        %v451 = vadd.f32 0.0, %v450
        %452 = vmatmul.f32.gmra.mxu0 %v330
        %v453 = vpop.f32.mrf.mxu0
        %v454 = vadd.f32 0.0, %v453
        %455 = vdwg.mxu0
        %v456 = vsel %vm268, %v293, 0
        %458 = vmatpush.msra.mxu0 0.0
        %459 = vmatpush.msra.mxu0 0.0
        %460 = vmatpush.msra.mxu0 0.0
        %461 = vmatpush.msra.mxu0 0.0
        %462 = vmatpush.msra.mxu0 0.0
        %463 = vmatpush.msra.mxu0 0.0
        %464 = vmatpush.msra.mxu0 0.0
        %465 = vmatpush.msra.mxu0 0.0
        %466 = vmatpush.msra.mxu0 0.0
        %467 = vmatpush.msra.mxu0 0.0
        %468 = vmatpush.msra.mxu0 0.0
        %469 = vmatpush.msra.mxu0 0.0
        %470 = vmatpush.msra.mxu0 0.0
        %471 = vmatpush.msra.mxu0 0.0
        %472 = vmatpush.msra.mxu0 0.0
        %473 = vmatpush.msra.mxu0 %v456
        %474 = vmatmul.f32.gmra.mxu0 %v321
        %v475 = vpop.f32.mrf.mxu0
        %v476 = vadd.f32 0.0, %v475
        %477 = vmatmul.f32.gmra.mxu0 %v324
        %v478 = vpop.f32.mrf.mxu0
        %v479 = vadd.f32 0.0, %v478
        %480 = vmatmul.f32.gmra.mxu0 %v327
        %v481 = vpop.f32.mrf.mxu0
        %v482 = vadd.f32 0.0, %v481
        %483 = vmatmul.f32.gmra.mxu0 %v330
        %v484 = vpop.f32.mrf.mxu0
        %v485 = vadd.f32 0.0, %v484
        %486 = vdwg.mxu0
        %v487 = vsel %vm268, %v308, 0
        %489 = vmatpush.msra.mxu0 0.0
        %490 = vmatpush.msra.mxu0 0.0
        %491 = vmatpush.msra.mxu0 0.0
        %492 = vmatpush.msra.mxu0 0.0
        %493 = vmatpush.msra.mxu0 0.0
        %494 = vmatpush.msra.mxu0 0.0
        %495 = vmatpush.msra.mxu0 0.0
        %496 = vmatpush.msra.mxu0 0.0
        %497 = vmatpush.msra.mxu0 0.0
        %498 = vmatpush.msra.mxu0 0.0
        %499 = vmatpush.msra.mxu0 0.0
        %500 = vmatpush.msra.mxu0 0.0
        %501 = vmatpush.msra.mxu0 0.0
        %502 = vmatpush.msra.mxu0 0.0
        %503 = vmatpush.msra.mxu0 0.0
        %504 = vmatpush.msra.mxu0 %v487
        %505 = vmatmul.f32.gmra.mxu0 %v321
        %v506 = vpop.f32.mrf.mxu0
        %v507 = vadd.f32 0.0, %v506
        %508 = vmatmul.f32.gmra.mxu0 %v324
        %v509 = vpop.f32.mrf.mxu0
        %v510 = vadd.f32 0.0, %v509
        %511 = vmatmul.f32.gmra.mxu0 %v327
        %v512 = vpop.f32.mrf.mxu0
        %v513 = vadd.f32 0.0, %v512
        %514 = vmatmul.f32.gmra.mxu0 %v330
        %v515 = vpop.f32.mrf.mxu0
        %v516 = vadd.f32 0.0, %v515
        %517 = vdwg.mxu0
        %v518 = vsel %vm268, %v309, 0
        %520 = vmatpush.msra.mxu0 0.0
        %521 = vmatpush.msra.mxu0 0.0
        %522 = vmatpush.msra.mxu0 0.0
        %523 = vmatpush.msra.mxu0 0.0
        %524 = vmatpush.msra.mxu0 0.0
        %525 = vmatpush.msra.mxu0 0.0
        %526 = vmatpush.msra.mxu0 0.0
        %527 = vmatpush.msra.mxu0 0.0
        %528 = vmatpush.msra.mxu0 0.0
        %529 = vmatpush.msra.mxu0 0.0
        %530 = vmatpush.msra.mxu0 0.0
        %531 = vmatpush.msra.mxu0 0.0
        %532 = vmatpush.msra.mxu0 0.0
        %533 = vmatpush.msra.mxu0 0.0
        %534 = vmatpush.msra.mxu0 0.0
        %535 = vmatpush.msra.mxu0 %v518
        %536 = vmatmul.f32.gmra.mxu0 %v321
        %v537 = vpop.f32.mrf.mxu0
        %v538 = vadd.f32 0.0, %v537
        %539 = vmatmul.f32.gmra.mxu0 %v324
        %v540 = vpop.f32.mrf.mxu0
        %v541 = vadd.f32 0.0, %v540
        %542 = vmatmul.f32.gmra.mxu0 %v327
        %v543 = vpop.f32.mrf.mxu0
        %v544 = vadd.f32 0.0, %v543
        %545 = vmatmul.f32.gmra.mxu0 %v330
        %v546 = vpop.f32.mrf.mxu0
        %v547 = vadd.f32 0.0, %v546
        %548 = vdwg.mxu0
        %v549 = vsel %vm268, %v310, 0
        %551 = vmatpush.msra.mxu0 0.0
        %552 = vmatpush.msra.mxu0 0.0
        %553 = vmatpush.msra.mxu0 0.0
        %554 = vmatpush.msra.mxu0 0.0
        %555 = vmatpush.msra.mxu0 0.0
        %556 = vmatpush.msra.mxu0 0.0
        %557 = vmatpush.msra.mxu0 0.0
        %558 = vmatpush.msra.mxu0 0.0
        %559 = vmatpush.msra.mxu0 0.0
        %560 = vmatpush.msra.mxu0 0.0
        %561 = vmatpush.msra.mxu0 0.0
        %562 = vmatpush.msra.mxu0 0.0
        %563 = vmatpush.msra.mxu0 0.0
        %564 = vmatpush.msra.mxu0 0.0
        %565 = vmatpush.msra.mxu0 0.0
        %566 = vmatpush.msra.mxu0 %v549
        %567 = vmatmul.f32.gmra.mxu0 %v321
        %v568 = vpop.f32.mrf.mxu0
        %v569 = vadd.f32 0.0, %v568
        %570 = vmatmul.f32.gmra.mxu0 %v324
        %v571 = vpop.f32.mrf.mxu0
        %v572 = vadd.f32 0.0, %v571
        %573 = vmatmul.f32.gmra.mxu0 %v327
        %v574 = vpop.f32.mrf.mxu0
        %v575 = vadd.f32 0.0, %v574
        %576 = vmatmul.f32.gmra.mxu0 %v330
        %v577 = vpop.f32.mrf.mxu0
        %v578 = vadd.f32 0.0, %v577
        %579 = vdwg.mxu0
        %v580 = vsel %vm268, %v296, 0
        %582 = vmatpush.msra.mxu0 0.0
        %583 = vmatpush.msra.mxu0 0.0
        %584 = vmatpush.msra.mxu0 0.0
        %585 = vmatpush.msra.mxu0 0.0
        %586 = vmatpush.msra.mxu0 0.0
        %587 = vmatpush.msra.mxu0 0.0
        %588 = vmatpush.msra.mxu0 0.0
        %589 = vmatpush.msra.mxu0 0.0
        %590 = vmatpush.msra.mxu0 0.0
        %591 = vmatpush.msra.mxu0 0.0
        %592 = vmatpush.msra.mxu0 0.0
        %593 = vmatpush.msra.mxu0 0.0
        %594 = vmatpush.msra.mxu0 0.0
        %595 = vmatpush.msra.mxu0 0.0
        %596 = vmatpush.msra.mxu0 0.0
        %597 = vmatpush.msra.mxu0 %v580
        %598 = vmatmul.f32.gmra.mxu0 %v321
        %v599 = vpop.f32.mrf.mxu0
        %v600 = vadd.f32 0.0, %v599
        %601 = vmatmul.f32.gmra.mxu0 %v324
        %v602 = vpop.f32.mrf.mxu0
        %v603 = vadd.f32 0.0, %v602
        %604 = vmatmul.f32.gmra.mxu0 %v327
        %v605 = vpop.f32.mrf.mxu0
        %v606 = vadd.f32 0.0, %v605
        %607 = vmatmul.f32.gmra.mxu0 %v330
        %v608 = vpop.f32.mrf.mxu0
        %v609 = vadd.f32 0.0, %v608
        %610 = vdwg.mxu0
        %v611 = vsel %vm268, %v311, 0
        %613 = vmatpush.msra.mxu0 0.0
        %614 = vmatpush.msra.mxu0 0.0
        %615 = vmatpush.msra.mxu0 0.0
        %616 = vmatpush.msra.mxu0 0.0
        %617 = vmatpush.msra.mxu0 0.0
        %618 = vmatpush.msra.mxu0 0.0
        %619 = vmatpush.msra.mxu0 0.0
        %620 = vmatpush.msra.mxu0 0.0
        %621 = vmatpush.msra.mxu0 0.0
        %622 = vmatpush.msra.mxu0 0.0
        %623 = vmatpush.msra.mxu0 0.0
        %624 = vmatpush.msra.mxu0 0.0
        %625 = vmatpush.msra.mxu0 0.0
        %626 = vmatpush.msra.mxu0 0.0
        %627 = vmatpush.msra.mxu0 0.0
        %628 = vmatpush.msra.mxu0 %v611
        %629 = vmatmul.f32.gmra.mxu0 %v321
        %v630 = vpop.f32.mrf.mxu0
        %v631 = vadd.f32 0.0, %v630
        %632 = vmatmul.f32.gmra.mxu0 %v324
        %v633 = vpop.f32.mrf.mxu0
        %v634 = vadd.f32 0.0, %v633
        %635 = vmatmul.f32.gmra.mxu0 %v327
        %v636 = vpop.f32.mrf.mxu0
        %v637 = vadd.f32 0.0, %v636
        %638 = vmatmul.f32.gmra.mxu0 %v330
        %v639 = vpop.f32.mrf.mxu0
        %v640 = vadd.f32 0.0, %v639
        %641 = vdwg.mxu0
        %v642 = vsel %vm268, %v312, 0
        %644 = vmatpush.msra.mxu0 0.0
        %645 = vmatpush.msra.mxu0 0.0
        %646 = vmatpush.msra.mxu0 0.0
        %647 = vmatpush.msra.mxu0 0.0
        %648 = vmatpush.msra.mxu0 0.0
        %649 = vmatpush.msra.mxu0 0.0
        %650 = vmatpush.msra.mxu0 0.0
        %651 = vmatpush.msra.mxu0 0.0
        %652 = vmatpush.msra.mxu0 0.0
        %653 = vmatpush.msra.mxu0 0.0
        %654 = vmatpush.msra.mxu0 0.0
        %655 = vmatpush.msra.mxu0 0.0
        %656 = vmatpush.msra.mxu0 0.0
        %657 = vmatpush.msra.mxu0 0.0
        %658 = vmatpush.msra.mxu0 0.0
        %659 = vmatpush.msra.mxu0 %v642
        %660 = vmatmul.f32.gmra.mxu0 %v321
        %v661 = vpop.f32.mrf.mxu0
        %v662 = vadd.f32 0.0, %v661
        %663 = vmatmul.f32.gmra.mxu0 %v324
        %v664 = vpop.f32.mrf.mxu0
        %v665 = vadd.f32 0.0, %v664
        %666 = vmatmul.f32.gmra.mxu0 %v327
        %v667 = vpop.f32.mrf.mxu0
        %v668 = vadd.f32 0.0, %v667
        %669 = vmatmul.f32.gmra.mxu0 %v330
        %v670 = vpop.f32.mrf.mxu0
        %v671 = vadd.f32 0.0, %v670
        %672 = vdwg.mxu0
        %v673 = vsel %vm268, %v313, 0
        %675 = vmatpush.msra.mxu0 0.0
        %676 = vmatpush.msra.mxu0 0.0
        %677 = vmatpush.msra.mxu0 0.0
        %678 = vmatpush.msra.mxu0 0.0
        %679 = vmatpush.msra.mxu0 0.0
        %680 = vmatpush.msra.mxu0 0.0
        %681 = vmatpush.msra.mxu0 0.0
        %682 = vmatpush.msra.mxu0 0.0
        %683 = vmatpush.msra.mxu0 0.0
        %684 = vmatpush.msra.mxu0 0.0
        %685 = vmatpush.msra.mxu0 0.0
        %686 = vmatpush.msra.mxu0 0.0
        %687 = vmatpush.msra.mxu0 0.0
        %688 = vmatpush.msra.mxu0 0.0
        %689 = vmatpush.msra.mxu0 0.0
        %690 = vmatpush.msra.mxu0 %v673
        %691 = vmatmul.f32.gmra.mxu0 %v321
        %v692 = vpop.f32.mrf.mxu0
        %v693 = vadd.f32 0.0, %v692
        %694 = vmatmul.f32.gmra.mxu0 %v324
        %v695 = vpop.f32.mrf.mxu0
        %v696 = vadd.f32 0.0, %v695
        %697 = vmatmul.f32.gmra.mxu0 %v327
        %v698 = vpop.f32.mrf.mxu0
        %v699 = vadd.f32 0.0, %v698
        %700 = vmatmul.f32.gmra.mxu0 %v330
        %v701 = vpop.f32.mrf.mxu0
        %v702 = vadd.f32 0.0, %v701
        %703 = vdwg.mxu0
        %v704 = vsel %vm268, %v299, 0
        %706 = vmatpush.msra.mxu0 0.0
        %707 = vmatpush.msra.mxu0 0.0
        %708 = vmatpush.msra.mxu0 0.0
        %709 = vmatpush.msra.mxu0 0.0
        %710 = vmatpush.msra.mxu0 0.0
        %711 = vmatpush.msra.mxu0 0.0
        %712 = vmatpush.msra.mxu0 0.0
        %713 = vmatpush.msra.mxu0 0.0
        %714 = vmatpush.msra.mxu0 0.0
        %715 = vmatpush.msra.mxu0 0.0
        %716 = vmatpush.msra.mxu0 0.0
        %717 = vmatpush.msra.mxu0 0.0
        %718 = vmatpush.msra.mxu0 0.0
        %719 = vmatpush.msra.mxu0 0.0
        %720 = vmatpush.msra.mxu0 0.0
        %721 = vmatpush.msra.mxu0 %v704
        %722 = vmatmul.f32.gmra.mxu0 %v321
        %v723 = vpop.f32.mrf.mxu0
        %v724 = vadd.f32 0.0, %v723
        %725 = vmatmul.f32.gmra.mxu0 %v324
        %v726 = vpop.f32.mrf.mxu0
        %v727 = vadd.f32 0.0, %v726
        %728 = vmatmul.f32.gmra.mxu0 %v327
        %v729 = vpop.f32.mrf.mxu0
        %v730 = vadd.f32 0.0, %v729
        %731 = vmatmul.f32.gmra.mxu0 %v330
        %v732 = vpop.f32.mrf.mxu0
        %v733 = vadd.f32 0.0, %v732
        %734 = vdwg.mxu0
        %v735 = vsel %vm268, %v314, 0
        %737 = vmatpush.msra.mxu0 0.0
        %738 = vmatpush.msra.mxu0 0.0
        %739 = vmatpush.msra.mxu0 0.0
        %740 = vmatpush.msra.mxu0 0.0
        %741 = vmatpush.msra.mxu0 0.0
        %742 = vmatpush.msra.mxu0 0.0
        %743 = vmatpush.msra.mxu0 0.0
        %744 = vmatpush.msra.mxu0 0.0
        %745 = vmatpush.msra.mxu0 0.0
        %746 = vmatpush.msra.mxu0 0.0
        %747 = vmatpush.msra.mxu0 0.0
        %748 = vmatpush.msra.mxu0 0.0
        %749 = vmatpush.msra.mxu0 0.0
        %750 = vmatpush.msra.mxu0 0.0
        %751 = vmatpush.msra.mxu0 0.0
        %752 = vmatpush.msra.mxu0 %v735
        %753 = vmatmul.f32.gmra.mxu0 %v321
        %v754 = vpop.f32.mrf.mxu0
        %v755 = vadd.f32 0.0, %v754
        %756 = vmatmul.f32.gmra.mxu0 %v324
        %v757 = vpop.f32.mrf.mxu0
        %v758 = vadd.f32 0.0, %v757
        %759 = vmatmul.f32.gmra.mxu0 %v327
        %v760 = vpop.f32.mrf.mxu0
        %v761 = vadd.f32 0.0, %v760
        %762 = vmatmul.f32.gmra.mxu0 %v330
        %v763 = vpop.f32.mrf.mxu0
        %v764 = vadd.f32 0.0, %v763
        %765 = vdwg.mxu0
        %v766 = vsel %vm268, %v315, 0
        %768 = vmatpush.msra.mxu0 0.0
        %769 = vmatpush.msra.mxu0 0.0
        %770 = vmatpush.msra.mxu0 0.0
        %771 = vmatpush.msra.mxu0 0.0
        %772 = vmatpush.msra.mxu0 0.0
        %773 = vmatpush.msra.mxu0 0.0
        %774 = vmatpush.msra.mxu0 0.0
        %775 = vmatpush.msra.mxu0 0.0
        %776 = vmatpush.msra.mxu0 0.0
        %777 = vmatpush.msra.mxu0 0.0
        %778 = vmatpush.msra.mxu0 0.0
        %779 = vmatpush.msra.mxu0 0.0
        %780 = vmatpush.msra.mxu0 0.0
        %781 = vmatpush.msra.mxu0 0.0
        %782 = vmatpush.msra.mxu0 0.0
        %783 = vmatpush.msra.mxu0 %v766
        %784 = vmatmul.f32.gmra.mxu0 %v321
        %v785 = vpop.f32.mrf.mxu0
        %v786 = vadd.f32 0.0, %v785
        %787 = vmatmul.f32.gmra.mxu0 %v324
        %v788 = vpop.f32.mrf.mxu0
        %v789 = vadd.f32 0.0, %v788
        %790 = vmatmul.f32.gmra.mxu0 %v327
        %v791 = vpop.f32.mrf.mxu0
        %v792 = vadd.f32 0.0, %v791
        %793 = vmatmul.f32.gmra.mxu0 %v330
        %v794 = vpop.f32.mrf.mxu0
        %v795 = vadd.f32 0.0, %v794
        %796 = vdwg.mxu0
        %vm797 = vcmask 523264
        %798 = vst.msk [vmem:[%s189] sm:$0xff] %vm797, %v352
        %799 = vst.msk [vmem:[%s189 + $0x8] sm:$0xff] %vm797, %v355
        %800 = vst.msk [vmem:[%s189 + $0x10] sm:$0xff] %vm797, %v358
        %801 = vst.msk [vmem:[%s189 + $0x18] sm:$0xff] %vm797, %v361
        %802 = vst.msk [vmem:[%s189 + $0x20] sm:$0xff] %vm797, %v383
        %803 = vst.msk [vmem:[%s189 + $0x28] sm:$0xff] %vm797, %v386
        %804 = vst.msk [vmem:[%s189 + $0x30] sm:$0xff] %vm797, %v389
        %805 = vst.msk [vmem:[%s189 + $0x38] sm:$0xff] %vm797, %v392
        %806 = vst.msk [vmem:[%s189 + $0x40] sm:$0xff] %vm797, %v414
        %807 = vst.msk [vmem:[%s189 + $0x48] sm:$0xff] %vm797, %v417
        %808 = vst.msk [vmem:[%s189 + $0x50] sm:$0xff] %vm797, %v420
        %809 = vst.msk [vmem:[%s189 + $0x58] sm:$0xff] %vm797, %v423
        %810 = vst.msk [vmem:[%s189 + $0x60] sm:$0xff] %vm797, %v445
        %811 = vst.msk [vmem:[%s189 + $0x68] sm:$0xff] %vm797, %v448
        %812 = vst.msk [vmem:[%s189 + $0x70] sm:$0xff] %vm797, %v451
        %813 = vst.msk [vmem:[%s189 + $0x78] sm:$0xff] %vm797, %v454
        %814 = vst.msk [vmem:[%s189 + $0x80] sm:$0xff] %vm797, %v476
        %815 = vst.msk [vmem:[%s189 + $0x88] sm:$0xff] %vm797, %v479
        %816 = vst.msk [vmem:[%s189 + $0x90] sm:$0xff] %vm797, %v482
        %817 = vst.msk [vmem:[%s189 + $0x98] sm:$0xff] %vm797, %v485
        %818 = vst.msk [vmem:[%s189 + $0xa0] sm:$0xff] %vm797, %v507
        %819 = vst.msk [vmem:[%s189 + $0xa8] sm:$0xff] %vm797, %v510
        %820 = vst.msk [vmem:[%s189 + $0xb0] sm:$0xff] %vm797, %v513
        %821 = vst.msk [vmem:[%s189 + $0xb8] sm:$0xff] %vm797, %v516
        %822 = vst.msk [vmem:[%s189 + $0xc0] sm:$0xff] %vm797, %v538
        %823 = vst.msk [vmem:[%s189 + $0xc8] sm:$0xff] %vm797, %v541
        %824 = vst.msk [vmem:[%s189 + $0xd0] sm:$0xff] %vm797, %v544
        %825 = vst.msk [vmem:[%s189 + $0xd8] sm:$0xff] %vm797, %v547
        %826 = vst.msk [vmem:[%s189 + $0xe0] sm:$0xff] %vm797, %v569
        %827 = vst.msk [vmem:[%s189 + $0xe8] sm:$0xff] %vm797, %v572
        %828 = vst.msk [vmem:[%s189 + $0xf0] sm:$0xff] %vm797, %v575
        %829 = vst.msk [vmem:[%s189 + $0xf8] sm:$0xff] %vm797, %v578
        %830 = vst.msk [vmem:[%s189 + $0x100] sm:$0xff] %vm797, %v600
        %831 = vst.msk [vmem:[%s189 + $0x108] sm:$0xff] %vm797, %v603
        %832 = vst.msk [vmem:[%s189 + $0x110] sm:$0xff] %vm797, %v606
        %833 = vst.msk [vmem:[%s189 + $0x118] sm:$0xff] %vm797, %v609
        %834 = vst.msk [vmem:[%s189 + $0x120] sm:$0xff] %vm797, %v631
        %835 = vst.msk [vmem:[%s189 + $0x128] sm:$0xff] %vm797, %v634
        %836 = vst.msk [vmem:[%s189 + $0x130] sm:$0xff] %vm797, %v637
        %837 = vst.msk [vmem:[%s189 + $0x138] sm:$0xff] %vm797, %v640
        %838 = vst.msk [vmem:[%s189 + $0x140] sm:$0xff] %vm797, %v662
        %839 = vst.msk [vmem:[%s189 + $0x148] sm:$0xff] %vm797, %v665
        %840 = vst.msk [vmem:[%s189 + $0x150] sm:$0xff] %vm797, %v668
        %841 = vst.msk [vmem:[%s189 + $0x158] sm:$0xff] %vm797, %v671
        %842 = vst.msk [vmem:[%s189 + $0x160] sm:$0xff] %vm797, %v693
        %843 = vst.msk [vmem:[%s189 + $0x168] sm:$0xff] %vm797, %v696
        %844 = vst.msk [vmem:[%s189 + $0x170] sm:$0xff] %vm797, %v699
        %845 = vst.msk [vmem:[%s189 + $0x178] sm:$0xff] %vm797, %v702
        %846 = vst.msk [vmem:[%s189 + $0x180] sm:$0xff] %vm797, %v724
        %847 = vst.msk [vmem:[%s189 + $0x188] sm:$0xff] %vm797, %v727
        %848 = vst.msk [vmem:[%s189 + $0x190] sm:$0xff] %vm797, %v730
        %849 = vst.msk [vmem:[%s189 + $0x198] sm:$0xff] %vm797, %v733
        %850 = vst.msk [vmem:[%s189 + $0x1a0] sm:$0xff] %vm797, %v755
        %851 = vst.msk [vmem:[%s189 + $0x1a8] sm:$0xff] %vm797, %v758
        %852 = vst.msk [vmem:[%s189 + $0x1b0] sm:$0xff] %vm797, %v761
        %853 = vst.msk [vmem:[%s189 + $0x1b8] sm:$0xff] %vm797, %v764
        %854 = vst.msk [vmem:[%s189 + $0x1c0] sm:$0xff] %vm797, %v786
        %855 = vst.msk [vmem:[%s189 + $0x1c8] sm:$0xff] %vm797, %v789
        %856 = vst.msk [vmem:[%s189 + $0x1d0] sm:$0xff] %vm797, %v792
        %857 = vst.msk [vmem:[%s189 + $0x1d8] sm:$0xff] %vm797, %v795
        %s858 = sand.u32 %s109, 1
        %s859 = sand.u32 %s109, 1
        %s860 = smul.addr %s859, 480
        %s861 = scalar_lea.vmem [#allocation2], %s860
        // Predicated region
        $region33: #{attention_segmentation_forward.5} parent=31 // pred_check
          %p862 = pneg %p119
        $region34: #{attention_segmentation_forward.5} parent=31 // pred_check_branch
          %864 = sbr.rel (%p862) target = $region36
        $region35: #{attention_segmentation_forward.5} parent=31 // pred_region
          %s865 = smul.u32 4, %s19
          %s866 = smul.addr %s18, 120
          %s867 = sadd.s32 %s865, %s866
          %s868 = smul.addr %s867, 8
          %s869 = scalar_lea.vmem %s3, %s868
          // Predicated region
          $region37: #{attention_segmentation_forward.5} parent=35 // pred_check
            _
          $region38: #{attention_segmentation_forward.5} parent=35 // pred_check_branch
            %871 = sbr.rel (0) target = $region40
          $region39: #{attention_segmentation_forward.5} parent=35 // pred_region
            // Predicated region
            $region41: #{attention_segmentation_forward.5} parent=39 // pred_check
              _
            $region42: #{attention_segmentation_forward.5} parent=39 // pred_check_branch
              %873 = sbr.rel (0) target = $region44
            $region43: #{attention_segmentation_forward.5} parent=39 // pred_region
              // Predicated region
              $region56: #{attention_segmentation_forward.5} parent=43 // pred_check
                _
              $region57: #{attention_segmentation_forward.5} parent=43 // pred_check_branch
                %1007 = sbr.rel (0) target = $region59
              $region58: #{attention_segmentation_forward.5} parent=43 // pred_region
                loop: start=0, step=1, limit=1
                $region60: #{attention_segmentation_forward.5} parent=58 // loop_pre_header
                  _
                $region61: #{attention_segmentation_forward.5} parent=58 // loop_header
                  %s1009 = sphi 0, %s1013
                  %p1010 = scmp.ge.s32.totalorder %s1009, 1
                  %s1014 = sphi %s861, %s861
                  %s1015 = sphi %s869, %s869
                $region62: #{attention_segmentation_forward.5} parent=58 // loop_header_branch
                  %1012 = sbr.rel (%p1010) target = $region66
                $region63: #{attention_segmentation_forward.5} parent=58 // loop_body
                  %v1016 = vld [vmem:[%s1014] sm:$0xff]
                  %1017 = vst [vmem:[%s1015] sm:$0xff] %v1016
                  %v1018 = vld [vmem:[%s1014 + $0x8] sm:$0xff]
                  %1019 = vst [vmem:[%s1015 + $0x8] sm:$0xff] %v1018
                  %v1020 = vld [vmem:[%s1014 + $0x10] sm:$0xff]
                  %1021 = vst [vmem:[%s1015 + $0x10] sm:$0xff] %v1020
                  %v1022 = vld [vmem:[%s1014 + $0x18] sm:$0xff]
                  %1023 = vst [vmem:[%s1015 + $0x18] sm:$0xff] %v1022
                  %v1024 = vld [vmem:[%s1014 + $0x20] sm:$0xff]
                  %1025 = vst [vmem:[%s1015 + $0x40] sm:$0xff] %v1024
                  %v1026 = vld [vmem:[%s1014 + $0x28] sm:$0xff]
                  %1027 = vst [vmem:[%s1015 + $0x48] sm:$0xff] %v1026
                  %v1028 = vld [vmem:[%s1014 + $0x30] sm:$0xff]
                  %1029 = vst [vmem:[%s1015 + $0x50] sm:$0xff] %v1028
                  %v1030 = vld [vmem:[%s1014 + $0x38] sm:$0xff]
                  %1031 = vst [vmem:[%s1015 + $0x58] sm:$0xff] %v1030
                  %v1032 = vld [vmem:[%s1014 + $0x40] sm:$0xff]
                  %1033 = vst [vmem:[%s1015 + $0x80] sm:$0xff] %v1032
                  %v1034 = vld [vmem:[%s1014 + $0x48] sm:$0xff]
                  %1035 = vst [vmem:[%s1015 + $0x88] sm:$0xff] %v1034
                  %v1036 = vld [vmem:[%s1014 + $0x50] sm:$0xff]
                  %1037 = vst [vmem:[%s1015 + $0x90] sm:$0xff] %v1036
                  %v1038 = vld [vmem:[%s1014 + $0x58] sm:$0xff]
                  %1039 = vst [vmem:[%s1015 + $0x98] sm:$0xff] %v1038
                  %v1040 = vld [vmem:[%s1014 + $0x60] sm:$0xff]
                  %1041 = vst [vmem:[%s1015 + $0xc0] sm:$0xff] %v1040
                  %v1042 = vld [vmem:[%s1014 + $0x68] sm:$0xff]
                  %1043 = vst [vmem:[%s1015 + $0xc8] sm:$0xff] %v1042
                  %v1044 = vld [vmem:[%s1014 + $0x70] sm:$0xff]
                  %1045 = vst [vmem:[%s1015 + $0xd0] sm:$0xff] %v1044
                  %v1046 = vld [vmem:[%s1014 + $0x78] sm:$0xff]
                  %1047 = vst [vmem:[%s1015 + $0xd8] sm:$0xff] %v1046
                  %v1048 = vld [vmem:[%s1014 + $0x80] sm:$0xff]
                  %1049 = vst [vmem:[%s1015 + $0x100] sm:$0xff] %v1048
                  %v1050 = vld [vmem:[%s1014 + $0x88] sm:$0xff]
                  %1051 = vst [vmem:[%s1015 + $0x108] sm:$0xff] %v1050
                  %v1052 = vld [vmem:[%s1014 + $0x90] sm:$0xff]
                  %1053 = vst [vmem:[%s1015 + $0x110] sm:$0xff] %v1052
                  %v1054 = vld [vmem:[%s1014 + $0x98] sm:$0xff]
                  %1055 = vst [vmem:[%s1015 + $0x118] sm:$0xff] %v1054
                  %v1056 = vld [vmem:[%s1014 + $0xa0] sm:$0xff]
                  %1057 = vst [vmem:[%s1015 + $0x140] sm:$0xff] %v1056
                  %v1058 = vld [vmem:[%s1014 + $0xa8] sm:$0xff]
                  %1059 = vst [vmem:[%s1015 + $0x148] sm:$0xff] %v1058
                  %v1060 = vld [vmem:[%s1014 + $0xb0] sm:$0xff]
                  %1061 = vst [vmem:[%s1015 + $0x150] sm:$0xff] %v1060
                  %v1062 = vld [vmem:[%s1014 + $0xb8] sm:$0xff]
                  %1063 = vst [vmem:[%s1015 + $0x158] sm:$0xff] %v1062
                  %v1064 = vld [vmem:[%s1014 + $0xc0] sm:$0xff]
                  %1065 = vst [vmem:[%s1015 + $0x180] sm:$0xff] %v1064
                  %v1066 = vld [vmem:[%s1014 + $0xc8] sm:$0xff]
                  %1067 = vst [vmem:[%s1015 + $0x188] sm:$0xff] %v1066
                  %v1068 = vld [vmem:[%s1014 + $0xd0] sm:$0xff]
                  %1069 = vst [vmem:[%s1015 + $0x190] sm:$0xff] %v1068
                  %v1070 = vld [vmem:[%s1014 + $0xd8] sm:$0xff]
                  %1071 = vst [vmem:[%s1015 + $0x198] sm:$0xff] %v1070
                  %v1072 = vld [vmem:[%s1014 + $0xe0] sm:$0xff]
                  %1073 = vst [vmem:[%s1015 + $0x1c0] sm:$0xff] %v1072
                  %v1074 = vld [vmem:[%s1014 + $0xe8] sm:$0xff]
                  %1075 = vst [vmem:[%s1015 + $0x1c8] sm:$0xff] %v1074
                  %v1076 = vld [vmem:[%s1014 + $0xf0] sm:$0xff]
                  %1077 = vst [vmem:[%s1015 + $0x1d0] sm:$0xff] %v1076
                  %v1078 = vld [vmem:[%s1014 + $0xf8] sm:$0xff]
                  %1079 = vst [vmem:[%s1015 + $0x1d8] sm:$0xff] %v1078
                  %v1080 = vld [vmem:[%s1014 + $0x100] sm:$0xff]
                  %1081 = vst [vmem:[%s1015 + $0x200] sm:$0xff] %v1080
                  %v1082 = vld [vmem:[%s1014 + $0x108] sm:$0xff]
                  %1083 = vst [vmem:[%s1015 + $0x208] sm:$0xff] %v1082
                  %v1084 = vld [vmem:[%s1014 + $0x110] sm:$0xff]
                  %1085 = vst [vmem:[%s1015 + $0x210] sm:$0xff] %v1084
                  %v1086 = vld [vmem:[%s1014 + $0x118] sm:$0xff]
                  %1087 = vst [vmem:[%s1015 + $0x218] sm:$0xff] %v1086
                  %v1088 = vld [vmem:[%s1014 + $0x120] sm:$0xff]
                  %1089 = vst [vmem:[%s1015 + $0x240] sm:$0xff] %v1088
                  %v1090 = vld [vmem:[%s1014 + $0x128] sm:$0xff]
                  %1091 = vst [vmem:[%s1015 + $0x248] sm:$0xff] %v1090
                  %v1092 = vld [vmem:[%s1014 + $0x130] sm:$0xff]
                  %1093 = vst [vmem:[%s1015 + $0x250] sm:$0xff] %v1092
                  %v1094 = vld [vmem:[%s1014 + $0x138] sm:$0xff]
                  %1095 = vst [vmem:[%s1015 + $0x258] sm:$0xff] %v1094
                  %v1096 = vld [vmem:[%s1014 + $0x140] sm:$0xff]
                  %1097 = vst [vmem:[%s1015 + $0x280] sm:$0xff] %v1096
                  %v1098 = vld [vmem:[%s1014 + $0x148] sm:$0xff]
                  %1099 = vst [vmem:[%s1015 + $0x288] sm:$0xff] %v1098
                  %v1100 = vld [vmem:[%s1014 + $0x150] sm:$0xff]
                  %1101 = vst [vmem:[%s1015 + $0x290] sm:$0xff] %v1100
                  %v1102 = vld [vmem:[%s1014 + $0x158] sm:$0xff]
                  %1103 = vst [vmem:[%s1015 + $0x298] sm:$0xff] %v1102
                  %v1104 = vld [vmem:[%s1014 + $0x160] sm:$0xff]
                  %1105 = vst [vmem:[%s1015 + $0x2c0] sm:$0xff] %v1104
                  %v1106 = vld [vmem:[%s1014 + $0x168] sm:$0xff]
                  %1107 = vst [vmem:[%s1015 + $0x2c8] sm:$0xff] %v1106
                  %v1108 = vld [vmem:[%s1014 + $0x170] sm:$0xff]
                  %1109 = vst [vmem:[%s1015 + $0x2d0] sm:$0xff] %v1108
                  %v1110 = vld [vmem:[%s1014 + $0x178] sm:$0xff]
                  %1111 = vst [vmem:[%s1015 + $0x2d8] sm:$0xff] %v1110
                  %v1112 = vld [vmem:[%s1014 + $0x180] sm:$0xff]
                  %1113 = vst [vmem:[%s1015 + $0x300] sm:$0xff] %v1112
                  %v1114 = vld [vmem:[%s1014 + $0x188] sm:$0xff]
                  %1115 = vst [vmem:[%s1015 + $0x308] sm:$0xff] %v1114
                  %v1116 = vld [vmem:[%s1014 + $0x190] sm:$0xff]
                  %1117 = vst [vmem:[%s1015 + $0x310] sm:$0xff] %v1116
                  %v1118 = vld [vmem:[%s1014 + $0x198] sm:$0xff]
                  %1119 = vst [vmem:[%s1015 + $0x318] sm:$0xff] %v1118
                  %v1120 = vld [vmem:[%s1014 + $0x1a0] sm:$0xff]
                  %1121 = vst [vmem:[%s1015 + $0x340] sm:$0xff] %v1120
                  %v1122 = vld [vmem:[%s1014 + $0x1a8] sm:$0xff]
                  %1123 = vst [vmem:[%s1015 + $0x348] sm:$0xff] %v1122
                  %v1124 = vld [vmem:[%s1014 + $0x1b0] sm:$0xff]
                  %1125 = vst [vmem:[%s1015 + $0x350] sm:$0xff] %v1124
                  %v1126 = vld [vmem:[%s1014 + $0x1b8] sm:$0xff]
                  %1127 = vst [vmem:[%s1015 + $0x358] sm:$0xff] %v1126
                  %v1128 = vld [vmem:[%s1014 + $0x1c0] sm:$0xff]
                  %1129 = vst [vmem:[%s1015 + $0x380] sm:$0xff] %v1128
                  %v1130 = vld [vmem:[%s1014 + $0x1c8] sm:$0xff]
                  %1131 = vst [vmem:[%s1015 + $0x388] sm:$0xff] %v1130
                  %v1132 = vld [vmem:[%s1014 + $0x1d0] sm:$0xff]
                  %1133 = vst [vmem:[%s1015 + $0x390] sm:$0xff] %v1132
                  %v1134 = vld [vmem:[%s1014 + $0x1d8] sm:$0xff]
                  %1135 = vst [vmem:[%s1015 + $0x398] sm:$0xff] %v1134
                $region64: #{attention_segmentation_forward.5} parent=58 // loop_footer
                  %s1013 = sadd.s32 1, %s1009
                $region65: #{attention_segmentation_forward.5} parent=58 // loop_footer_branch
                  %1008 = sbr.rel target = $region61
                $region66: #{attention_segmentation_forward.5} parent=58 // loop_exit
                  _
              $region59: #{attention_segmentation_forward.5} parent=43 // pred_fallthru
                _
              // Predicated region
              $region67: #{attention_segmentation_forward.5} parent=43 // pred_check
                _
              $region68: #{attention_segmentation_forward.5} parent=43 // pred_check_branch
                %1137 = sbr.rel target = $region70
              $region69: #{attention_segmentation_forward.5} parent=43 // pred_region
                _
              $region70: #{attention_segmentation_forward.5} parent=43 // pred_fallthru
                _
            $region44: #{attention_segmentation_forward.5} parent=39 // pred_fallthru
              _
            // Predicated region
            $region45: #{attention_segmentation_forward.5} parent=39 // pred_check
              _
            $region46: #{attention_segmentation_forward.5} parent=39 // pred_check_branch
              %875 = sbr.rel target = $region48
            $region47: #{attention_segmentation_forward.5} parent=39 // pred_region
              %s877 = ssub.s32 256, 1
              loop: start=0, step=1, limit=1
              $region49: #{attention_segmentation_forward.5} parent=47 // loop_pre_header
                _
              $region50: #{attention_segmentation_forward.5} parent=47 // loop_header
                %s879 = sphi 0, %s883
                %p880 = scmp.ge.s32.totalorder %s879, 1
                %s884 = sphi %s861, %s861
                %s885 = sphi %s869, %s869
              $region51: #{attention_segmentation_forward.5} parent=47 // loop_header_branch
                %882 = sbr.rel (%p880) target = $region55
              $region52: #{attention_segmentation_forward.5} parent=47 // loop_body
                %v886 = vld [vmem:[%s884] sm:%s877]
                %887 = vst [vmem:[%s885] sm:%s877] %v886
                %v888 = vld [vmem:[%s884 + $0x8] sm:%s877]
                %889 = vst [vmem:[%s885 + $0x8] sm:%s877] %v888
                %v890 = vld [vmem:[%s884 + $0x10] sm:%s877]
                %891 = vst [vmem:[%s885 + $0x10] sm:%s877] %v890
                %v892 = vld [vmem:[%s884 + $0x18] sm:%s877]
                %893 = vst [vmem:[%s885 + $0x18] sm:%s877] %v892
                %v894 = vld [vmem:[%s884 + $0x20] sm:%s877]
                %895 = vst [vmem:[%s885 + $0x40] sm:%s877] %v894
                %v896 = vld [vmem:[%s884 + $0x28] sm:%s877]
                %897 = vst [vmem:[%s885 + $0x48] sm:%s877] %v896
                %v898 = vld [vmem:[%s884 + $0x30] sm:%s877]
                %899 = vst [vmem:[%s885 + $0x50] sm:%s877] %v898
                %v900 = vld [vmem:[%s884 + $0x38] sm:%s877]
                %901 = vst [vmem:[%s885 + $0x58] sm:%s877] %v900
                %v902 = vld [vmem:[%s884 + $0x40] sm:%s877]
                %903 = vst [vmem:[%s885 + $0x80] sm:%s877] %v902
                %v904 = vld [vmem:[%s884 + $0x48] sm:%s877]
                %905 = vst [vmem:[%s885 + $0x88] sm:%s877] %v904
                %v906 = vld [vmem:[%s884 + $0x50] sm:%s877]
                %907 = vst [vmem:[%s885 + $0x90] sm:%s877] %v906
                %v908 = vld [vmem:[%s884 + $0x58] sm:%s877]
                %909 = vst [vmem:[%s885 + $0x98] sm:%s877] %v908
                %v910 = vld [vmem:[%s884 + $0x60] sm:%s877]
                %911 = vst [vmem:[%s885 + $0xc0] sm:%s877] %v910
                %v912 = vld [vmem:[%s884 + $0x68] sm:%s877]
                %913 = vst [vmem:[%s885 + $0xc8] sm:%s877] %v912
                %v914 = vld [vmem:[%s884 + $0x70] sm:%s877]
                %915 = vst [vmem:[%s885 + $0xd0] sm:%s877] %v914
                %v916 = vld [vmem:[%s884 + $0x78] sm:%s877]
                %917 = vst [vmem:[%s885 + $0xd8] sm:%s877] %v916
                %v918 = vld [vmem:[%s884 + $0x80] sm:%s877]
                %919 = vst [vmem:[%s885 + $0x100] sm:%s877] %v918
                %v920 = vld [vmem:[%s884 + $0x88] sm:%s877]
                %921 = vst [vmem:[%s885 + $0x108] sm:%s877] %v920
                %v922 = vld [vmem:[%s884 + $0x90] sm:%s877]
                %923 = vst [vmem:[%s885 + $0x110] sm:%s877] %v922
                %v924 = vld [vmem:[%s884 + $0x98] sm:%s877]
                %925 = vst [vmem:[%s885 + $0x118] sm:%s877] %v924
                %v926 = vld [vmem:[%s884 + $0xa0] sm:%s877]
                %927 = vst [vmem:[%s885 + $0x140] sm:%s877] %v926
                %v928 = vld [vmem:[%s884 + $0xa8] sm:%s877]
                %929 = vst [vmem:[%s885 + $0x148] sm:%s877] %v928
                %v930 = vld [vmem:[%s884 + $0xb0] sm:%s877]
                %931 = vst [vmem:[%s885 + $0x150] sm:%s877] %v930
                %v932 = vld [vmem:[%s884 + $0xb8] sm:%s877]
                %933 = vst [vmem:[%s885 + $0x158] sm:%s877] %v932
                %v934 = vld [vmem:[%s884 + $0xc0] sm:%s877]
                %935 = vst [vmem:[%s885 + $0x180] sm:%s877] %v934
                %v936 = vld [vmem:[%s884 + $0xc8] sm:%s877]
                %937 = vst [vmem:[%s885 + $0x188] sm:%s877] %v936
                %v938 = vld [vmem:[%s884 + $0xd0] sm:%s877]
                %939 = vst [vmem:[%s885 + $0x190] sm:%s877] %v938
                %v940 = vld [vmem:[%s884 + $0xd8] sm:%s877]
                %941 = vst [vmem:[%s885 + $0x198] sm:%s877] %v940
                %v942 = vld [vmem:[%s884 + $0xe0] sm:%s877]
                %943 = vst [vmem:[%s885 + $0x1c0] sm:%s877] %v942
                %v944 = vld [vmem:[%s884 + $0xe8] sm:%s877]
                %945 = vst [vmem:[%s885 + $0x1c8] sm:%s877] %v944
                %v946 = vld [vmem:[%s884 + $0xf0] sm:%s877]
                %947 = vst [vmem:[%s885 + $0x1d0] sm:%s877] %v946
                %v948 = vld [vmem:[%s884 + $0xf8] sm:%s877]
                %949 = vst [vmem:[%s885 + $0x1d8] sm:%s877] %v948
                %v950 = vld [vmem:[%s884 + $0x100] sm:%s877]
                %951 = vst [vmem:[%s885 + $0x200] sm:%s877] %v950
                %v952 = vld [vmem:[%s884 + $0x108] sm:%s877]
                %953 = vst [vmem:[%s885 + $0x208] sm:%s877] %v952
                %v954 = vld [vmem:[%s884 + $0x110] sm:%s877]
                %955 = vst [vmem:[%s885 + $0x210] sm:%s877] %v954
                %v956 = vld [vmem:[%s884 + $0x118] sm:%s877]
                %957 = vst [vmem:[%s885 + $0x218] sm:%s877] %v956
                %v958 = vld [vmem:[%s884 + $0x120] sm:%s877]
                %959 = vst [vmem:[%s885 + $0x240] sm:%s877] %v958
                %v960 = vld [vmem:[%s884 + $0x128] sm:%s877]
                %961 = vst [vmem:[%s885 + $0x248] sm:%s877] %v960
                %v962 = vld [vmem:[%s884 + $0x130] sm:%s877]
                %963 = vst [vmem:[%s885 + $0x250] sm:%s877] %v962
                %v964 = vld [vmem:[%s884 + $0x138] sm:%s877]
                %965 = vst [vmem:[%s885 + $0x258] sm:%s877] %v964
                %v966 = vld [vmem:[%s884 + $0x140] sm:%s877]
                %967 = vst [vmem:[%s885 + $0x280] sm:%s877] %v966
                %v968 = vld [vmem:[%s884 + $0x148] sm:%s877]
                %969 = vst [vmem:[%s885 + $0x288] sm:%s877] %v968
                %v970 = vld [vmem:[%s884 + $0x150] sm:%s877]
                %971 = vst [vmem:[%s885 + $0x290] sm:%s877] %v970
                %v972 = vld [vmem:[%s884 + $0x158] sm:%s877]
                %973 = vst [vmem:[%s885 + $0x298] sm:%s877] %v972
                %v974 = vld [vmem:[%s884 + $0x160] sm:%s877]
                %975 = vst [vmem:[%s885 + $0x2c0] sm:%s877] %v974
                %v976 = vld [vmem:[%s884 + $0x168] sm:%s877]
                %977 = vst [vmem:[%s885 + $0x2c8] sm:%s877] %v976
                %v978 = vld [vmem:[%s884 + $0x170] sm:%s877]
                %979 = vst [vmem:[%s885 + $0x2d0] sm:%s877] %v978
                %v980 = vld [vmem:[%s884 + $0x178] sm:%s877]
                %981 = vst [vmem:[%s885 + $0x2d8] sm:%s877] %v980
                %v982 = vld [vmem:[%s884 + $0x180] sm:%s877]
                %983 = vst [vmem:[%s885 + $0x300] sm:%s877] %v982
                %v984 = vld [vmem:[%s884 + $0x188] sm:%s877]
                %985 = vst [vmem:[%s885 + $0x308] sm:%s877] %v984
                %v986 = vld [vmem:[%s884 + $0x190] sm:%s877]
                %987 = vst [vmem:[%s885 + $0x310] sm:%s877] %v986
                %v988 = vld [vmem:[%s884 + $0x198] sm:%s877]
                %989 = vst [vmem:[%s885 + $0x318] sm:%s877] %v988
                %v990 = vld [vmem:[%s884 + $0x1a0] sm:%s877]
                %991 = vst [vmem:[%s885 + $0x340] sm:%s877] %v990
                %v992 = vld [vmem:[%s884 + $0x1a8] sm:%s877]
                %993 = vst [vmem:[%s885 + $0x348] sm:%s877] %v992
                %v994 = vld [vmem:[%s884 + $0x1b0] sm:%s877]
                %995 = vst [vmem:[%s885 + $0x350] sm:%s877] %v994
                %v996 = vld [vmem:[%s884 + $0x1b8] sm:%s877]
                %997 = vst [vmem:[%s885 + $0x358] sm:%s877] %v996
                %v998 = vld [vmem:[%s884 + $0x1c0] sm:%s877]
                %999 = vst [vmem:[%s885 + $0x380] sm:%s877] %v998
                %v1000 = vld [vmem:[%s884 + $0x1c8] sm:%s877]
                %1001 = vst [vmem:[%s885 + $0x388] sm:%s877] %v1000
                %v1002 = vld [vmem:[%s884 + $0x1d0] sm:%s877]
                %1003 = vst [vmem:[%s885 + $0x390] sm:%s877] %v1002
                %v1004 = vld [vmem:[%s884 + $0x1d8] sm:%s877]
                %1005 = vst [vmem:[%s885 + $0x398] sm:%s877] %v1004
              $region53: #{attention_segmentation_forward.5} parent=47 // loop_footer
                %s883 = sadd.s32 1, %s879
              $region54: #{attention_segmentation_forward.5} parent=47 // loop_footer_branch
                %878 = sbr.rel target = $region50
              $region55: #{attention_segmentation_forward.5} parent=47 // loop_exit
                _
            $region48: #{attention_segmentation_forward.5} parent=39 // pred_fallthru
              _
          $region40: #{attention_segmentation_forward.5} parent=35 // pred_fallthru
            _
          %1138 = vnop
        $region36: #{attention_segmentation_forward.5} parent=31 // pred_fallthru
          _
      $region32: #{attention_segmentation_forward.5} parent=5 // pred_fallthru
        _
      %p1139 = scmp.le.s32.totalorder 2, %s9
      // Predicated region
      $region71: #{attention_segmentation_forward.5} parent=5 // pred_check
        %p1140 = pneg %p1139
      $region72: #{attention_segmentation_forward.5} parent=5 // pred_check_branch
        %1142 = sbr.rel (%p1140) target = $region74
      $region73: #{attention_segmentation_forward.5} parent=5 // pred_region
        %s1143 = ssub.s32 %s9, 2
        // Predicated region
        $region75: #{attention_segmentation_forward.5} parent=73 // pred_check
          %p1144 = pneg %p125
        $region76: #{attention_segmentation_forward.5} parent=73 // pred_check_branch
          %1146 = sbr.rel (%p1144) target = $region78
        $region77: #{attention_segmentation_forward.5} parent=73 // pred_region
          %s1147 = sand.u32 %s110, 1
          %s1148 = sand.u32 %s110, 1
          %s1149 = smul.addr %s1148, 480
          %s1150 = scalar_lea.vmem [#allocation2], %s1149
        $region78: #{attention_segmentation_forward.5} parent=73 // pred_fallthru
          _
      $region74: #{attention_segmentation_forward.5} parent=5 // pred_fallthru
        _
    $region6: #{attention_segmentation_forward.5} parent=1 // loop_footer
      %s13 = sadd.s32 1, %s9
    $region7: #{attention_segmentation_forward.5} parent=1 // loop_footer_branch
      %8 = sbr.rel target = $region3
    $region8: #{attention_segmentation_forward.5} parent=1 // loop_exit
      _

// kernel: attention_segmentation_forward.4
$region0: #{attention_segmentation_forward.4}
  #allocation0 [shape = 'u32[]', space=smem, size = 0x4, offset = 0x4, fixed_abs, tag = 'smem constant byte address 0x4 - core index']
  #allocation1 [shape = 'u32[72,128]{1,0:T(1,128)}', space=vmem, size = 0x9000, scoped, tag = 'internal scratch']
  #allocation2 [shape = 'bf16[6,6,64]{2,1,0:T(8,128)(2,1)}', space=vmem, size = 0x3000, scoped, tag = 'scratch operand']
  %s0 = inlined_call_operand.vmem [shape: f32[2,4,32], index: 0, kind: input, shape index: {}]
  %s1 = inlined_call_operand.vmem [shape: f32[2,4,32], index: 1, kind: input, shape index: {}]
  %s2 = inlined_call_operand.vmem [shape: f32[2,32], index: 2, kind: input, shape index: {}]
  %s3 = inlined_call_operand.vmem [shape: f32[2,32], index: 3, kind: input, shape index: {}]
  %s4 = inlined_call_operand.vmem [shape: bf16[5,320,128], index: 4, kind: input, shape index: {}]
  %s5 = inlined_call_operand.vmem [shape: f32[1,128], index: 5, kind: input, shape index: {}]
  %s6 = inlined_call_operand.vmem [shape: f32[2,128], index: 6, kind: input, shape index: {}]
  %s7 = inlined_call_operand.vmem [shape: bf16[128,2], index: 7, kind: input, shape index: {}]
  %s8 = inlined_call_operand.vmem [shape: f32[1,2], index: 8, kind: input, shape index: {}]
  %s9 = inlined_call_operand.vmem [shape: bf16[32,128], index: 9, kind: input, shape index: {}]
  %s10 = inlined_call_operand.vmem [shape: f32[1,128], index: 10, kind: input, shape index: {}]
  %s11 = inlined_call_operand.vmem [shape: f32[2,12,128], index: 11, kind: output, shape index: {0}]
  %s12 = inlined_call_operand.vmem [shape: f32[2,4,2], index: 12, kind: output, shape index: {1}]
  %13 = xla_tuple %s11, %s12
  %s14 = sld [smem:[#allocation0]]
  $region85: #{attention_segmentation_forward.4} parent=0
    _
  %s16 = ssub.s32 1, %s14
  %s17 = scalar_select 0, %s16, %s14
  loop: start=0, step=1, limit=4
  $region2: #{attention_segmentation_forward.4} parent=0 // loop_pre_header
    _
  $region3: #{attention_segmentation_forward.4} parent=0 // loop_header
    %s19 = sphi 0, %s23
    %p20 = scmp.ge.s32.totalorder %s19, 4
    %s29 = sphi 0, %s31
    %s32 = sphi 0, %s29
    %s33 = sphi 0, %s32
    %s49 = sphi 0, %s33
    %s55 = sphi 0, %s57
    %s58 = sphi 0, %s55
    %s59 = sphi 0, %s58
    %s75 = sphi 0, %s59
    %s79 = sphi 0, %s79
    %s81 = sphi 0, %s79
    %s82 = sphi 0, %s81
    %s96 = sphi 0, %s82
    %s100 = sphi 0, %s100
    %s102 = sphi 0, %s100
    %s103 = sphi 0, %s102
    %s117 = sphi 0, %s103
    %s121 = sphi 0, %s121
    %s123 = sphi 0, %s121
    %s124 = sphi 0, %s123
    %s138 = sphi 0, %s124
    %s142 = sphi 0, %s142
    %s144 = sphi 0, %s142
    %s145 = sphi 0, %s144
    %s159 = sphi 0, %s145
    %s163 = sphi 0, %s163
    %s165 = sphi 0, %s163
    %s166 = sphi 0, %s165
    %s180 = sphi 0, %s166
    %s184 = sphi 0, %s184
    %s186 = sphi 0, %s184
    %s187 = sphi 0, %s186
    %s201 = sphi 0, %s187
    %s205 = sphi 0, %s205
    %s207 = sphi 0, %s205
    %s208 = sphi 0, %s207
    %s222 = sphi 0, %s208
    %s226 = sphi 0, %s226
    %s228 = sphi 0, %s226
    %s229 = sphi 0, %s228
    %s243 = sphi 0, %s229
    %s247 = sphi 0, %s247
    %s249 = sphi 0, %s247
    %s250 = sphi 0, %s249
    %s264 = sphi 0, %s250
    %s270 = sphi 0, %s272
    %s273 = sphi 0, %s270
    %s274 = sphi 0, %s273
    %s290 = sphi 0, %s274
    %s296 = sphi 0, %s298
    %s299 = sphi 0, %s296
    %s300 = sphi 0, %s299
    %s316 = sphi 0, %s300
  $region4: #{attention_segmentation_forward.4} parent=0 // loop_header_branch
    %22 = sbr.rel (%p20) target = $region8
  $region5: #{attention_segmentation_forward.4} parent=0 // loop_body
    %s24 = ssub.s32 %s19, 1
    %s25 = ssub.s32 %s19, 2
    %s26 = sadd.s32 %s19, 1
    %s27 = ssub.s32 %s19, %s26
    %p28 = scmp.eq.s32.totalorder %s27, 0
    %s30 = sadd.s32 %s29, 1
    %s31 = scalar_select %p28, %s29, %s30
    %p34 = pneg %p28
    %p35 = scmp.eq.s32.totalorder %s19, 1
    %p36 = por %p34, %p35
    %p37 = scmp.ne.s32.totalorder %s29, %s32
    %p38 = scmp.eq.s32.totalorder %s19, 0
    %p39 = por %p37, %p38
    %p40 = scmp.ne.s32.totalorder %s29, %s32
    %p41 = scmp.eq.s32.totalorder %s24, 1
    %p42 = por %p40, %p41
    %p43 = scmp.ne.s32.totalorder %s32, %s33
    %p44 = scmp.eq.s32.totalorder %s24, 0
    %p45 = por %p43, %p44
    %p46 = scmp.ne.s32.totalorder %s32, %s33
    %p47 = scmp.eq.s32.totalorder %s25, 1
    %p48 = por %p46, %p47
    %p50 = scmp.ne.s32.totalorder %s33, %s49
    %p51 = scmp.eq.s32.totalorder %s25, 0
    %p52 = por %p50, %p51
    %s53 = ssub.s32 %s19, %s26
    %p54 = scmp.eq.s32.totalorder %s53, 0
    %s56 = sadd.s32 %s55, 1
    %s57 = scalar_select %p54, %s55, %s56
    %p60 = pneg %p54
    %p61 = scmp.eq.s32.totalorder %s19, 1
    %p62 = por %p60, %p61
    %p63 = scmp.ne.s32.totalorder %s55, %s58
    %p64 = scmp.eq.s32.totalorder %s19, 0
    %p65 = por %p63, %p64
    %p66 = scmp.ne.s32.totalorder %s55, %s58
    %p67 = scmp.eq.s32.totalorder %s24, 1
    %p68 = por %p66, %p67
    %p69 = scmp.ne.s32.totalorder %s58, %s59
    %p70 = scmp.eq.s32.totalorder %s24, 0
    %p71 = por %p69, %p70
    %p72 = scmp.ne.s32.totalorder %s58, %s59
    %p73 = scmp.eq.s32.totalorder %s25, 1
    %p74 = por %p72, %p73
    %p76 = scmp.ne.s32.totalorder %s59, %s75
    %p77 = scmp.eq.s32.totalorder %s25, 0
    %p78 = por %p76, %p77
    %s80 = sadd.s32 %s79, 1
    %p83 = scmp.eq.s32.totalorder %s19, 1
    %p84 = scmp.ne.s32.totalorder %s79, %s81
    %p85 = scmp.eq.s32.totalorder %s19, 0
    %p86 = por %p84, %p85
    %p87 = scmp.ne.s32.totalorder %s79, %s81
    %p88 = scmp.eq.s32.totalorder %s24, 1
    %p89 = por %p87, %p88
    %p90 = scmp.ne.s32.totalorder %s81, %s82
    %p91 = scmp.eq.s32.totalorder %s24, 0
    %p92 = por %p90, %p91
    %p93 = scmp.ne.s32.totalorder %s81, %s82
    %p94 = scmp.eq.s32.totalorder %s25, 1
    %p95 = por %p93, %p94
    %p97 = scmp.ne.s32.totalorder %s82, %s96
    %p98 = scmp.eq.s32.totalorder %s25, 0
    %p99 = por %p97, %p98
    %s101 = sadd.s32 %s100, 1
    %p104 = scmp.eq.s32.totalorder %s19, 1
    %p105 = scmp.ne.s32.totalorder %s100, %s102
    %p106 = scmp.eq.s32.totalorder %s19, 0
    %p107 = por %p105, %p106
    %p108 = scmp.ne.s32.totalorder %s100, %s102
    %p109 = scmp.eq.s32.totalorder %s24, 1
    %p110 = por %p108, %p109
    %p111 = scmp.ne.s32.totalorder %s102, %s103
    %p112 = scmp.eq.s32.totalorder %s24, 0
    %p113 = por %p111, %p112
    %p114 = scmp.ne.s32.totalorder %s102, %s103
    %p115 = scmp.eq.s32.totalorder %s25, 1
    %p116 = por %p114, %p115
    %p118 = scmp.ne.s32.totalorder %s103, %s117
    %p119 = scmp.eq.s32.totalorder %s25, 0
    %p120 = por %p118, %p119
    %s122 = sadd.s32 %s121, 1
    %p125 = scmp.eq.s32.totalorder %s19, 1
    %p126 = scmp.ne.s32.totalorder %s121, %s123
    %p127 = scmp.eq.s32.totalorder %s19, 0
    %p128 = por %p126, %p127
    %p129 = scmp.ne.s32.totalorder %s121, %s123
    %p130 = scmp.eq.s32.totalorder %s24, 1
    %p131 = por %p129, %p130
    %p132 = scmp.ne.s32.totalorder %s123, %s124
    %p133 = scmp.eq.s32.totalorder %s24, 0
    %p134 = por %p132, %p133
    %p135 = scmp.ne.s32.totalorder %s123, %s124
    %p136 = scmp.eq.s32.totalorder %s25, 1
    %p137 = por %p135, %p136
    %p139 = scmp.ne.s32.totalorder %s124, %s138
    %p140 = scmp.eq.s32.totalorder %s25, 0
    %p141 = por %p139, %p140
    %s143 = sadd.s32 %s142, 1
    %p146 = scmp.eq.s32.totalorder %s19, 1
    %p147 = scmp.ne.s32.totalorder %s142, %s144
    %p148 = scmp.eq.s32.totalorder %s19, 0
    %p149 = por %p147, %p148
    %p150 = scmp.ne.s32.totalorder %s142, %s144
    %p151 = scmp.eq.s32.totalorder %s24, 1
    %p152 = por %p150, %p151
    %p153 = scmp.ne.s32.totalorder %s144, %s145
    %p154 = scmp.eq.s32.totalorder %s24, 0
    %p155 = por %p153, %p154
    %p156 = scmp.ne.s32.totalorder %s144, %s145
    %p157 = scmp.eq.s32.totalorder %s25, 1
    %p158 = por %p156, %p157
    %p160 = scmp.ne.s32.totalorder %s145, %s159
    %p161 = scmp.eq.s32.totalorder %s25, 0
    %p162 = por %p160, %p161
    %s164 = sadd.s32 %s163, 1
    %p167 = scmp.eq.s32.totalorder %s19, 1
    %p168 = scmp.ne.s32.totalorder %s163, %s165
    %p169 = scmp.eq.s32.totalorder %s19, 0
    %p170 = por %p168, %p169
    %p171 = scmp.ne.s32.totalorder %s163, %s165
    %p172 = scmp.eq.s32.totalorder %s24, 1
    %p173 = por %p171, %p172
    %p174 = scmp.ne.s32.totalorder %s165, %s166
    %p175 = scmp.eq.s32.totalorder %s24, 0
    %p176 = por %p174, %p175
    %p177 = scmp.ne.s32.totalorder %s165, %s166
    %p178 = scmp.eq.s32.totalorder %s25, 1
    %p179 = por %p177, %p178
    %p181 = scmp.ne.s32.totalorder %s166, %s180
    %p182 = scmp.eq.s32.totalorder %s25, 0
    %p183 = por %p181, %p182
    %s185 = sadd.s32 %s184, 1
    %p188 = scmp.eq.s32.totalorder %s19, 1
    %p189 = scmp.ne.s32.totalorder %s184, %s186
    %p190 = scmp.eq.s32.totalorder %s19, 0
    %p191 = por %p189, %p190
    %p192 = scmp.ne.s32.totalorder %s184, %s186
    %p193 = scmp.eq.s32.totalorder %s24, 1
    %p194 = por %p192, %p193
    %p195 = scmp.ne.s32.totalorder %s186, %s187
    %p196 = scmp.eq.s32.totalorder %s24, 0
    %p197 = por %p195, %p196
    %p198 = scmp.ne.s32.totalorder %s186, %s187
    %p199 = scmp.eq.s32.totalorder %s25, 1
    %p200 = por %p198, %p199
    %p202 = scmp.ne.s32.totalorder %s187, %s201
    %p203 = scmp.eq.s32.totalorder %s25, 0
    %p204 = por %p202, %p203
    %s206 = sadd.s32 %s205, 1
    %p209 = scmp.eq.s32.totalorder %s19, 1
    %p210 = scmp.ne.s32.totalorder %s205, %s207
    %p211 = scmp.eq.s32.totalorder %s19, 0
    %p212 = por %p210, %p211
    %p213 = scmp.ne.s32.totalorder %s205, %s207
    %p214 = scmp.eq.s32.totalorder %s24, 1
    %p215 = por %p213, %p214
    %p216 = scmp.ne.s32.totalorder %s207, %s208
    %p217 = scmp.eq.s32.totalorder %s24, 0
    %p218 = por %p216, %p217
    %p219 = scmp.ne.s32.totalorder %s207, %s208
    %p220 = scmp.eq.s32.totalorder %s25, 1
    %p221 = por %p219, %p220
    %p223 = scmp.ne.s32.totalorder %s208, %s222
    %p224 = scmp.eq.s32.totalorder %s25, 0
    %p225 = por %p223, %p224
    %s227 = sadd.s32 %s226, 1
    %p230 = scmp.eq.s32.totalorder %s19, 1
    %p231 = scmp.ne.s32.totalorder %s226, %s228
    %p232 = scmp.eq.s32.totalorder %s19, 0
    %p233 = por %p231, %p232
    %p234 = scmp.ne.s32.totalorder %s226, %s228
    %p235 = scmp.eq.s32.totalorder %s24, 1
    %p236 = por %p234, %p235
    %p237 = scmp.ne.s32.totalorder %s228, %s229
    %p238 = scmp.eq.s32.totalorder %s24, 0
    %p239 = por %p237, %p238
    %p240 = scmp.ne.s32.totalorder %s228, %s229
    %p241 = scmp.eq.s32.totalorder %s25, 1
    %p242 = por %p240, %p241
    %p244 = scmp.ne.s32.totalorder %s229, %s243
    %p245 = scmp.eq.s32.totalorder %s25, 0
    %p246 = por %p244, %p245
    %s248 = sadd.s32 %s247, 1
    %p251 = scmp.eq.s32.totalorder %s19, 1
    %p252 = scmp.ne.s32.totalorder %s247, %s249
    %p253 = scmp.eq.s32.totalorder %s19, 0
    %p254 = por %p252, %p253
    %p255 = scmp.ne.s32.totalorder %s247, %s249
    %p256 = scmp.eq.s32.totalorder %s24, 1
    %p257 = por %p255, %p256
    %p258 = scmp.ne.s32.totalorder %s249, %s250
    %p259 = scmp.eq.s32.totalorder %s24, 0
    %p260 = por %p258, %p259
    %p261 = scmp.ne.s32.totalorder %s249, %s250
    %p262 = scmp.eq.s32.totalorder %s25, 1
    %p263 = por %p261, %p262
    %p265 = scmp.ne.s32.totalorder %s250, %s264
    %p266 = scmp.eq.s32.totalorder %s25, 0
    %p267 = por %p265, %p266
    %s268 = ssub.s32 %s19, %s26
    %p269 = scmp.eq.s32.totalorder %s268, 0
    %s271 = sadd.s32 %s270, 1
    %s272 = scalar_select %p269, %s270, %s271
    %p275 = pneg %p269
    %p276 = scmp.eq.s32.totalorder %s19, 1
    %p277 = por %p275, %p276
    %p278 = scmp.ne.s32.totalorder %s270, %s273
    %p279 = scmp.eq.s32.totalorder %s19, 0
    %p280 = por %p278, %p279
    %p281 = scmp.ne.s32.totalorder %s270, %s273
    %p282 = scmp.eq.s32.totalorder %s24, 1
    %p283 = por %p281, %p282
    %p284 = scmp.ne.s32.totalorder %s273, %s274
    %p285 = scmp.eq.s32.totalorder %s24, 0
    %p286 = por %p284, %p285
    %p287 = scmp.ne.s32.totalorder %s273, %s274
    %p288 = scmp.eq.s32.totalorder %s25, 1
    %p289 = por %p287, %p288
    %p291 = scmp.ne.s32.totalorder %s274, %s290
    %p292 = scmp.eq.s32.totalorder %s25, 0
    %p293 = por %p291, %p292
    %s294 = ssub.s32 %s19, %s26
    %p295 = scmp.eq.s32.totalorder %s294, 0
    %s297 = sadd.s32 %s296, 1
    %s298 = scalar_select %p295, %s296, %s297
    %p301 = pneg %p295
    %p302 = scmp.eq.s32.totalorder %s19, 1
    %p303 = por %p301, %p302
    %p304 = scmp.ne.s32.totalorder %s296, %s299
    %p305 = scmp.eq.s32.totalorder %s19, 0
    %p306 = por %p304, %p305
    %p307 = scmp.ne.s32.totalorder %s296, %s299
    %p308 = scmp.eq.s32.totalorder %s24, 1
    %p309 = por %p307, %p308
    %p310 = scmp.ne.s32.totalorder %s299, %s300
    %p311 = scmp.eq.s32.totalorder %s24, 0
    %p312 = por %p310, %p311
    %p313 = scmp.ne.s32.totalorder %s299, %s300
    %p314 = scmp.eq.s32.totalorder %s25, 1
    %p315 = por %p313, %p314
    %p317 = scmp.ne.s32.totalorder %s300, %s316
    %p318 = scmp.eq.s32.totalorder %s25, 0
    %p319 = por %p317, %p318
    %p320 = scmp.le.s32.totalorder 1, %s19
    %p321 = scmp.lt.s32.totalorder %s19, 3
    %p322 = pnand %p320, %p321
    %p323 = pneg %p322
    // Predicated region
    $region9: #{attention_segmentation_forward.4} parent=5 // pred_check
      _
    $region10: #{attention_segmentation_forward.4} parent=5 // pred_check_branch
      %325 = sbr.rel (%p322) target = $region12
    $region11: #{attention_segmentation_forward.4} parent=5 // pred_region
      %s326 = ssub.s32 %s19, 1
      // Predicated region
      $region13: #{attention_segmentation_forward.4} parent=11 // pred_check
        %p327 = pneg %p92
      $region14: #{attention_segmentation_forward.4} parent=11 // pred_check_branch
        %329 = sbr.rel (%p327) target = $region16
      $region15: #{attention_segmentation_forward.4} parent=11 // pred_region
        _
      $region16: #{attention_segmentation_forward.4} parent=11 // pred_fallthru
        _
      // Predicated region
      $region17: #{attention_segmentation_forward.4} parent=11 // pred_check
        %p330 = pneg %p113
      $region18: #{attention_segmentation_forward.4} parent=11 // pred_check_branch
        %332 = sbr.rel (%p330) target = $region20
      $region19: #{attention_segmentation_forward.4} parent=11 // pred_region
        _
      $region20: #{attention_segmentation_forward.4} parent=11 // pred_fallthru
        _
      // Predicated region
      $region21: #{attention_segmentation_forward.4} parent=11 // pred_check
        %p333 = pneg %p134
      $region22: #{attention_segmentation_forward.4} parent=11 // pred_check_branch
        %335 = sbr.rel (%p333) target = $region24
      $region23: #{attention_segmentation_forward.4} parent=11 // pred_region
        _
      $region24: #{attention_segmentation_forward.4} parent=11 // pred_fallthru
        _
      // Predicated region
      $region25: #{attention_segmentation_forward.4} parent=11 // pred_check
        %p336 = pneg %p155
      $region26: #{attention_segmentation_forward.4} parent=11 // pred_check_branch
        %338 = sbr.rel (%p336) target = $region28
      $region27: #{attention_segmentation_forward.4} parent=11 // pred_region
        _
      $region28: #{attention_segmentation_forward.4} parent=11 // pred_fallthru
        _
      // Predicated region
      $region29: #{attention_segmentation_forward.4} parent=11 // pred_check
        %p339 = pneg %p176
      $region30: #{attention_segmentation_forward.4} parent=11 // pred_check_branch
        %341 = sbr.rel (%p339) target = $region32
      $region31: #{attention_segmentation_forward.4} parent=11 // pred_region
        _
      $region32: #{attention_segmentation_forward.4} parent=11 // pred_fallthru
        _
      // Predicated region
      $region33: #{attention_segmentation_forward.4} parent=11 // pred_check
        %p342 = pneg %p197
      $region34: #{attention_segmentation_forward.4} parent=11 // pred_check_branch
        %344 = sbr.rel (%p342) target = $region36
      $region35: #{attention_segmentation_forward.4} parent=11 // pred_region
        _
      $region36: #{attention_segmentation_forward.4} parent=11 // pred_fallthru
        _
      // Predicated region
      $region37: #{attention_segmentation_forward.4} parent=11 // pred_check
        %p345 = pneg %p218
      $region38: #{attention_segmentation_forward.4} parent=11 // pred_check_branch
        %347 = sbr.rel (%p345) target = $region40
      $region39: #{attention_segmentation_forward.4} parent=11 // pred_region
        _
      $region40: #{attention_segmentation_forward.4} parent=11 // pred_fallthru
        _
      // Predicated region
      $region41: #{attention_segmentation_forward.4} parent=11 // pred_check
        %p348 = pneg %p239
      $region42: #{attention_segmentation_forward.4} parent=11 // pred_check_branch
        %350 = sbr.rel (%p348) target = $region44
      $region43: #{attention_segmentation_forward.4} parent=11 // pred_region
        _
      $region44: #{attention_segmentation_forward.4} parent=11 // pred_fallthru
        _
      // Predicated region
      $region45: #{attention_segmentation_forward.4} parent=11 // pred_check
        %p351 = pneg %p260
      $region46: #{attention_segmentation_forward.4} parent=11 // pred_check_branch
        %353 = sbr.rel (%p351) target = $region48
      $region47: #{attention_segmentation_forward.4} parent=11 // pred_region
        _
      $region48: #{attention_segmentation_forward.4} parent=11 // pred_fallthru
        _
    $region12: #{attention_segmentation_forward.4} parent=5 // pred_fallthru
      _
    %p354 = scmp.lt.s32.totalorder %s19, 2
    // Predicated region
    $region49: #{attention_segmentation_forward.4} parent=5 // pred_check
      %p355 = pneg %p354
    $region50: #{attention_segmentation_forward.4} parent=5 // pred_check_branch
      %357 = sbr.rel (%p355) target = $region52
    $region51: #{attention_segmentation_forward.4} parent=5 // pred_region
      // Predicated region
      $region53: #{attention_segmentation_forward.4} parent=51 // pred_check
        %p358 = pneg %p39
      $region54: #{attention_segmentation_forward.4} parent=51 // pred_check_branch
        %360 = sbr.rel (%p358) target = $region56
      $region55: #{attention_segmentation_forward.4} parent=51 // pred_region
        %p361 = scmp.lt.s32.totalorder %s19, 1
        %s362 = scalar_select %p361, %s19, 1
        %s363 = smul.addr %s362, 4
        %s364 = scalar_lea.vmem %s0, %s363
      $region56: #{attention_segmentation_forward.4} parent=51 // pred_fallthru
        _
      // Predicated region
      $region57: #{attention_segmentation_forward.4} parent=51 // pred_check
        %p365 = pneg %p65
      $region58: #{attention_segmentation_forward.4} parent=51 // pred_check_branch
        %367 = sbr.rel (%p365) target = $region60
      $region59: #{attention_segmentation_forward.4} parent=51 // pred_region
        %p368 = scmp.lt.s32.totalorder %s19, 1
        %s369 = scalar_select %p368, %s19, 1
        %s370 = smul.addr %s369, 4
        %s371 = scalar_lea.vmem %s1, %s370
      $region60: #{attention_segmentation_forward.4} parent=51 // pred_fallthru
        _
    $region52: #{attention_segmentation_forward.4} parent=5 // pred_fallthru
      _
    %p372 = scmp.le.s32.totalorder 1, %s19
    %p373 = scmp.lt.s32.totalorder %s19, 3
    %p374 = pnand %p372, %p373
    %p375 = pneg %p374
    // Predicated region
    $region61: #{attention_segmentation_forward.4} parent=5 // pred_check
      _
    $region62: #{attention_segmentation_forward.4} parent=5 // pred_check_branch
      %377 = sbr.rel (%p374) target = $region64
    $region63: #{attention_segmentation_forward.4} parent=5 // pred_region
      %s378 = ssub.s32 %s19, 1
      %p379 = scmp.lt.s32.totalorder %s24, 1
      %s380 = scalar_select %p379, %s24, 1
      %s381 = smul.addr %s380, 4
      %s382 = scalar_lea.vmem %s0, %s381
      %p383 = pneg %p45
      %p384 = pneg %p42
      %p385 = scmp.lt.s32.totalorder %s24, 1
      %s386 = scalar_select %p385, %s24, 1
      %s387 = smul.addr %s386, 4
      %s388 = scalar_lea.vmem %s1, %s387
      %p389 = pneg %p71
      %p390 = pneg %p68
      %p391 = pneg %p92
      %p392 = pneg %p89
      %p393 = pneg %p113
      %p394 = pneg %p110
      %p395 = pneg %p134
      %p396 = pneg %p131
      %p397 = pneg %p155
      %p398 = pneg %p152
      %p399 = pneg %p176
      %p400 = pneg %p173
      %p401 = pneg %p197
      %p402 = pneg %p194
      %p403 = pneg %p218
      %p404 = pneg %p215
      %p405 = pneg %p239
      %p406 = pneg %p236
      %p407 = pneg %p260
      %p408 = pneg %p257
      %p409 = pneg %p286
      %p410 = pneg %p283
      %p411 = scmp.lt.s32.totalorder %s24, 1
      %s412 = scalar_select %p411, %s24, 1
      %s413 = smul.addr %s412, 2
      %s414 = smul.addr %s413, 8
      %s415 = scalar_lea.vmem %s11, %s414
      %p416 = pneg %p312
      %p417 = pneg %p309
      %p418 = scmp.lt.s32.totalorder %s24, 1
      %s419 = scalar_select %p418, %s24, 1
      %s420 = smul.addr %s419, 4
      %s421 = scalar_lea.vmem %s12, %s420
      %p422 = scmp.lt.s32.totalorder %s24, 1
      %s423 = scalar_select %p422, %s24, 1
      %s424 = smul.addr %s423, 4
      %s425 = scalar_lea.vmem %s0, %s424
      %p426 = scmp.lt.s32.totalorder %s24, 1
      %s427 = scalar_select %p426, %s24, 1
      %s428 = smul.addr %s427, 4
      %s429 = scalar_lea.vmem %s1, %s428
      %p430 = scmp.lt.s32.totalorder %s24, 1
      %s431 = scalar_select %p430, %s24, 1
      %s432 = smul.addr %s431, 2
      %s433 = smul.addr %s432, 8
      %s434 = scalar_lea.vmem %s11, %s433
      %p435 = scmp.lt.s32.totalorder %s24, 1
      %s436 = scalar_select %p435, %s24, 1
      %s437 = smul.addr %s436, 4
      %s438 = scalar_lea.vmem %s12, %s437
      %v440 = vld [vmem:[%s425] sm:$0xf]
      %v441 = vld [vmem:[%s2] sm:$0x1]
      %v442 = vperm.slane %v441, 0
      %v443 = vmul.f32 %v440, %v442
      %v444 = vld [vmem:[%s2 + $0x1] sm:$0x1]
      %v445 = vperm.slane %v444, 0
      %v446 = vadd.f32 %v443, %v445
      %v447 = vld [vmem:[%s429] sm:$0xf]
      %v448 = vld [vmem:[%s3] sm:$0x1]
      %v449 = vperm.slane %v448, 0
      %v450 = vmul.f32 %v447, %v449
      %v451 = vld [vmem:[%s3 + $0x1] sm:$0x1]
      %v452 = vperm.slane %v451, 0
      %v453 = vadd.f32 %v450, %v452
      %vm454 = vcmask 518144
      %455 = vst.msk [vmem:[#allocation2] sm:$0x7] %vm454, 0
      %456 = vst.msk [vmem:[#allocation2 + $0x4] sm:$0x7] %vm454, 0
      %s457 = scalar_lea.vmem [#allocation2], 16
      %458 = vst.msk [vmem:[%s457] sm:$0x7] %vm454, 0
      %459 = vst.msk [vmem:[%s457 + $0x4] sm:$0x7] %vm454, 0
      %s460 = scalar_lea.vmem [#allocation2], 8
      %vm461 = vcmask 516096
      %462 = vst.msk [vmem:[%s460] sm:$0x1] %vm461, 0
      %463 = vst.msk [vmem:[%s460 + $0x4] sm:$0x1] %vm461, 0
      %vm464 = vcmask 518146
      %465 = vst.msk [vmem:[%s460] sm:$0x4] %vm464, 0
      %466 = vst.msk [vmem:[%s460 + $0x4] sm:$0x4] %vm464, 0
      %v468 = vrot.slane %v446, 2
      %v470 = vpack.c.bf16 %v446, %v446
      %v471 = vpack.c.bf16 %v468, %v468
      %v474 = vrot.slane %v470, 7
      %v475 = vrot.slane %v471, 7
      %vm478 = vcmask 254977
      %479 = vst.msk [vmem:[%s460] sm:$0x2] %vm478, %v474
      %480 = vst.msk [vmem:[%s460 + $0x4] sm:$0x2] %vm478, %v475
      %v482 = vrot.slane %v453, 2
      %v484 = vpack.c.bf16 %v453, %v453
      %v485 = vpack.c.bf16 %v482, %v482
      %v488 = vrot.slane %v484, 7
      %v489 = vrot.slane %v485, 7
      %490 = vrot.lane.b32.xlu0 %v488, 32
      %v491 = vpop.permute.xlu0 %490
      %492 = vrot.lane.b32.xlu0 %v489, 32
      %v493 = vpop.permute.xlu0 %492
      %vm496 = vcmask 517377
      %497 = vst.msk [vmem:[%s460] sm:$0x2] %vm496, %v491
      %498 = vst.msk [vmem:[%s460 + $0x4] sm:$0x2] %vm496, %v493
      %v499 = vld [vmem:[#allocation2] sm:$0x1]
      %v500 = vld [vmem:[#allocation2 + $0x4] sm:$0x1]
      %v501 = vld [vmem:[#allocation2] sm:$0x3]
      %v502 = vld [vmem:[#allocation2 + $0x4] sm:$0x3]
      %v505 = vrot.slane %v501, 3
      %v506 = vrot.slane %v502, 3
      %vm507 = vcmask 1040384
      %v510 = vsel %vm507, %v501, %v505
      %vm511 = vcmask 1041409
      %v512 = vsel %vm511, %v501, %v505
      %v514 = vrot.slane %v512, 1
      %v517 = vsel %vm507, %v502, %v506
      %v518 = vsel %vm511, %v502, %v506
      %v520 = vrot.slane %v518, 1
      %vm521 = vsmask.f32 256
      %vm522 = vsmask.f32 1284
      %vm523 = vmor %vm521, %vm522
      %vm524 = vsmask.f32 2312
      %vm525 = vmor %vm523, %vm524
      %vm526 = vsmask.f32 3340
      %vm527 = vmor %vm525, %vm526
      %vm528 = vsmask.f32 4368
      %vm529 = vmor %vm527, %vm528
      %vm530 = vsmask.f32 5396
      %vm531 = vmor %vm529, %vm530
      %vm532 = vsmask.f32 6424
      %vm533 = vmor %vm531, %vm532
      %vm534 = vsmask.f32 7452
      %vm535 = vmor %vm533, %vm534
      %v536 = vshrl.u32 %v510, 16
      %v538 = vrot.slane %v536, 7
      %v539 = vrot.slane %v538, 1
      %v541 = vshll.u32 %v514, 16
      %v543 = vsel %vm535, %v539, %v541
      %v544 = vshrl.u32 %v517, 16
      %v546 = vrot.slane %v544, 7
      %v547 = vrot.slane %v546, 1
      %v549 = vshll.u32 %v520, 16
      %v551 = vsel %vm535, %v547, %v549
      %v552 = vld [vmem:[#allocation2] sm:$0x2]
      %v553 = vld [vmem:[#allocation2 + $0x4] sm:$0x2]
      %555 = vst [vmem:[#allocation1] sm:$0xff] %v552
      %s556 = scalar_lea.vmem [#allocation1], 1
      %v557 = vld [vmem:[%s556] ss:$4 sm:$0xff]
      %559 = vst [vmem:[#allocation1 + $0x20] sm:$0xff] %v553
      %s560 = scalar_lea.vmem [#allocation1], 33
      %v561 = vld [vmem:[%s560] ss:$4 sm:$0xff]
      %v562 = vld [vmem:[#allocation2] sm:$0x6]
      %v563 = vld [vmem:[#allocation2 + $0x4] sm:$0x6]
      %565 = vst [vmem:[#allocation1] sm:$0xff] %v562
      %s566 = scalar_lea.vmem [#allocation1], 1
      %v567 = vld [vmem:[%s566] ss:$4 sm:$0xff]
      %s568 = scalar_lea.vmem [#allocation1], 2
      %v569 = vld [vmem:[%s568] ss:$4 sm:$0xff]
      %571 = vst [vmem:[#allocation1 + $0x20] sm:$0xff] %v563
      %s572 = scalar_lea.vmem [#allocation1], 33
      %v573 = vld [vmem:[%s572] ss:$4 sm:$0xff]
      %s574 = scalar_lea.vmem [#allocation1], 34
      %v575 = vld [vmem:[%s574] ss:$4 sm:$0xff]
      %v576 = vshrl.u32 %v567, 16
      %v578 = vrot.slane %v576, 7
      %v579 = vrot.slane %v578, 1
      %v580 = vshll.u32 %v569, 16
      %v582 = vsel %vm535, %v579, %v580
      %v583 = vshrl.u32 %v573, 16
      %v585 = vrot.slane %v583, 7
      %v586 = vrot.slane %v585, 1
      %v587 = vshll.u32 %v575, 16
      %v589 = vsel %vm535, %v586, %v587
      %v590 = vld [vmem:[#allocation2] sm:$0x4]
      %v591 = vld [vmem:[#allocation2 + $0x4] sm:$0x4]
      %593 = vst [vmem:[#allocation1] sm:$0xff] %v590
      %s594 = scalar_lea.vmem [#allocation1], 2
      %v595 = vld [vmem:[%s594] ss:$4 sm:$0xff]
      %597 = vst [vmem:[#allocation1 + $0x20] sm:$0xff] %v591
      %s598 = scalar_lea.vmem [#allocation1], 34
      %v599 = vld [vmem:[%s598] ss:$4 sm:$0xff]
      %601 = vst [vmem:[#allocation1] ss:$9 sm:$0xff] %v499
      %s603 = scalar_lea.vmem [#allocation1], 1
      %604 = vst [vmem:[%s603] ss:$9 sm:$0xff] %v500
      %v605 = vld [vmem:[#allocation1] sm:$0xff]
      %607 = vst [vmem:[#allocation1] ss:$9 sm:$0xff] %v543
      %s609 = scalar_lea.vmem [#allocation1], 1
      %610 = vst [vmem:[%s609] ss:$9 sm:$0xff] %v551
      %v611 = vld [vmem:[#allocation1] sm:$0xff]
      %613 = vrot.lane.b32.xlu0 %v611, 64
      %v614 = vpop.permute.xlu0 %613
      %615 = vst [vmem:[#allocation1] ss:$9 sm:$0xff] %v557
      %s616 = scalar_lea.vmem [#allocation1], 1
      %617 = vst [vmem:[%s616] ss:$9 sm:$0xff] %v561
      %v618 = vld [vmem:[#allocation1] sm:$0xff]
      %620 = vst [vmem:[#allocation1] ss:$9 sm:$0xff] %v582
      %s622 = scalar_lea.vmem [#allocation1], 1
      %623 = vst [vmem:[%s622] ss:$9 sm:$0xff] %v589
      %v624 = vld [vmem:[#allocation1] sm:$0xff]
      %626 = vrot.lane.b32.xlu0 %v624, 64
      %v627 = vpop.permute.xlu0 %626
      %628 = vst [vmem:[#allocation1] ss:$9 sm:$0xff] %v595
      %s629 = scalar_lea.vmem [#allocation1], 1
      %630 = vst [vmem:[%s629] ss:$9 sm:$0xff] %v599
      %v631 = vld [vmem:[#allocation1] sm:$0xff]
      %vm632 = vcmask 523264
      %v634 = vsel %vm632, %v605, %v614
      %v637 = vsel %vm632, %v618, %v627
      %v639 = vld [vmem:[%s4] sm:$0xf]
      %v640 = vld [vmem:[%s4 + $0x4] sm:$0xf]
      %v641 = vld [vmem:[%s4 + $0x8] sm:$0xf]
      %v642 = vld [vmem:[%s4 + $0xc] sm:$0xf]
      %v643 = vld [vmem:[%s4 + $0x10] sm:$0xf]
      %v644 = vld [vmem:[%s4 + $0x14] sm:$0xf]
      %v645 = vld [vmem:[%s4 + $0x18] sm:$0xf]
      %v646 = vld [vmem:[%s4 + $0x1c] sm:$0xf]
      %v647 = vld [vmem:[%s4 + $0x20] sm:$0xf]
      %v648 = vld [vmem:[%s4 + $0x24] sm:$0xf]
      %v649 = vld [vmem:[%s4 + $0x28] sm:$0xf]
      %v650 = vld [vmem:[%s4 + $0x2c] sm:$0xf]
      %v651 = vld [vmem:[%s4 + $0x30] sm:$0xf]
      %v652 = vld [vmem:[%s4 + $0x34] sm:$0xf]
      %v653 = vld [vmem:[%s4 + $0x38] sm:$0xf]
      %v654 = vld [vmem:[%s4 + $0x3c] sm:$0xf]
      %v655 = vld [vmem:[%s4 + $0x40] sm:$0xf]
      %v656 = vld [vmem:[%s4 + $0x44] sm:$0xf]
      %v657 = vld [vmem:[%s4 + $0x48] sm:$0xf]
      %v658 = vld [vmem:[%s4 + $0x4c] sm:$0xf]
      %v659 = vld [vmem:[%s4 + $0x50] sm:$0xf]
      %v660 = vld [vmem:[%s4 + $0x54] sm:$0xf]
      %v661 = vld [vmem:[%s4 + $0x58] sm:$0xf]
      %v662 = vld [vmem:[%s4 + $0x5c] sm:$0xf]
      %v663 = vld [vmem:[%s4 + $0x60] sm:$0xf]
      %v664 = vld [vmem:[%s4 + $0x64] sm:$0xf]
      %v665 = vld [vmem:[%s4 + $0x68] sm:$0xf]
      %v666 = vld [vmem:[%s4 + $0x6c] sm:$0xf]
      %v667 = vld [vmem:[%s4 + $0x70] sm:$0xf]
      %v668 = vld [vmem:[%s4 + $0x74] sm:$0xf]
      %v669 = vld [vmem:[%s4 + $0x78] sm:$0xf]
      %v670 = vld [vmem:[%s4 + $0x7c] sm:$0xf]
      %v671 = vld [vmem:[%s4 + $0x80] sm:$0xf]
      %v672 = vld [vmem:[%s4 + $0x84] sm:$0xf]
      %v673 = vld [vmem:[%s4 + $0x88] sm:$0xf]
      %v674 = vld [vmem:[%s4 + $0x8c] sm:$0xf]
      %v675 = vld [vmem:[%s4 + $0x90] sm:$0xf]
      %v676 = vld [vmem:[%s4 + $0x94] sm:$0xf]
      %v677 = vld [vmem:[%s4 + $0x98] sm:$0xf]
      %v678 = vld [vmem:[%s4 + $0x9c] sm:$0xf]
      %s679 = scalar_lea.vmem [#allocation2], 4
      %v680 = vld [vmem:[%s679] sm:$0x1]
      %v681 = vld [vmem:[%s679 + $0x4] sm:$0x1]
      %v682 = vld [vmem:[%s679] sm:$0x3]
      %v683 = vld [vmem:[%s679 + $0x4] sm:$0x3]
      %v686 = vrot.slane %v682, 3
      %v687 = vrot.slane %v683, 3
      %v690 = vsel %vm507, %v682, %v686
      %v691 = vsel %vm511, %v682, %v686
      %v693 = vrot.slane %v691, 1
      %v696 = vsel %vm507, %v683, %v687
      %v697 = vsel %vm511, %v683, %v687
      %v699 = vrot.slane %v697, 1
      %v700 = vshrl.u32 %v690, 16
      %v702 = vrot.slane %v700, 7
      %v703 = vrot.slane %v702, 1
      %v705 = vshll.u32 %v693, 16
      %v707 = vsel %vm535, %v703, %v705
      %v708 = vshrl.u32 %v696, 16
      %v710 = vrot.slane %v708, 7
      %v711 = vrot.slane %v710, 1
      %v713 = vshll.u32 %v699, 16
      %v715 = vsel %vm535, %v711, %v713
      %v716 = vld [vmem:[%s679] sm:$0x2]
      %v717 = vld [vmem:[%s679 + $0x4] sm:$0x2]
      %719 = vst [vmem:[#allocation1] sm:$0xff] %v716
      %s720 = scalar_lea.vmem [#allocation1], 1
      %v721 = vld [vmem:[%s720] ss:$4 sm:$0xff]
      %723 = vst [vmem:[#allocation1 + $0x20] sm:$0xff] %v717
      %s724 = scalar_lea.vmem [#allocation1], 33
      %v725 = vld [vmem:[%s724] ss:$4 sm:$0xff]
      %v726 = vld [vmem:[%s679] sm:$0x6]
      %v727 = vld [vmem:[%s679 + $0x4] sm:$0x6]
      %729 = vst [vmem:[#allocation1] sm:$0xff] %v726
      %s730 = scalar_lea.vmem [#allocation1], 1
      %v731 = vld [vmem:[%s730] ss:$4 sm:$0xff]
      %s732 = scalar_lea.vmem [#allocation1], 2
      %v733 = vld [vmem:[%s732] ss:$4 sm:$0xff]
      %735 = vst [vmem:[#allocation1 + $0x20] sm:$0xff] %v727
      %s736 = scalar_lea.vmem [#allocation1], 33
      %v737 = vld [vmem:[%s736] ss:$4 sm:$0xff]
      %s738 = scalar_lea.vmem [#allocation1], 34
      %v739 = vld [vmem:[%s738] ss:$4 sm:$0xff]
      %v740 = vshrl.u32 %v731, 16
      %v742 = vrot.slane %v740, 7
      %v743 = vrot.slane %v742, 1
      %v744 = vshll.u32 %v733, 16
      %v746 = vsel %vm535, %v743, %v744
      %v747 = vshrl.u32 %v737, 16
      %v749 = vrot.slane %v747, 7
      %v750 = vrot.slane %v749, 1
      %v751 = vshll.u32 %v739, 16
      %v753 = vsel %vm535, %v750, %v751
      %v754 = vld [vmem:[%s679] sm:$0x4]
      %v755 = vld [vmem:[%s679 + $0x4] sm:$0x4]
      %757 = vst [vmem:[#allocation1] sm:$0xff] %v754
      %s758 = scalar_lea.vmem [#allocation1], 2
      %v759 = vld [vmem:[%s758] ss:$4 sm:$0xff]
      %761 = vst [vmem:[#allocation1 + $0x20] sm:$0xff] %v755
      %s762 = scalar_lea.vmem [#allocation1], 34
      %v763 = vld [vmem:[%s762] ss:$4 sm:$0xff]
      %765 = vst [vmem:[#allocation1] ss:$9 sm:$0xff] %v680
      %s767 = scalar_lea.vmem [#allocation1], 1
      %768 = vst [vmem:[%s767] ss:$9 sm:$0xff] %v681
      %v769 = vld [vmem:[#allocation1] sm:$0xff]
      %771 = vst [vmem:[#allocation1] ss:$9 sm:$0xff] %v707
      %s773 = scalar_lea.vmem [#allocation1], 1
      %774 = vst [vmem:[%s773] ss:$9 sm:$0xff] %v715
      %v775 = vld [vmem:[#allocation1] sm:$0xff]
      %777 = vrot.lane.b32.xlu0 %v775, 64
      %v778 = vpop.permute.xlu0 %777
      %779 = vst [vmem:[#allocation1] ss:$9 sm:$0xff] %v721
      %s780 = scalar_lea.vmem [#allocation1], 1
      %781 = vst [vmem:[%s780] ss:$9 sm:$0xff] %v725
      %v782 = vld [vmem:[#allocation1] sm:$0xff]
      %784 = vst [vmem:[#allocation1] ss:$9 sm:$0xff] %v746
      %s786 = scalar_lea.vmem [#allocation1], 1
      %787 = vst [vmem:[%s786] ss:$9 sm:$0xff] %v753
      %v788 = vld [vmem:[#allocation1] sm:$0xff]
      %790 = vrot.lane.b32.xlu0 %v788, 64
      %v791 = vpop.permute.xlu0 %790
      %792 = vst [vmem:[#allocation1] ss:$9 sm:$0xff] %v759
      %s793 = scalar_lea.vmem [#allocation1], 1
      %794 = vst [vmem:[%s793] ss:$9 sm:$0xff] %v763
      %v795 = vld [vmem:[#allocation1] sm:$0xff]
      %v797 = vsel %vm632, %v769, %v778
      %v800 = vsel %vm632, %v782, %v791
      %s802 = scalar_lea.vmem %s4, 160
      %v803 = vld [vmem:[%s802] sm:$0xf]
      %v804 = vld [vmem:[%s802 + $0x4] sm:$0xf]
      %v805 = vld [vmem:[%s802 + $0x8] sm:$0xf]
      %v806 = vld [vmem:[%s802 + $0xc] sm:$0xf]
      %v807 = vld [vmem:[%s802 + $0x10] sm:$0xf]
      %v808 = vld [vmem:[%s802 + $0x14] sm:$0xf]
      %v809 = vld [vmem:[%s802 + $0x18] sm:$0xf]
      %v810 = vld [vmem:[%s802 + $0x1c] sm:$0xf]
      %v811 = vld [vmem:[%s802 + $0x20] sm:$0xf]
      %v812 = vld [vmem:[%s802 + $0x24] sm:$0xf]
      %v813 = vld [vmem:[%s802 + $0x28] sm:$0xf]
      %v814 = vld [vmem:[%s802 + $0x2c] sm:$0xf]
      %v815 = vld [vmem:[%s802 + $0x30] sm:$0xf]
      %v816 = vld [vmem:[%s802 + $0x34] sm:$0xf]
      %v817 = vld [vmem:[%s802 + $0x38] sm:$0xf]
      %v818 = vld [vmem:[%s802 + $0x3c] sm:$0xf]
      %v819 = vld [vmem:[%s802 + $0x40] sm:$0xf]
      %v820 = vld [vmem:[%s802 + $0x44] sm:$0xf]
      %v821 = vld [vmem:[%s802 + $0x48] sm:$0xf]
      %v822 = vld [vmem:[%s802 + $0x4c] sm:$0xf]
      %v823 = vld [vmem:[%s802 + $0x50] sm:$0xf]
      %v824 = vld [vmem:[%s802 + $0x54] sm:$0xf]
      %v825 = vld [vmem:[%s802 + $0x58] sm:$0xf]
      %v826 = vld [vmem:[%s802 + $0x5c] sm:$0xf]
      %v827 = vld [vmem:[%s802 + $0x60] sm:$0xf]
      %v828 = vld [vmem:[%s802 + $0x64] sm:$0xf]
      %v829 = vld [vmem:[%s802 + $0x68] sm:$0xf]
      %v830 = vld [vmem:[%s802 + $0x6c] sm:$0xf]
      %v831 = vld [vmem:[%s802 + $0x70] sm:$0xf]
      %v832 = vld [vmem:[%s802 + $0x74] sm:$0xf]
      %v833 = vld [vmem:[%s802 + $0x78] sm:$0xf]
      %v834 = vld [vmem:[%s802 + $0x7c] sm:$0xf]
      %v835 = vld [vmem:[%s802 + $0x80] sm:$0xf]
      %v836 = vld [vmem:[%s802 + $0x84] sm:$0xf]
      %v837 = vld [vmem:[%s802 + $0x88] sm:$0xf]
      %v838 = vld [vmem:[%s802 + $0x8c] sm:$0xf]
      %v839 = vld [vmem:[%s802 + $0x90] sm:$0xf]
      %v840 = vld [vmem:[%s802 + $0x94] sm:$0xf]
      %v841 = vld [vmem:[%s802 + $0x98] sm:$0xf]
      %v842 = vld [vmem:[%s802 + $0x9c] sm:$0xf]
      %v883 = vunpack.c.l.b16 %v803
      %v884 = vunpack.c.l.b16 %v804
      %v885 = vunpack.c.l.b16 %v805
      %v886 = vunpack.c.l.b16 %v806
      %v887 = vunpack.c.l.b16 %v807
      %v888 = vunpack.c.l.b16 %v808
      %v889 = vunpack.c.l.b16 %v809
      %v890 = vunpack.c.l.b16 %v810
      %v891 = vunpack.c.l.b16 %v811
      %v892 = vunpack.c.l.b16 %v812
      %v893 = vunpack.c.l.b16 %v813
      %v894 = vunpack.c.l.b16 %v814
      %v895 = vunpack.c.l.b16 %v815
      %v896 = vunpack.c.l.b16 %v816
      %v897 = vunpack.c.l.b16 %v817
      %v898 = vunpack.c.l.b16 %v818
      %v899 = vunpack.c.l.b16 %v819
      %v900 = vunpack.c.l.b16 %v820
      %v901 = vunpack.c.l.b16 %v821
      %v902 = vunpack.c.l.b16 %v822
      %v903 = vunpack.c.l.b16 %v823
      %v904 = vunpack.c.l.b16 %v824
      %v905 = vunpack.c.l.b16 %v825
      %v906 = vunpack.c.l.b16 %v826
      %v907 = vunpack.c.l.b16 %v827
      %v908 = vunpack.c.l.b16 %v828
      %v909 = vunpack.c.l.b16 %v829
      %v910 = vunpack.c.l.b16 %v830
      %v911 = vunpack.c.l.b16 %v831
      %v912 = vunpack.c.l.b16 %v832
      %v913 = vunpack.c.l.b16 %v833
      %v914 = vunpack.c.l.b16 %v834
      %v915 = vunpack.c.l.b16 %v835
      %v916 = vunpack.c.l.b16 %v836
      %v917 = vunpack.c.l.b16 %v837
      %v918 = vunpack.c.l.b16 %v838
      %v919 = vunpack.c.l.b16 %v839
      %v920 = vunpack.c.l.b16 %v840
      %v921 = vunpack.c.l.b16 %v841
      %v922 = vunpack.c.l.b16 %v842
      %v923 = vpack.c.b16 %v884, %v883
      %v924 = vpack.c.b16 %v886, %v885
      %v925 = vpack.c.b16 %v888, %v887
      %v926 = vpack.c.b16 %v890, %v889
      %v927 = vpack.c.b16 %v892, %v891
      %v928 = vpack.c.b16 %v894, %v893
      %v929 = vpack.c.b16 %v896, %v895
      %v930 = vpack.c.b16 %v898, %v897
      %v931 = vpack.c.b16 %v900, %v899
      %v932 = vpack.c.b16 %v902, %v901
      %v933 = vpack.c.b16 %v904, %v903
      %v934 = vpack.c.b16 %v906, %v905
      %v935 = vpack.c.b16 %v908, %v907
      %v936 = vpack.c.b16 %v910, %v909
      %v937 = vpack.c.b16 %v912, %v911
      %v938 = vpack.c.b16 %v914, %v913
      %v939 = vpack.c.b16 %v916, %v915
      %v940 = vpack.c.b16 %v918, %v917
      %v941 = vpack.c.b16 %v920, %v919
      %v942 = vpack.c.b16 %v922, %v921
      %v963 = vsel %vm632, %v795, 0
      %965 = vmatpush.bf16.msra.mxu0 %v930
      %966 = vmatpush.bf16.msra.mxu0 %v929
      %967 = vmatpush.bf16.msra.mxu0 %v928
      %968 = vmatpush.bf16.msra.mxu0 %v927
      %969 = vmatpush.bf16.msra.mxu0 %v926
      %970 = vmatpush.bf16.msra.mxu0 %v925
      %971 = vmatpush.bf16.msra.mxu0 %v924
      %972 = vmatpush.bf16.msra.mxu0 %v923
      %973 = vmatmul.bf16.gmra.mxu0 %v797
      %v974 = vpop.f32.mrf.mxu0
      %v975 = vadd.f32 0.0, %v974
      %v976 = vpop.f32.mrf.mxu0
      %977 = vdwg.mxu0
      %978 = vmatpush.bf16.msra.mxu0 %v938
      %979 = vmatpush.bf16.msra.mxu0 %v937
      %980 = vmatpush.bf16.msra.mxu0 %v936
      %981 = vmatpush.bf16.msra.mxu0 %v935
      %982 = vmatpush.bf16.msra.mxu0 %v934
      %983 = vmatpush.bf16.msra.mxu0 %v933
      %984 = vmatpush.bf16.msra.mxu0 %v932
      %985 = vmatpush.bf16.msra.mxu0 %v931
      %986 = vmatmul.bf16.gmra.mxu0 %v800
      %v987 = vpop.f32.mrf.mxu0
      %v988 = vadd.f32 %v975, %v987
      %v989 = vpop.f32.mrf.mxu0
      %990 = vdwg.mxu0
      %991 = vmatpush.bf16.msra.mxu0 0
      %992 = vmatpush.bf16.msra.mxu0 0
      %993 = vmatpush.bf16.msra.mxu0 0
      %994 = vmatpush.bf16.msra.mxu0 0
      %995 = vmatpush.bf16.msra.mxu0 %v942
      %996 = vmatpush.bf16.msra.mxu0 %v941
      %997 = vmatpush.bf16.msra.mxu0 %v940
      %998 = vmatpush.bf16.msra.mxu0 %v939
      %999 = vmatmul.bf16.gmra.mxu0 %v963
      %v1000 = vpop.f32.mrf.mxu0
      %v1001 = vadd.f32 %v988, %v1000
      %v1002 = vpop.f32.mrf.mxu0
      %1003 = vdwg.mxu0
      %v1044 = vunpack.c.l.b16 %v639
      %v1045 = vunpack.c.l.b16 %v640
      %v1046 = vunpack.c.l.b16 %v641
      %v1047 = vunpack.c.l.b16 %v642
      %v1048 = vunpack.c.l.b16 %v643
      %v1049 = vunpack.c.l.b16 %v644
      %v1050 = vunpack.c.l.b16 %v645
      %v1051 = vunpack.c.l.b16 %v646
      %v1052 = vunpack.c.l.b16 %v647
      %v1053 = vunpack.c.l.b16 %v648
      %v1054 = vunpack.c.l.b16 %v649
      %v1055 = vunpack.c.l.b16 %v650
      %v1056 = vunpack.c.l.b16 %v651
      %v1057 = vunpack.c.l.b16 %v652
      %v1058 = vunpack.c.l.b16 %v653
      %v1059 = vunpack.c.l.b16 %v654
      %v1060 = vunpack.c.l.b16 %v655
      %v1061 = vunpack.c.l.b16 %v656
      %v1062 = vunpack.c.l.b16 %v657
      %v1063 = vunpack.c.l.b16 %v658
      %v1064 = vunpack.c.l.b16 %v659
      %v1065 = vunpack.c.l.b16 %v660
      %v1066 = vunpack.c.l.b16 %v661
      %v1067 = vunpack.c.l.b16 %v662
      %v1068 = vunpack.c.l.b16 %v663
      %v1069 = vunpack.c.l.b16 %v664
      %v1070 = vunpack.c.l.b16 %v665
      %v1071 = vunpack.c.l.b16 %v666
      %v1072 = vunpack.c.l.b16 %v667
      %v1073 = vunpack.c.l.b16 %v668
      %v1074 = vunpack.c.l.b16 %v669
      %v1075 = vunpack.c.l.b16 %v670
      %v1076 = vunpack.c.l.b16 %v671
      %v1077 = vunpack.c.l.b16 %v672
      %v1078 = vunpack.c.l.b16 %v673
      %v1079 = vunpack.c.l.b16 %v674
      %v1080 = vunpack.c.l.b16 %v675
      %v1081 = vunpack.c.l.b16 %v676
      %v1082 = vunpack.c.l.b16 %v677
      %v1083 = vunpack.c.l.b16 %v678
      %v1084 = vpack.c.b16 %v1045, %v1044
      %v1085 = vpack.c.b16 %v1047, %v1046
      %v1086 = vpack.c.b16 %v1049, %v1048
      %v1087 = vpack.c.b16 %v1051, %v1050
      %v1088 = vpack.c.b16 %v1053, %v1052
      %v1089 = vpack.c.b16 %v1055, %v1054
      %v1090 = vpack.c.b16 %v1057, %v1056
      %v1091 = vpack.c.b16 %v1059, %v1058
      %v1092 = vpack.c.b16 %v1061, %v1060
      %v1093 = vpack.c.b16 %v1063, %v1062
      %v1094 = vpack.c.b16 %v1065, %v1064
      %v1095 = vpack.c.b16 %v1067, %v1066
      %v1096 = vpack.c.b16 %v1069, %v1068
      %v1097 = vpack.c.b16 %v1071, %v1070
      %v1098 = vpack.c.b16 %v1073, %v1072
      %v1099 = vpack.c.b16 %v1075, %v1074
      %v1100 = vpack.c.b16 %v1077, %v1076
      %v1101 = vpack.c.b16 %v1079, %v1078
      %v1102 = vpack.c.b16 %v1081, %v1080
      %v1103 = vpack.c.b16 %v1083, %v1082
      %v1124 = vsel %vm632, %v631, 0
      %1126 = vmatpush.bf16.msra.mxu0 %v1091
      %1127 = vmatpush.bf16.msra.mxu0 %v1090
      %1128 = vmatpush.bf16.msra.mxu0 %v1089
      %1129 = vmatpush.bf16.msra.mxu0 %v1088
      %1130 = vmatpush.bf16.msra.mxu0 %v1087
      %1131 = vmatpush.bf16.msra.mxu0 %v1086
      %1132 = vmatpush.bf16.msra.mxu0 %v1085
      %1133 = vmatpush.bf16.msra.mxu0 %v1084
      %1134 = vmatmul.bf16.gmra.mxu0 %v634
      %v1135 = vpop.f32.mrf.mxu0
      %v1136 = vadd.f32 %v1001, %v1135
      %v1137 = vpop.f32.mrf.mxu0
      %1138 = vdwg.mxu0
      %1139 = vmatpush.bf16.msra.mxu0 %v1099
      %1140 = vmatpush.bf16.msra.mxu0 %v1098
      %1141 = vmatpush.bf16.msra.mxu0 %v1097
      %1142 = vmatpush.bf16.msra.mxu0 %v1096
      %1143 = vmatpush.bf16.msra.mxu0 %v1095
      %1144 = vmatpush.bf16.msra.mxu0 %v1094
      %1145 = vmatpush.bf16.msra.mxu0 %v1093
      %1146 = vmatpush.bf16.msra.mxu0 %v1092
      %1147 = vmatmul.bf16.gmra.mxu0 %v637
      %v1148 = vpop.f32.mrf.mxu0
      %v1149 = vadd.f32 %v1136, %v1148
      %v1150 = vpop.f32.mrf.mxu0
      %1151 = vdwg.mxu0
      %1152 = vmatpush.bf16.msra.mxu0 0
      %1153 = vmatpush.bf16.msra.mxu0 0
      %1154 = vmatpush.bf16.msra.mxu0 0
      %1155 = vmatpush.bf16.msra.mxu0 0
      %1156 = vmatpush.bf16.msra.mxu0 %v1103
      %1157 = vmatpush.bf16.msra.mxu0 %v1102
      %1158 = vmatpush.bf16.msra.mxu0 %v1101
      %1159 = vmatpush.bf16.msra.mxu0 %v1100
      %1160 = vmatmul.bf16.gmra.mxu0 %v1124
      %v1161 = vpop.f32.mrf.mxu0
      %v1162 = vadd.f32 %v1149, %v1161
      %v1163 = vpop.f32.mrf.mxu0
      %1164 = vdwg.mxu0
      %v1165 = vld [vmem:[%s460] sm:$0x1]
      %v1166 = vld [vmem:[%s460 + $0x4] sm:$0x1]
      %v1167 = vld [vmem:[%s460] sm:$0x3]
      %v1168 = vld [vmem:[%s460 + $0x4] sm:$0x3]
      %v1171 = vrot.slane %v1167, 3
      %v1172 = vrot.slane %v1168, 3
      %v1175 = vsel %vm507, %v1167, %v1171
      %v1176 = vsel %vm511, %v1167, %v1171
      %v1178 = vrot.slane %v1176, 1
      %v1181 = vsel %vm507, %v1168, %v1172
      %v1182 = vsel %vm511, %v1168, %v1172
      %v1184 = vrot.slane %v1182, 1
      %v1185 = vshrl.u32 %v1175, 16
      %v1187 = vrot.slane %v1185, 7
      %v1188 = vrot.slane %v1187, 1
      %v1190 = vshll.u32 %v1178, 16
      %v1192 = vsel %vm535, %v1188, %v1190
      %v1193 = vshrl.u32 %v1181, 16
      %v1195 = vrot.slane %v1193, 7
      %v1196 = vrot.slane %v1195, 1
      %v1198 = vshll.u32 %v1184, 16
      %v1200 = vsel %vm535, %v1196, %v1198
      %v1201 = vld [vmem:[%s460] sm:$0x2]
      %v1202 = vld [vmem:[%s460 + $0x4] sm:$0x2]
      %1204 = vst [vmem:[#allocation1] sm:$0xff] %v1201
      %s1205 = scalar_lea.vmem [#allocation1], 1
      %v1206 = vld [vmem:[%s1205] ss:$4 sm:$0xff]
      %1208 = vst [vmem:[#allocation1 + $0x20] sm:$0xff] %v1202
      %s1209 = scalar_lea.vmem [#allocation1], 33
      %v1210 = vld [vmem:[%s1209] ss:$4 sm:$0xff]
      %v1211 = vld [vmem:[%s460] sm:$0x6]
      %v1212 = vld [vmem:[%s460 + $0x4] sm:$0x6]
      %1214 = vst [vmem:[#allocation1] sm:$0xff] %v1211
      %s1215 = scalar_lea.vmem [#allocation1], 1
      %v1216 = vld [vmem:[%s1215] ss:$4 sm:$0xff]
      %s1217 = scalar_lea.vmem [#allocation1], 2
      %v1218 = vld [vmem:[%s1217] ss:$4 sm:$0xff]
      %1220 = vst [vmem:[#allocation1 + $0x20] sm:$0xff] %v1212
      %s1221 = scalar_lea.vmem [#allocation1], 33
      %v1222 = vld [vmem:[%s1221] ss:$4 sm:$0xff]
      %s1223 = scalar_lea.vmem [#allocation1], 34
      %v1224 = vld [vmem:[%s1223] ss:$4 sm:$0xff]
      %v1225 = vshrl.u32 %v1216, 16
      %v1227 = vrot.slane %v1225, 7
      %v1228 = vrot.slane %v1227, 1
      %v1229 = vshll.u32 %v1218, 16
      %v1231 = vsel %vm535, %v1228, %v1229
      %v1232 = vshrl.u32 %v1222, 16
      %v1234 = vrot.slane %v1232, 7
      %v1235 = vrot.slane %v1234, 1
      %v1236 = vshll.u32 %v1224, 16
      %v1238 = vsel %vm535, %v1235, %v1236
      %v1239 = vld [vmem:[%s460] sm:$0x4]
      %v1240 = vld [vmem:[%s460 + $0x4] sm:$0x4]
      %1242 = vst [vmem:[#allocation1] sm:$0xff] %v1239
      %s1243 = scalar_lea.vmem [#allocation1], 2
      %v1244 = vld [vmem:[%s1243] ss:$4 sm:$0xff]
      %1246 = vst [vmem:[#allocation1 + $0x20] sm:$0xff] %v1240
      %s1247 = scalar_lea.vmem [#allocation1], 34
      %v1248 = vld [vmem:[%s1247] ss:$4 sm:$0xff]
      %1250 = vst [vmem:[#allocation1] ss:$9 sm:$0xff] %v1165
      %s1252 = scalar_lea.vmem [#allocation1], 1
      %1253 = vst [vmem:[%s1252] ss:$9 sm:$0xff] %v1166
      %v1254 = vld [vmem:[#allocation1] sm:$0xff]
      %1256 = vst [vmem:[#allocation1] ss:$9 sm:$0xff] %v1192
      %s1258 = scalar_lea.vmem [#allocation1], 1
      %1259 = vst [vmem:[%s1258] ss:$9 sm:$0xff] %v1200
      %v1260 = vld [vmem:[#allocation1] sm:$0xff]
      %1262 = vrot.lane.b32.xlu0 %v1260, 64
      %v1263 = vpop.permute.xlu0 %1262
      %1264 = vst [vmem:[#allocation1] ss:$9 sm:$0xff] %v1206
      %s1265 = scalar_lea.vmem [#allocation1], 1
      %1266 = vst [vmem:[%s1265] ss:$9 sm:$0xff] %v1210
      %v1267 = vld [vmem:[#allocation1] sm:$0xff]
      %1269 = vst [vmem:[#allocation1] ss:$9 sm:$0xff] %v1231
      %s1271 = scalar_lea.vmem [#allocation1], 1
      %1272 = vst [vmem:[%s1271] ss:$9 sm:$0xff] %v1238
      %v1273 = vld [vmem:[#allocation1] sm:$0xff]
      %1275 = vrot.lane.b32.xlu0 %v1273, 64
      %v1276 = vpop.permute.xlu0 %1275
      %1277 = vst [vmem:[#allocation1] ss:$9 sm:$0xff] %v1244
      %s1278 = scalar_lea.vmem [#allocation1], 1
      %1279 = vst [vmem:[%s1278] ss:$9 sm:$0xff] %v1248
      %v1280 = vld [vmem:[#allocation1] sm:$0xff]
      %v1282 = vsel %vm632, %v1254, %v1263
      %v1285 = vsel %vm632, %v1267, %v1276
      %s1287 = scalar_lea.vmem %s4, 320
      %v1288 = vld [vmem:[%s1287] sm:$0xf]
      %v1289 = vld [vmem:[%s1287 + $0x4] sm:$0xf]
      %v1290 = vld [vmem:[%s1287 + $0x8] sm:$0xf]
      %v1291 = vld [vmem:[%s1287 + $0xc] sm:$0xf]
      %v1292 = vld [vmem:[%s1287 + $0x10] sm:$0xf]
      %v1293 = vld [vmem:[%s1287 + $0x14] sm:$0xf]
      %v1294 = vld [vmem:[%s1287 + $0x18] sm:$0xf]
      %v1295 = vld [vmem:[%s1287 + $0x1c] sm:$0xf]
      %v1296 = vld [vmem:[%s1287 + $0x20] sm:$0xf]
      %v1297 = vld [vmem:[%s1287 + $0x24] sm:$0xf]
      %v1298 = vld [vmem:[%s1287 + $0x28] sm:$0xf]
      %v1299 = vld [vmem:[%s1287 + $0x2c] sm:$0xf]
      %v1300 = vld [vmem:[%s1287 + $0x30] sm:$0xf]
      %v1301 = vld [vmem:[%s1287 + $0x34] sm:$0xf]
      %v1302 = vld [vmem:[%s1287 + $0x38] sm:$0xf]
      %v1303 = vld [vmem:[%s1287 + $0x3c] sm:$0xf]
      %v1304 = vld [vmem:[%s1287 + $0x40] sm:$0xf]
      %v1305 = vld [vmem:[%s1287 + $0x44] sm:$0xf]
      %v1306 = vld [vmem:[%s1287 + $0x48] sm:$0xf]
      %v1307 = vld [vmem:[%s1287 + $0x4c] sm:$0xf]
      %v1308 = vld [vmem:[%s1287 + $0x50] sm:$0xf]
      %v1309 = vld [vmem:[%s1287 + $0x54] sm:$0xf]
      %v1310 = vld [vmem:[%s1287 + $0x58] sm:$0xf]
      %v1311 = vld [vmem:[%s1287 + $0x5c] sm:$0xf]
      %v1312 = vld [vmem:[%s1287 + $0x60] sm:$0xf]
      %v1313 = vld [vmem:[%s1287 + $0x64] sm:$0xf]
      %v1314 = vld [vmem:[%s1287 + $0x68] sm:$0xf]
      %v1315 = vld [vmem:[%s1287 + $0x6c] sm:$0xf]
      %v1316 = vld [vmem:[%s1287 + $0x70] sm:$0xf]
      %v1317 = vld [vmem:[%s1287 + $0x74] sm:$0xf]
      %v1318 = vld [vmem:[%s1287 + $0x78] sm:$0xf]
      %v1319 = vld [vmem:[%s1287 + $0x7c] sm:$0xf]
      %v1320 = vld [vmem:[%s1287 + $0x80] sm:$0xf]
      %v1321 = vld [vmem:[%s1287 + $0x84] sm:$0xf]
      %v1322 = vld [vmem:[%s1287 + $0x88] sm:$0xf]
      %v1323 = vld [vmem:[%s1287 + $0x8c] sm:$0xf]
      %v1324 = vld [vmem:[%s1287 + $0x90] sm:$0xf]
      %v1325 = vld [vmem:[%s1287 + $0x94] sm:$0xf]
      %v1326 = vld [vmem:[%s1287 + $0x98] sm:$0xf]
      %v1327 = vld [vmem:[%s1287 + $0x9c] sm:$0xf]
      %v1368 = vunpack.c.l.b16 %v1288
      %v1369 = vunpack.c.l.b16 %v1289
      %v1370 = vunpack.c.l.b16 %v1290
      %v1371 = vunpack.c.l.b16 %v1291
      %v1372 = vunpack.c.l.b16 %v1292
      %v1373 = vunpack.c.l.b16 %v1293
      %v1374 = vunpack.c.l.b16 %v1294
      %v1375 = vunpack.c.l.b16 %v1295
      %v1376 = vunpack.c.l.b16 %v1296
      %v1377 = vunpack.c.l.b16 %v1297
      %v1378 = vunpack.c.l.b16 %v1298
      %v1379 = vunpack.c.l.b16 %v1299
      %v1380 = vunpack.c.l.b16 %v1300
      %v1381 = vunpack.c.l.b16 %v1301
      %v1382 = vunpack.c.l.b16 %v1302
      %v1383 = vunpack.c.l.b16 %v1303
      %v1384 = vunpack.c.l.b16 %v1304
      %v1385 = vunpack.c.l.b16 %v1305
      %v1386 = vunpack.c.l.b16 %v1306
      %v1387 = vunpack.c.l.b16 %v1307
      %v1388 = vunpack.c.l.b16 %v1308
      %v1389 = vunpack.c.l.b16 %v1309
      %v1390 = vunpack.c.l.b16 %v1310
      %v1391 = vunpack.c.l.b16 %v1311
      %v1392 = vunpack.c.l.b16 %v1312
      %v1393 = vunpack.c.l.b16 %v1313
      %v1394 = vunpack.c.l.b16 %v1314
      %v1395 = vunpack.c.l.b16 %v1315
      %v1396 = vunpack.c.l.b16 %v1316
      %v1397 = vunpack.c.l.b16 %v1317
      %v1398 = vunpack.c.l.b16 %v1318
      %v1399 = vunpack.c.l.b16 %v1319
      %v1400 = vunpack.c.l.b16 %v1320
      %v1401 = vunpack.c.l.b16 %v1321
      %v1402 = vunpack.c.l.b16 %v1322
      %v1403 = vunpack.c.l.b16 %v1323
      %v1404 = vunpack.c.l.b16 %v1324
      %v1405 = vunpack.c.l.b16 %v1325
      %v1406 = vunpack.c.l.b16 %v1326
      %v1407 = vunpack.c.l.b16 %v1327
      %v1408 = vpack.c.b16 %v1369, %v1368
      %v1409 = vpack.c.b16 %v1371, %v1370
      %v1410 = vpack.c.b16 %v1373, %v1372
      %v1411 = vpack.c.b16 %v1375, %v1374
      %v1412 = vpack.c.b16 %v1377, %v1376
      %v1413 = vpack.c.b16 %v1379, %v1378
      %v1414 = vpack.c.b16 %v1381, %v1380
      %v1415 = vpack.c.b16 %v1383, %v1382
      %v1416 = vpack.c.b16 %v1385, %v1384
      %v1417 = vpack.c.b16 %v1387, %v1386
      %v1418 = vpack.c.b16 %v1389, %v1388
      %v1419 = vpack.c.b16 %v1391, %v1390
      %v1420 = vpack.c.b16 %v1393, %v1392
      %v1421 = vpack.c.b16 %v1395, %v1394
      %v1422 = vpack.c.b16 %v1397, %v1396
      %v1423 = vpack.c.b16 %v1399, %v1398
      %v1424 = vpack.c.b16 %v1401, %v1400
      %v1425 = vpack.c.b16 %v1403, %v1402
      %v1426 = vpack.c.b16 %v1405, %v1404
      %v1427 = vpack.c.b16 %v1407, %v1406
      %v1448 = vsel %vm632, %v1280, 0
      %1450 = vmatpush.bf16.msra.mxu0 %v1415
      %1451 = vmatpush.bf16.msra.mxu0 %v1414
      %1452 = vmatpush.bf16.msra.mxu0 %v1413
      %1453 = vmatpush.bf16.msra.mxu0 %v1412
      %1454 = vmatpush.bf16.msra.mxu0 %v1411
      %1455 = vmatpush.bf16.msra.mxu0 %v1410
      %1456 = vmatpush.bf16.msra.mxu0 %v1409
      %1457 = vmatpush.bf16.msra.mxu0 %v1408
      %1458 = vmatmul.bf16.gmra.mxu0 %v1282
      %v1459 = vpop.f32.mrf.mxu0
      %v1460 = vadd.f32 0.0, %v1459
      %v1461 = vpop.f32.mrf.mxu0
      %1462 = vdwg.mxu0
      %1463 = vmatpush.bf16.msra.mxu0 %v1423
      %1464 = vmatpush.bf16.msra.mxu0 %v1422
      %1465 = vmatpush.bf16.msra.mxu0 %v1421
      %1466 = vmatpush.bf16.msra.mxu0 %v1420
      %1467 = vmatpush.bf16.msra.mxu0 %v1419
      %1468 = vmatpush.bf16.msra.mxu0 %v1418
      %1469 = vmatpush.bf16.msra.mxu0 %v1417
      %1470 = vmatpush.bf16.msra.mxu0 %v1416
      %1471 = vmatmul.bf16.gmra.mxu0 %v1285
      %v1472 = vpop.f32.mrf.mxu0
      %v1473 = vadd.f32 %v1460, %v1472
      %v1474 = vpop.f32.mrf.mxu0
      %1475 = vdwg.mxu0
      %1476 = vmatpush.bf16.msra.mxu0 0
      %1477 = vmatpush.bf16.msra.mxu0 0
      %1478 = vmatpush.bf16.msra.mxu0 0
      %1479 = vmatpush.bf16.msra.mxu0 0
      %1480 = vmatpush.bf16.msra.mxu0 %v1427
      %1481 = vmatpush.bf16.msra.mxu0 %v1426
      %1482 = vmatpush.bf16.msra.mxu0 %v1425
      %1483 = vmatpush.bf16.msra.mxu0 %v1424
      %1484 = vmatmul.bf16.gmra.mxu0 %v1448
      %v1485 = vpop.f32.mrf.mxu0
      %v1486 = vadd.f32 %v1473, %v1485
      %v1487 = vpop.f32.mrf.mxu0
      %1488 = vdwg.mxu0
      %v1489 = vadd.f32 %v1162, %v1486
      %s1490 = scalar_lea.vmem [#allocation2], 12
      %v1491 = vld [vmem:[%s1490] sm:$0x1]
      %v1492 = vld [vmem:[%s1490 + $0x4] sm:$0x1]
      %v1493 = vld [vmem:[%s1490] sm:$0x3]
      %v1494 = vld [vmem:[%s1490 + $0x4] sm:$0x3]
      %v1497 = vrot.slane %v1493, 3
      %v1498 = vrot.slane %v1494, 3
      %v1501 = vsel %vm507, %v1493, %v1497
      %v1502 = vsel %vm511, %v1493, %v1497
      %v1504 = vrot.slane %v1502, 1
      %v1507 = vsel %vm507, %v1494, %v1498
      %v1508 = vsel %vm511, %v1494, %v1498
      %v1510 = vrot.slane %v1508, 1
      %v1511 = vshrl.u32 %v1501, 16
      %v1513 = vrot.slane %v1511, 7
      %v1514 = vrot.slane %v1513, 1
      %v1516 = vshll.u32 %v1504, 16
      %v1518 = vsel %vm535, %v1514, %v1516
      %v1519 = vshrl.u32 %v1507, 16
      %v1521 = vrot.slane %v1519, 7
      %v1522 = vrot.slane %v1521, 1
      %v1524 = vshll.u32 %v1510, 16
      %v1526 = vsel %vm535, %v1522, %v1524
      %v1527 = vld [vmem:[%s1490] sm:$0x2]
      %v1528 = vld [vmem:[%s1490 + $0x4] sm:$0x2]
      %1530 = vst [vmem:[#allocation1] sm:$0xff] %v1527
      %s1531 = scalar_lea.vmem [#allocation1], 1
      %v1532 = vld [vmem:[%s1531] ss:$4 sm:$0xff]
      %1534 = vst [vmem:[#allocation1 + $0x20] sm:$0xff] %v1528
      %s1535 = scalar_lea.vmem [#allocation1], 33
      %v1536 = vld [vmem:[%s1535] ss:$4 sm:$0xff]
      %v1537 = vld [vmem:[%s1490] sm:$0x6]
      %v1538 = vld [vmem:[%s1490 + $0x4] sm:$0x6]
      %1540 = vst [vmem:[#allocation1] sm:$0xff] %v1537
      %s1541 = scalar_lea.vmem [#allocation1], 1
      %v1542 = vld [vmem:[%s1541] ss:$4 sm:$0xff]
      %s1543 = scalar_lea.vmem [#allocation1], 2
      %v1544 = vld [vmem:[%s1543] ss:$4 sm:$0xff]
      %1546 = vst [vmem:[#allocation1 + $0x20] sm:$0xff] %v1538
      %s1547 = scalar_lea.vmem [#allocation1], 33
      %v1548 = vld [vmem:[%s1547] ss:$4 sm:$0xff]
      %s1549 = scalar_lea.vmem [#allocation1], 34
      %v1550 = vld [vmem:[%s1549] ss:$4 sm:$0xff]
      %v1551 = vshrl.u32 %v1542, 16
      %v1553 = vrot.slane %v1551, 7
      %v1554 = vrot.slane %v1553, 1
      %v1555 = vshll.u32 %v1544, 16
      %v1557 = vsel %vm535, %v1554, %v1555
      %v1558 = vshrl.u32 %v1548, 16
      %v1560 = vrot.slane %v1558, 7
      %v1561 = vrot.slane %v1560, 1
      %v1562 = vshll.u32 %v1550, 16
      %v1564 = vsel %vm535, %v1561, %v1562
      %v1565 = vld [vmem:[%s1490] sm:$0x4]
      %v1566 = vld [vmem:[%s1490 + $0x4] sm:$0x4]
      %1568 = vst [vmem:[#allocation1] sm:$0xff] %v1565
      %s1569 = scalar_lea.vmem [#allocation1], 2
      %v1570 = vld [vmem:[%s1569] ss:$4 sm:$0xff]
      %1572 = vst [vmem:[#allocation1 + $0x20] sm:$0xff] %v1566
      %s1573 = scalar_lea.vmem [#allocation1], 34
      %v1574 = vld [vmem:[%s1573] ss:$4 sm:$0xff]
      %1576 = vst [vmem:[#allocation1] ss:$9 sm:$0xff] %v1491
      %s1578 = scalar_lea.vmem [#allocation1], 1
      %1579 = vst [vmem:[%s1578] ss:$9 sm:$0xff] %v1492
      %v1580 = vld [vmem:[#allocation1] sm:$0xff]
      %1582 = vst [vmem:[#allocation1] ss:$9 sm:$0xff] %v1518
      %s1584 = scalar_lea.vmem [#allocation1], 1
      %1585 = vst [vmem:[%s1584] ss:$9 sm:$0xff] %v1526
      %v1586 = vld [vmem:[#allocation1] sm:$0xff]
      %1588 = vrot.lane.b32.xlu0 %v1586, 64
      %v1589 = vpop.permute.xlu0 %1588
      %1590 = vst [vmem:[#allocation1] ss:$9 sm:$0xff] %v1532
      %s1591 = scalar_lea.vmem [#allocation1], 1
      %1592 = vst [vmem:[%s1591] ss:$9 sm:$0xff] %v1536
      %v1593 = vld [vmem:[#allocation1] sm:$0xff]
      %1595 = vst [vmem:[#allocation1] ss:$9 sm:$0xff] %v1557
      %s1597 = scalar_lea.vmem [#allocation1], 1
      %1598 = vst [vmem:[%s1597] ss:$9 sm:$0xff] %v1564
      %v1599 = vld [vmem:[#allocation1] sm:$0xff]
      %1601 = vrot.lane.b32.xlu0 %v1599, 64
      %v1602 = vpop.permute.xlu0 %1601
      %1603 = vst [vmem:[#allocation1] ss:$9 sm:$0xff] %v1570
      %s1604 = scalar_lea.vmem [#allocation1], 1
      %1605 = vst [vmem:[%s1604] ss:$9 sm:$0xff] %v1574
      %v1606 = vld [vmem:[#allocation1] sm:$0xff]
      %v1608 = vsel %vm632, %v1580, %v1589
      %v1611 = vsel %vm632, %v1593, %v1602
      %s1613 = scalar_lea.vmem %s4, 480
      %v1614 = vld [vmem:[%s1613] sm:$0xf]
      %v1615 = vld [vmem:[%s1613 + $0x4] sm:$0xf]
      %v1616 = vld [vmem:[%s1613 + $0x8] sm:$0xf]
      %v1617 = vld [vmem:[%s1613 + $0xc] sm:$0xf]
      %v1618 = vld [vmem:[%s1613 + $0x10] sm:$0xf]
      %v1619 = vld [vmem:[%s1613 + $0x14] sm:$0xf]
      %v1620 = vld [vmem:[%s1613 + $0x18] sm:$0xf]
      %v1621 = vld [vmem:[%s1613 + $0x1c] sm:$0xf]
      %v1622 = vld [vmem:[%s1613 + $0x20] sm:$0xf]
      %v1623 = vld [vmem:[%s1613 + $0x24] sm:$0xf]
      %v1624 = vld [vmem:[%s1613 + $0x28] sm:$0xf]
      %v1625 = vld [vmem:[%s1613 + $0x2c] sm:$0xf]
      %v1626 = vld [vmem:[%s1613 + $0x30] sm:$0xf]
      %v1627 = vld [vmem:[%s1613 + $0x34] sm:$0xf]
      %v1628 = vld [vmem:[%s1613 + $0x38] sm:$0xf]
      %v1629 = vld [vmem:[%s1613 + $0x3c] sm:$0xf]
      %v1630 = vld [vmem:[%s1613 + $0x40] sm:$0xf]
      %v1631 = vld [vmem:[%s1613 + $0x44] sm:$0xf]
      %v1632 = vld [vmem:[%s1613 + $0x48] sm:$0xf]
      %v1633 = vld [vmem:[%s1613 + $0x4c] sm:$0xf]
      %v1634 = vld [vmem:[%s1613 + $0x50] sm:$0xf]
      %v1635 = vld [vmem:[%s1613 + $0x54] sm:$0xf]
      %v1636 = vld [vmem:[%s1613 + $0x58] sm:$0xf]
      %v1637 = vld [vmem:[%s1613 + $0x5c] sm:$0xf]
      %v1638 = vld [vmem:[%s1613 + $0x60] sm:$0xf]
      %v1639 = vld [vmem:[%s1613 + $0x64] sm:$0xf]
      %v1640 = vld [vmem:[%s1613 + $0x68] sm:$0xf]
      %v1641 = vld [vmem:[%s1613 + $0x6c] sm:$0xf]
      %v1642 = vld [vmem:[%s1613 + $0x70] sm:$0xf]
      %v1643 = vld [vmem:[%s1613 + $0x74] sm:$0xf]
      %v1644 = vld [vmem:[%s1613 + $0x78] sm:$0xf]
      %v1645 = vld [vmem:[%s1613 + $0x7c] sm:$0xf]
      %v1646 = vld [vmem:[%s1613 + $0x80] sm:$0xf]
      %v1647 = vld [vmem:[%s1613 + $0x84] sm:$0xf]
      %v1648 = vld [vmem:[%s1613 + $0x88] sm:$0xf]
      %v1649 = vld [vmem:[%s1613 + $0x8c] sm:$0xf]
      %v1650 = vld [vmem:[%s1613 + $0x90] sm:$0xf]
      %v1651 = vld [vmem:[%s1613 + $0x94] sm:$0xf]
      %v1652 = vld [vmem:[%s1613 + $0x98] sm:$0xf]
      %v1653 = vld [vmem:[%s1613 + $0x9c] sm:$0xf]
      %v1694 = vunpack.c.l.b16 %v1614
      %v1695 = vunpack.c.l.b16 %v1615
      %v1696 = vunpack.c.l.b16 %v1616
      %v1697 = vunpack.c.l.b16 %v1617
      %v1698 = vunpack.c.l.b16 %v1618
      %v1699 = vunpack.c.l.b16 %v1619
      %v1700 = vunpack.c.l.b16 %v1620
      %v1701 = vunpack.c.l.b16 %v1621
      %v1702 = vunpack.c.l.b16 %v1622
      %v1703 = vunpack.c.l.b16 %v1623
      %v1704 = vunpack.c.l.b16 %v1624
      %v1705 = vunpack.c.l.b16 %v1625
      %v1706 = vunpack.c.l.b16 %v1626
      %v1707 = vunpack.c.l.b16 %v1627
      %v1708 = vunpack.c.l.b16 %v1628
      %v1709 = vunpack.c.l.b16 %v1629
      %v1710 = vunpack.c.l.b16 %v1630
      %v1711 = vunpack.c.l.b16 %v1631
      %v1712 = vunpack.c.l.b16 %v1632
      %v1713 = vunpack.c.l.b16 %v1633
      %v1714 = vunpack.c.l.b16 %v1634
      %v1715 = vunpack.c.l.b16 %v1635
      %v1716 = vunpack.c.l.b16 %v1636
      %v1717 = vunpack.c.l.b16 %v1637
      %v1718 = vunpack.c.l.b16 %v1638
      %v1719 = vunpack.c.l.b16 %v1639
      %v1720 = vunpack.c.l.b16 %v1640
      %v1721 = vunpack.c.l.b16 %v1641
      %v1722 = vunpack.c.l.b16 %v1642
      %v1723 = vunpack.c.l.b16 %v1643
      %v1724 = vunpack.c.l.b16 %v1644
      %v1725 = vunpack.c.l.b16 %v1645
      %v1726 = vunpack.c.l.b16 %v1646
      %v1727 = vunpack.c.l.b16 %v1647
      %v1728 = vunpack.c.l.b16 %v1648
      %v1729 = vunpack.c.l.b16 %v1649
      %v1730 = vunpack.c.l.b16 %v1650
      %v1731 = vunpack.c.l.b16 %v1651
      %v1732 = vunpack.c.l.b16 %v1652
      %v1733 = vunpack.c.l.b16 %v1653
      %v1734 = vpack.c.b16 %v1695, %v1694
      %v1735 = vpack.c.b16 %v1697, %v1696
      %v1736 = vpack.c.b16 %v1699, %v1698
      %v1737 = vpack.c.b16 %v1701, %v1700
      %v1738 = vpack.c.b16 %v1703, %v1702
      %v1739 = vpack.c.b16 %v1705, %v1704
      %v1740 = vpack.c.b16 %v1707, %v1706
      %v1741 = vpack.c.b16 %v1709, %v1708
      %v1742 = vpack.c.b16 %v1711, %v1710
      %v1743 = vpack.c.b16 %v1713, %v1712
      %v1744 = vpack.c.b16 %v1715, %v1714
      %v1745 = vpack.c.b16 %v1717, %v1716
      %v1746 = vpack.c.b16 %v1719, %v1718
      %v1747 = vpack.c.b16 %v1721, %v1720
      %v1748 = vpack.c.b16 %v1723, %v1722
      %v1749 = vpack.c.b16 %v1725, %v1724
      %v1750 = vpack.c.b16 %v1727, %v1726
      %v1751 = vpack.c.b16 %v1729, %v1728
      %v1752 = vpack.c.b16 %v1731, %v1730
      %v1753 = vpack.c.b16 %v1733, %v1732
      %v1774 = vsel %vm632, %v1606, 0
      %1776 = vmatpush.bf16.msra.mxu0 %v1741
      %1777 = vmatpush.bf16.msra.mxu0 %v1740
      %1778 = vmatpush.bf16.msra.mxu0 %v1739
      %1779 = vmatpush.bf16.msra.mxu0 %v1738
      %1780 = vmatpush.bf16.msra.mxu0 %v1737
      %1781 = vmatpush.bf16.msra.mxu0 %v1736
      %1782 = vmatpush.bf16.msra.mxu0 %v1735
      %1783 = vmatpush.bf16.msra.mxu0 %v1734
      %1784 = vmatmul.bf16.gmra.mxu0 %v1608
      %v1785 = vpop.f32.mrf.mxu0
      %v1786 = vadd.f32 0.0, %v1785
      %v1787 = vpop.f32.mrf.mxu0
      %1788 = vdwg.mxu0
      %1789 = vmatpush.bf16.msra.mxu0 %v1749
      %1790 = vmatpush.bf16.msra.mxu0 %v1748
      %1791 = vmatpush.bf16.msra.mxu0 %v1747
      %1792 = vmatpush.bf16.msra.mxu0 %v1746
      %1793 = vmatpush.bf16.msra.mxu0 %v1745
      %1794 = vmatpush.bf16.msra.mxu0 %v1744
      %1795 = vmatpush.bf16.msra.mxu0 %v1743
      %1796 = vmatpush.bf16.msra.mxu0 %v1742
      %1797 = vmatmul.bf16.gmra.mxu0 %v1611
      %v1798 = vpop.f32.mrf.mxu0
      %v1799 = vadd.f32 %v1786, %v1798
      %v1800 = vpop.f32.mrf.mxu0
      %1801 = vdwg.mxu0
      %1802 = vmatpush.bf16.msra.mxu0 0
      %1803 = vmatpush.bf16.msra.mxu0 0
      %1804 = vmatpush.bf16.msra.mxu0 0
      %1805 = vmatpush.bf16.msra.mxu0 0
      %1806 = vmatpush.bf16.msra.mxu0 %v1753
      %1807 = vmatpush.bf16.msra.mxu0 %v1752
      %1808 = vmatpush.bf16.msra.mxu0 %v1751
      %1809 = vmatpush.bf16.msra.mxu0 %v1750
      %1810 = vmatmul.bf16.gmra.mxu0 %v1774
      %v1811 = vpop.f32.mrf.mxu0
      %v1812 = vadd.f32 %v1799, %v1811
      %v1813 = vpop.f32.mrf.mxu0
      %1814 = vdwg.mxu0
      %v1815 = vadd.f32 %v1489, %v1812
      %v1816 = vld [vmem:[%s457] sm:$0x1]
      %v1817 = vld [vmem:[%s457 + $0x4] sm:$0x1]
      %v1818 = vld [vmem:[%s457] sm:$0x3]
      %v1819 = vld [vmem:[%s457 + $0x4] sm:$0x3]
      %v1822 = vrot.slane %v1818, 3
      %v1823 = vrot.slane %v1819, 3
      %v1826 = vsel %vm507, %v1818, %v1822
      %v1827 = vsel %vm511, %v1818, %v1822
      %v1829 = vrot.slane %v1827, 1
      %v1832 = vsel %vm507, %v1819, %v1823
      %v1833 = vsel %vm511, %v1819, %v1823
      %v1835 = vrot.slane %v1833, 1
      %v1836 = vshrl.u32 %v1826, 16
      %v1838 = vrot.slane %v1836, 7
      %v1839 = vrot.slane %v1838, 1
      %v1841 = vshll.u32 %v1829, 16
      %v1843 = vsel %vm535, %v1839, %v1841
      %v1844 = vshrl.u32 %v1832, 16
      %v1846 = vrot.slane %v1844, 7
      %v1847 = vrot.slane %v1846, 1
      %v1849 = vshll.u32 %v1835, 16
      %v1851 = vsel %vm535, %v1847, %v1849
      %v1852 = vld [vmem:[%s457] sm:$0x2]
      %v1853 = vld [vmem:[%s457 + $0x4] sm:$0x2]
      %1855 = vst [vmem:[#allocation1] sm:$0xff] %v1852
      %s1856 = scalar_lea.vmem [#allocation1], 1
      %v1857 = vld [vmem:[%s1856] ss:$4 sm:$0xff]
      %1859 = vst [vmem:[#allocation1 + $0x20] sm:$0xff] %v1853
      %s1860 = scalar_lea.vmem [#allocation1], 33
      %v1861 = vld [vmem:[%s1860] ss:$4 sm:$0xff]
      %v1862 = vld [vmem:[%s457] sm:$0x6]
      %v1863 = vld [vmem:[%s457 + $0x4] sm:$0x6]
      %1865 = vst [vmem:[#allocation1] sm:$0xff] %v1862
      %s1866 = scalar_lea.vmem [#allocation1], 1
      %v1867 = vld [vmem:[%s1866] ss:$4 sm:$0xff]
      %s1868 = scalar_lea.vmem [#allocation1], 2
      %v1869 = vld [vmem:[%s1868] ss:$4 sm:$0xff]
      %1871 = vst [vmem:[#allocation1 + $0x20] sm:$0xff] %v1863
      %s1872 = scalar_lea.vmem [#allocation1], 33
      %v1873 = vld [vmem:[%s1872] ss:$4 sm:$0xff]
      %s1874 = scalar_lea.vmem [#allocation1], 34
      %v1875 = vld [vmem:[%s1874] ss:$4 sm:$0xff]
      %v1876 = vshrl.u32 %v1867, 16
      %v1878 = vrot.slane %v1876, 7
      %v1879 = vrot.slane %v1878, 1
      %v1880 = vshll.u32 %v1869, 16
      %v1882 = vsel %vm535, %v1879, %v1880
      %v1883 = vshrl.u32 %v1873, 16
      %v1885 = vrot.slane %v1883, 7
      %v1886 = vrot.slane %v1885, 1
      %v1887 = vshll.u32 %v1875, 16
      %v1889 = vsel %vm535, %v1886, %v1887
      %v1890 = vld [vmem:[%s457] sm:$0x4]
      %v1891 = vld [vmem:[%s457 + $0x4] sm:$0x4]
      %1893 = vst [vmem:[#allocation1] sm:$0xff] %v1890
      %s1894 = scalar_lea.vmem [#allocation1], 2
      %v1895 = vld [vmem:[%s1894] ss:$4 sm:$0xff]
      %1897 = vst [vmem:[#allocation1 + $0x20] sm:$0xff] %v1891
      %s1898 = scalar_lea.vmem [#allocation1], 34
      %v1899 = vld [vmem:[%s1898] ss:$4 sm:$0xff]
      %1901 = vst [vmem:[#allocation1] ss:$9 sm:$0xff] %v1816
      %s1903 = scalar_lea.vmem [#allocation1], 1
      %1904 = vst [vmem:[%s1903] ss:$9 sm:$0xff] %v1817
      %v1905 = vld [vmem:[#allocation1] sm:$0xff]
      %1907 = vst [vmem:[#allocation1] ss:$9 sm:$0xff] %v1843
      %s1909 = scalar_lea.vmem [#allocation1], 1
      %1910 = vst [vmem:[%s1909] ss:$9 sm:$0xff] %v1851
      %v1911 = vld [vmem:[#allocation1] sm:$0xff]
      %1913 = vrot.lane.b32.xlu0 %v1911, 64
      %v1914 = vpop.permute.xlu0 %1913
      %1915 = vst [vmem:[#allocation1] ss:$9 sm:$0xff] %v1857
      %s1916 = scalar_lea.vmem [#allocation1], 1
      %1917 = vst [vmem:[%s1916] ss:$9 sm:$0xff] %v1861
      %v1918 = vld [vmem:[#allocation1] sm:$0xff]
      %1920 = vst [vmem:[#allocation1] ss:$9 sm:$0xff] %v1882
      %s1922 = scalar_lea.vmem [#allocation1], 1
      %1923 = vst [vmem:[%s1922] ss:$9 sm:$0xff] %v1889
      %v1924 = vld [vmem:[#allocation1] sm:$0xff]
      %1926 = vrot.lane.b32.xlu0 %v1924, 64
      %v1927 = vpop.permute.xlu0 %1926
      %1928 = vst [vmem:[#allocation1] ss:$9 sm:$0xff] %v1895
      %s1929 = scalar_lea.vmem [#allocation1], 1
      %1930 = vst [vmem:[%s1929] ss:$9 sm:$0xff] %v1899
      %v1931 = vld [vmem:[#allocation1] sm:$0xff]
      %v1933 = vsel %vm632, %v1905, %v1914
      %v1936 = vsel %vm632, %v1918, %v1927
      %s1938 = scalar_lea.vmem %s4, 640
      %v1939 = vld [vmem:[%s1938] sm:$0xf]
      %v1940 = vld [vmem:[%s1938 + $0x4] sm:$0xf]
      %v1941 = vld [vmem:[%s1938 + $0x8] sm:$0xf]
      %v1942 = vld [vmem:[%s1938 + $0xc] sm:$0xf]
      %v1943 = vld [vmem:[%s1938 + $0x10] sm:$0xf]
      %v1944 = vld [vmem:[%s1938 + $0x14] sm:$0xf]
      %v1945 = vld [vmem:[%s1938 + $0x18] sm:$0xf]
      %v1946 = vld [vmem:[%s1938 + $0x1c] sm:$0xf]
      %v1947 = vld [vmem:[%s1938 + $0x20] sm:$0xf]
      %v1948 = vld [vmem:[%s1938 + $0x24] sm:$0xf]
      %v1949 = vld [vmem:[%s1938 + $0x28] sm:$0xf]
      %v1950 = vld [vmem:[%s1938 + $0x2c] sm:$0xf]
      %v1951 = vld [vmem:[%s1938 + $0x30] sm:$0xf]
      %v1952 = vld [vmem:[%s1938 + $0x34] sm:$0xf]
      %v1953 = vld [vmem:[%s1938 + $0x38] sm:$0xf]
      %v1954 = vld [vmem:[%s1938 + $0x3c] sm:$0xf]
      %v1955 = vld [vmem:[%s1938 + $0x40] sm:$0xf]
      %v1956 = vld [vmem:[%s1938 + $0x44] sm:$0xf]
      %v1957 = vld [vmem:[%s1938 + $0x48] sm:$0xf]
      %v1958 = vld [vmem:[%s1938 + $0x4c] sm:$0xf]
      %v1959 = vld [vmem:[%s1938 + $0x50] sm:$0xf]
      %v1960 = vld [vmem:[%s1938 + $0x54] sm:$0xf]
      %v1961 = vld [vmem:[%s1938 + $0x58] sm:$0xf]
      %v1962 = vld [vmem:[%s1938 + $0x5c] sm:$0xf]
      %v1963 = vld [vmem:[%s1938 + $0x60] sm:$0xf]
      %v1964 = vld [vmem:[%s1938 + $0x64] sm:$0xf]
      %v1965 = vld [vmem:[%s1938 + $0x68] sm:$0xf]
      %v1966 = vld [vmem:[%s1938 + $0x6c] sm:$0xf]
      %v1967 = vld [vmem:[%s1938 + $0x70] sm:$0xf]
      %v1968 = vld [vmem:[%s1938 + $0x74] sm:$0xf]
      %v1969 = vld [vmem:[%s1938 + $0x78] sm:$0xf]
      %v1970 = vld [vmem:[%s1938 + $0x7c] sm:$0xf]
      %v1971 = vld [vmem:[%s1938 + $0x80] sm:$0xf]
      %v1972 = vld [vmem:[%s1938 + $0x84] sm:$0xf]
      %v1973 = vld [vmem:[%s1938 + $0x88] sm:$0xf]
      %v1974 = vld [vmem:[%s1938 + $0x8c] sm:$0xf]
      %v1975 = vld [vmem:[%s1938 + $0x90] sm:$0xf]
      %v1976 = vld [vmem:[%s1938 + $0x94] sm:$0xf]
      %v1977 = vld [vmem:[%s1938 + $0x98] sm:$0xf]
      %v1978 = vld [vmem:[%s1938 + $0x9c] sm:$0xf]
      %v2019 = vunpack.c.l.b16 %v1939
      %v2020 = vunpack.c.l.b16 %v1940
      %v2021 = vunpack.c.l.b16 %v1941
      %v2022 = vunpack.c.l.b16 %v1942
      %v2023 = vunpack.c.l.b16 %v1943
      %v2024 = vunpack.c.l.b16 %v1944
      %v2025 = vunpack.c.l.b16 %v1945
      %v2026 = vunpack.c.l.b16 %v1946
      %v2027 = vunpack.c.l.b16 %v1947
      %v2028 = vunpack.c.l.b16 %v1948
      %v2029 = vunpack.c.l.b16 %v1949
      %v2030 = vunpack.c.l.b16 %v1950
      %v2031 = vunpack.c.l.b16 %v1951
      %v2032 = vunpack.c.l.b16 %v1952
      %v2033 = vunpack.c.l.b16 %v1953
      %v2034 = vunpack.c.l.b16 %v1954
      %v2035 = vunpack.c.l.b16 %v1955
      %v2036 = vunpack.c.l.b16 %v1956
      %v2037 = vunpack.c.l.b16 %v1957
      %v2038 = vunpack.c.l.b16 %v1958
      %v2039 = vunpack.c.l.b16 %v1959
      %v2040 = vunpack.c.l.b16 %v1960
      %v2041 = vunpack.c.l.b16 %v1961
      %v2042 = vunpack.c.l.b16 %v1962
      %v2043 = vunpack.c.l.b16 %v1963
      %v2044 = vunpack.c.l.b16 %v1964
      %v2045 = vunpack.c.l.b16 %v1965
      %v2046 = vunpack.c.l.b16 %v1966
      %v2047 = vunpack.c.l.b16 %v1967
      %v2048 = vunpack.c.l.b16 %v1968
      %v2049 = vunpack.c.l.b16 %v1969
      %v2050 = vunpack.c.l.b16 %v1970
      %v2051 = vunpack.c.l.b16 %v1971
      %v2052 = vunpack.c.l.b16 %v1972
      %v2053 = vunpack.c.l.b16 %v1973
      %v2054 = vunpack.c.l.b16 %v1974
      %v2055 = vunpack.c.l.b16 %v1975
      %v2056 = vunpack.c.l.b16 %v1976
      %v2057 = vunpack.c.l.b16 %v1977
      %v2058 = vunpack.c.l.b16 %v1978
      %v2059 = vpack.c.b16 %v2020, %v2019
      %v2060 = vpack.c.b16 %v2022, %v2021
      %v2061 = vpack.c.b16 %v2024, %v2023
      %v2062 = vpack.c.b16 %v2026, %v2025
      %v2063 = vpack.c.b16 %v2028, %v2027
      %v2064 = vpack.c.b16 %v2030, %v2029
      %v2065 = vpack.c.b16 %v2032, %v2031
      %v2066 = vpack.c.b16 %v2034, %v2033
      %v2067 = vpack.c.b16 %v2036, %v2035
      %v2068 = vpack.c.b16 %v2038, %v2037
      %v2069 = vpack.c.b16 %v2040, %v2039
      %v2070 = vpack.c.b16 %v2042, %v2041
      %v2071 = vpack.c.b16 %v2044, %v2043
      %v2072 = vpack.c.b16 %v2046, %v2045
      %v2073 = vpack.c.b16 %v2048, %v2047
      %v2074 = vpack.c.b16 %v2050, %v2049
      %v2075 = vpack.c.b16 %v2052, %v2051
      %v2076 = vpack.c.b16 %v2054, %v2053
      %v2077 = vpack.c.b16 %v2056, %v2055
      %v2078 = vpack.c.b16 %v2058, %v2057
      %v2099 = vsel %vm632, %v1931, 0
      %2101 = vmatpush.bf16.msra.mxu0 %v2066
      %2102 = vmatpush.bf16.msra.mxu0 %v2065
      %2103 = vmatpush.bf16.msra.mxu0 %v2064
      %2104 = vmatpush.bf16.msra.mxu0 %v2063
      %2105 = vmatpush.bf16.msra.mxu0 %v2062
      %2106 = vmatpush.bf16.msra.mxu0 %v2061
      %2107 = vmatpush.bf16.msra.mxu0 %v2060
      %2108 = vmatpush.bf16.msra.mxu0 %v2059
      %2109 = vmatmul.bf16.gmra.mxu0 %v1933
      %v2110 = vpop.f32.mrf.mxu0
      %v2111 = vadd.f32 0.0, %v2110
      %v2112 = vpop.f32.mrf.mxu0
      %2113 = vdwg.mxu0
      %2114 = vmatpush.bf16.msra.mxu0 %v2074
      %2115 = vmatpush.bf16.msra.mxu0 %v2073
      %2116 = vmatpush.bf16.msra.mxu0 %v2072
      %2117 = vmatpush.bf16.msra.mxu0 %v2071
      %2118 = vmatpush.bf16.msra.mxu0 %v2070
      %2119 = vmatpush.bf16.msra.mxu0 %v2069
      %2120 = vmatpush.bf16.msra.mxu0 %v2068
      %2121 = vmatpush.bf16.msra.mxu0 %v2067
      %2122 = vmatmul.bf16.gmra.mxu0 %v1936
      %v2123 = vpop.f32.mrf.mxu0
      %v2124 = vadd.f32 %v2111, %v2123
      %v2125 = vpop.f32.mrf.mxu0
      %2126 = vdwg.mxu0
      %2127 = vmatpush.bf16.msra.mxu0 0
      %2128 = vmatpush.bf16.msra.mxu0 0
      %2129 = vmatpush.bf16.msra.mxu0 0
      %2130 = vmatpush.bf16.msra.mxu0 0
      %2131 = vmatpush.bf16.msra.mxu0 %v2078
      %2132 = vmatpush.bf16.msra.mxu0 %v2077
      %2133 = vmatpush.bf16.msra.mxu0 %v2076
      %2134 = vmatpush.bf16.msra.mxu0 %v2075
      %2135 = vmatmul.bf16.gmra.mxu0 %v2099
      %v2136 = vpop.f32.mrf.mxu0
      %v2137 = vadd.f32 %v2124, %v2136
      %v2138 = vpop.f32.mrf.mxu0
      %2139 = vdwg.mxu0
      %v2140 = vadd.f32 %v1815, %v2137
      %v2141 = vld [vmem:[%s5] sm:$0x1]
      %v2143 = vperm.slane %v2141, 0
      %v2145 = vadd.f32 %v2140, %v2143
      %v2146 = vld [vmem:[%s6] sm:$0x1]
      %v2147 = vperm.slane %v2146, 0
      %v2148 = vmul.f32 %v2145, %v2147
      %v2149 = vld [vmem:[%s6 + $0x1] sm:$0x1]
      %v2150 = vperm.slane %v2149, 0
      %v2151 = vadd.f32 %v2148, %v2150
      %v2152 = vmax.f32 %v2151, 0.0
      %v2153 = vpack.c.bf16 %v2152, %v2152
      %v2154 = vld [vmem:[%s7] sm:$0xf]
      %v2155 = vld [vmem:[%s7 + $0x4] sm:$0xf]
      %v2156 = vld [vmem:[%s7 + $0x8] sm:$0xf]
      %v2157 = vld [vmem:[%s7 + $0xc] sm:$0xf]
      %v2158 = vld [vmem:[%s7 + $0x10] sm:$0xf]
      %v2159 = vld [vmem:[%s7 + $0x14] sm:$0xf]
      %v2160 = vld [vmem:[%s7 + $0x18] sm:$0xf]
      %v2161 = vld [vmem:[%s7 + $0x1c] sm:$0xf]
      %v2162 = vld [vmem:[%s7 + $0x20] sm:$0xf]
      %v2163 = vld [vmem:[%s7 + $0x24] sm:$0xf]
      %v2164 = vld [vmem:[%s7 + $0x28] sm:$0xf]
      %v2165 = vld [vmem:[%s7 + $0x2c] sm:$0xf]
      %v2166 = vld [vmem:[%s7 + $0x30] sm:$0xf]
      %v2167 = vld [vmem:[%s7 + $0x34] sm:$0xf]
      %v2168 = vld [vmem:[%s7 + $0x38] sm:$0xf]
      %v2169 = vld [vmem:[%s7 + $0x3c] sm:$0xf]
      %v2170 = vld [vmem:[%s8] sm:$0x1]
      %v2172 = vperm.slane %v2170, 0
      %v2190 = vunpack.c.l.b16 %v2154
      %v2191 = vunpack.c.l.b16 %v2155
      %v2192 = vunpack.c.l.b16 %v2156
      %v2193 = vunpack.c.l.b16 %v2157
      %v2194 = vunpack.c.l.b16 %v2158
      %v2195 = vunpack.c.l.b16 %v2159
      %v2196 = vunpack.c.l.b16 %v2160
      %v2197 = vunpack.c.l.b16 %v2161
      %v2198 = vunpack.c.l.b16 %v2162
      %v2199 = vunpack.c.l.b16 %v2163
      %v2200 = vunpack.c.l.b16 %v2164
      %v2201 = vunpack.c.l.b16 %v2165
      %v2202 = vunpack.c.l.b16 %v2166
      %v2203 = vunpack.c.l.b16 %v2167
      %v2204 = vunpack.c.l.b16 %v2168
      %v2205 = vunpack.c.l.b16 %v2169
      %v2206 = vpack.c.b16 %v2191, %v2190
      %v2207 = vpack.c.b16 %v2193, %v2192
      %v2208 = vpack.c.b16 %v2195, %v2194
      %v2209 = vpack.c.b16 %v2197, %v2196
      %v2210 = vpack.c.b16 %v2199, %v2198
      %v2211 = vpack.c.b16 %v2201, %v2200
      %v2212 = vpack.c.b16 %v2203, %v2202
      %v2213 = vpack.c.b16 %v2205, %v2204
      %2222 = vmatpush.bf16.msra.mxu0 %v2213
      %2223 = vmatpush.bf16.msra.mxu0 %v2212
      %2224 = vmatpush.bf16.msra.mxu0 %v2211
      %2225 = vmatpush.bf16.msra.mxu0 %v2210
      %2226 = vmatpush.bf16.msra.mxu0 %v2209
      %2227 = vmatpush.bf16.msra.mxu0 %v2208
      %2228 = vmatpush.bf16.msra.mxu0 %v2207
      %2229 = vmatpush.bf16.msra.mxu0 %v2206
      %2230 = vmatmul.bf16.gmra.mxu0 %v2153
      %v2231 = vpop.f32.mrf.mxu0
      %v2232 = vadd.f32 %v2172, %v2231
      %v2233 = vpop.f32.mrf.mxu0
      %2234 = vdwg.mxu0
      %v2235 = vxor.u32 %v2232, 2147483648
      %v2236 = vmul.f32 %v2235, 1.442695
      %v2237 = vpow.pop %v2236
      %v2238 = vadd.f32 %v2237, 1.0
      %v2239 = vrcp.pop %v2238
      %v2240 = vmul.f32 %v2238, %v2239
      %v2241 = vsub.f32 1.0, %v2240
      %v2242 = vmul.f32 %v2239, %v2241
      %v2243 = vadd.f32 %v2239, %v2242
      %vm2244 = vweird.f32 %v2238
      %vm2245 = vweird.f32 %v2239
      %vm2246 = vmor %vm2244, %vm2245
      %v2247 = vsel %vm2246, %v2239, %v2243
      %v2248 = vand.u32 2147483647, %v2238
      %vm2249 = vcmp.eq.f32.partialorder %v2248, 8.507059e+37
      %v2250 = vand.u32 %v2238, 2147483648
      %v2251 = vor.u32 1.1754944e-38, %v2250
      %v2252 = vsel %vm2249, %v2251, %v2247
      %v2253 = vmul.f32 1.0, %v2252
      %2255 = vset.pattern.permute.xlu0 0
      %2256 = vperm.xlu0 %2255, %v2253
      %v2257 = vpop.permute.xlu0 %2256
      %v2259 = vmul.f32 %v446, %v2257
      %2260 = vset.pattern.permute.xlu0 1
      %2261 = vperm.xlu0 %2260, %v2253
      %v2262 = vpop.permute.xlu0 %2261
      %v2264 = vmul.f32 %v453, %v2262
      %v2265 = vadd.f32 %v2259, %v2264
      %v2266 = vrot.slane %v446, 4
      %vm2268 = vcmask 1043456
      %v2269 = vsel %vm2268, %v2265, %v2266
      %v2270 = vpack.c.bf16 %v453, %v2269
      %v2271 = vld [vmem:[%s9] sm:$0xf]
      %v2272 = vld [vmem:[%s9 + $0x4] sm:$0xf]
      %v2273 = vld [vmem:[%s9 + $0x8] sm:$0xf]
      %v2274 = vld [vmem:[%s9 + $0xc] sm:$0xf]
      %v2275 = vld [vmem:[%s10] sm:$0x1]
      %v2277 = vperm.slane %v2275, 0
      %v2283 = vunpack.c.l.b16 %v2271
      %v2284 = vunpack.c.l.b16 %v2272
      %v2285 = vunpack.c.l.b16 %v2273
      %v2286 = vunpack.c.l.b16 %v2274
      %v2287 = vpack.c.b16 %v2284, %v2283
      %v2288 = vpack.c.b16 %v2286, %v2285
      %vm2291 = vcmask 261120
      %v2293 = vsel %vm2291, %v2270, 0
      %2295 = vmatpush.bf16.msra.mxu0 0
      %2296 = vmatpush.bf16.msra.mxu0 0
      %2297 = vmatpush.bf16.msra.mxu0 0
      %2298 = vmatpush.bf16.msra.mxu0 0
      %2299 = vmatpush.bf16.msra.mxu0 0
      %2300 = vmatpush.bf16.msra.mxu0 0
      %2301 = vmatpush.bf16.msra.mxu0 %v2288
      %2302 = vmatpush.bf16.msra.mxu0 %v2287
      %2303 = vmatmul.bf16.gmra.mxu0 %v2293
      %v2304 = vpop.f32.mrf.mxu0
      %v2305 = vadd.f32 %v2277, %v2304
      %v2306 = vpop.f32.mrf.mxu0
      %v2307 = vadd.f32 %v2277, %v2306
      %2308 = vdwg.mxu0
      %2309 = vst [vmem:[%s434] sm:$0xff] %v2305
      %2310 = vst [vmem:[%s434 + $0x8] sm:$0xf] %v2307
      %vm2311 = vcmask 11264
      %2312 = vst.msk [vmem:[%s438] sm:$0xf] %vm2311, %v2253
      %p2313 = scmp.lt.s32.totalorder %s24, 1
      %s2314 = scalar_select %p2313, %s24, 1
      %s2315 = smul.addr %s2314, 2
      %s2316 = smul.addr %s2315, 8
      %s2317 = scalar_lea.vmem %s11, %s2316
      %p2318 = scmp.lt.s32.totalorder %s24, 1
      %s2319 = scalar_select %p2318, %s24, 1
      %s2320 = smul.addr %s2319, 4
      %s2321 = scalar_lea.vmem %s12, %s2320
      // Predicated region
      $region65: #{attention_segmentation_forward.4} parent=63 // pred_check
        %p2322 = pneg %p283
      $region66: #{attention_segmentation_forward.4} parent=63 // pred_check_branch
        %2324 = sbr.rel (%p2322) target = $region68
      $region67: #{attention_segmentation_forward.4} parent=63 // pred_region
        _
      $region68: #{attention_segmentation_forward.4} parent=63 // pred_fallthru
        _
      // Predicated region
      $region69: #{attention_segmentation_forward.4} parent=63 // pred_check
        %p2325 = pneg %p309
      $region70: #{attention_segmentation_forward.4} parent=63 // pred_check_branch
        %2327 = sbr.rel (%p2325) target = $region72
      $region71: #{attention_segmentation_forward.4} parent=63 // pred_region
        _
      $region72: #{attention_segmentation_forward.4} parent=63 // pred_fallthru
        _
    $region64: #{attention_segmentation_forward.4} parent=5 // pred_fallthru
      _
    %p2328 = scmp.le.s32.totalorder 2, %s19
    // Predicated region
    $region73: #{attention_segmentation_forward.4} parent=5 // pred_check
      %p2329 = pneg %p2328
    $region74: #{attention_segmentation_forward.4} parent=5 // pred_check_branch
      %2331 = sbr.rel (%p2329) target = $region76
    $region75: #{attention_segmentation_forward.4} parent=5 // pred_region
      %s2332 = ssub.s32 %s19, 2
      // Predicated region
      $region77: #{attention_segmentation_forward.4} parent=75 // pred_check
        %p2333 = pneg %p289
      $region78: #{attention_segmentation_forward.4} parent=75 // pred_check_branch
        %2335 = sbr.rel (%p2333) target = $region80
      $region79: #{attention_segmentation_forward.4} parent=75 // pred_region
        %p2336 = scmp.lt.s32.totalorder %s25, 1
        %s2337 = scalar_select %p2336, %s25, 1
        %s2338 = smul.addr %s2337, 2
        %s2339 = smul.addr %s2338, 8
        %s2340 = scalar_lea.vmem %s11, %s2339
      $region80: #{attention_segmentation_forward.4} parent=75 // pred_fallthru
        _
      // Predicated region
      $region81: #{attention_segmentation_forward.4} parent=75 // pred_check
        %p2341 = pneg %p315
      $region82: #{attention_segmentation_forward.4} parent=75 // pred_check_branch
        %2343 = sbr.rel (%p2341) target = $region84
      $region83: #{attention_segmentation_forward.4} parent=75 // pred_region
        %p2344 = scmp.lt.s32.totalorder %s25, 1
        %s2345 = scalar_select %p2344, %s25, 1
        %s2346 = smul.addr %s2345, 4
        %s2347 = scalar_lea.vmem %s12, %s2346
      $region84: #{attention_segmentation_forward.4} parent=75 // pred_fallthru
        _
    $region76: #{attention_segmentation_forward.4} parent=5 // pred_fallthru
      _
  $region6: #{attention_segmentation_forward.4} parent=0 // loop_footer
    %s23 = sadd.s32 1, %s19
  $region7: #{attention_segmentation_forward.4} parent=0 // loop_footer_branch
    %18 = sbr.rel target = $region3
  $region8: #{attention_segmentation_forward.4} parent=0 // loop_exit
    _

</llo_original>
